<compile_context>
chip_gen: v7x
topology: tpu7x:2x2x1
jax: 0.10.0
libtpu: 0.0.40
codegen_flags: <defaults>
</compile_context>

<pallas_src>
import numpy as np
import jax
import jax.numpy as jnp
from jax import lax
from jax.experimental import pallas as pl
from jax.experimental.pallas import tpu as pltpu

HID = 128          # TransformerConv out_channels (heads=1)
FC1 = 64
INV_SQRT_D = 1.0 / float(np.sqrt(HID))
NEG_BIG = -1e30


def _round_up(v, m):
    return ((v + m - 1) // m) * m


# ----------------------------------------------------------------------------
# Fused Pallas kernel: 3 x (TransformerConv + ReLU) -> mean-pool -> MLP head
# ----------------------------------------------------------------------------
def _tfnn_fused_kernel(x_ref, ea_ref, src_ref, dst_ref, bat_ref, invc_ref,
                       W_ref, b_ref, We_ref, w1_ref, b1_ref, w2_ref, b2_ref,
                       o_ref):
    """
    x    : (N_pad, 128) f32   node features (feature dim zero-padded to 128)
    ea   : (E_pad, 128) f32   edge features (zero-padded)
    src  : (E_pad, 1)  int32  source node of each edge   (-1 for padded edges)
    dst  : (1, E_pad)  int32  target node of each edge   (-1 for padded edges)
    bat  : (1, N_pad)  int32  graph id per node          (-1 for padded nodes)
    invc : (G_pad, 1)  f32    1 / (#nodes in graph)      (0 for padded graphs)
    W    : (3, 128, 512) bf16 per-layer [wq/sqrt(d) | wk | wv | wskip]
    b    : (3, 1, 512)  f32   per-layer packed biases (bq pre-scaled)
    We   : (3, 128, 128) bf16 per-layer edge projection
    w1/b1, w2/b2 : MLP head, lane-padded to 128
    o    : (G_pad, 128) f32   fc2 output (slice [:G, :dim_out] outside)
    """
    N_pad = x_ref.shape[0]
    E_pad = ea_ref.shape[0]
    G_pad = o_ref.shape[0]
    neg = jnp.float32(NEG_BIG)

    # --- densify the sparse graph structure in-kernel (built once, reused by
    # --- all three layers; no dense one-hots are ever DMA'd from HBM) ---------
    node_id_lanes = lax.broadcasted_iota(jnp.int32, (E_pad, N_pad), 1)
    S = (node_id_lanes == src_ref[...]).astype(jnp.bfloat16)       # (E,N) src one-hot
    node_id_rows = lax.broadcasted_iota(jnp.int32, (N_pad, E_pad), 0)
    mask = node_id_rows == dst_ref[...]                            # (N,E) target gate (bool)
    graph_id_rows = lax.broadcasted_iota(jnp.int32, (G_pad, N_pad), 0)
    pool = (graph_id_rows == bat_ref[...]).astype(jnp.bfloat16)    # (G,N) pool one-hot

    h = x_ref[...]                                                 # (N_pad, 128) f32
    eab = ea_ref[...].astype(jnp.bfloat16)                         # (E_pad, 128) bf16

    for l in range(3):                                 # unrolled over the 3 conv layers
        hb = h.astype(jnp.bfloat16)
        # one wide bf16 matmul for Q|K|V|skip; Q/bq already pre-scaled by 1/sqrt(d)
        qkvs = jnp.dot(hb, W_ref[l], preferred_element_type=jnp.float32) + b_ref[l]
        q = qkvs[:, 0:HID]                                          # (N_pad, 128) f32
        kvb = qkvs[:, HID:3 * HID].astype(jnp.bfloat16)             # [K | V]  (N_pad, 256)
        skip = qkvs[:, 3 * HID:4 * HID]                             # (N_pad, 128)
        ee = jnp.dot(eab, We_ref[l], preferred_element_type=jnp.float32)  # (E_pad, 128)

        # gather K|V of each edge's source node: one (E,N)x(N,256) bf16 matmul
        kv_e = jnp.dot(S, kvb, preferred_element_type=jnp.float32)        # (E_pad, 256)
        k_e = kv_e[:, 0:HID] + ee
        v_e = (kv_e[:, HID:2 * HID] + ee).astype(jnp.bfloat16)

        # attention scores[n, e] = <Q[n], k_e[e]>; bf16 operands, f32 accumulation.
        # TODO(synk): at large N*E, compute a per-edge alpha instead (gather Q by
        # dst) so exp runs over E rather than N*E (the single EUP is the binding
        # VLIW slot on v6e/v7x), and verify via pl.lower_as_mlir that this
        # (1,1)-contracting dot does not emit an XLU transpose of k_e.
        scores = lax.dot_general(q.astype(jnp.bfloat16), k_e.astype(jnp.bfloat16),
                                 (((1,), (1,)), ((), ())),
                                 preferred_element_type=jnp.float32)      # (N_pad, E_pad)
        m = jnp.max(jnp.where(mask, scores, neg), axis=-1, keepdims=True)  # per-target max
        # explicit zero branch: padded edge columns / edge-less nodes stay exactly 0
        p = jnp.where(mask, jnp.exp(scores - m), 0.0).astype(jnp.bfloat16)
        denom = jnp.sum(p, axis=-1, keepdims=True, dtype=jnp.float32) \
            + jnp.float32(1e-16)                                   # PyG softmax eps

        # aggregate unnormalized, then normalize on the (N,128) side (EUP reciprocal)
        agg = jnp.dot(p, v_e, preferred_element_type=jnp.float32)         # (N_pad, 128)
        agg = agg * pl.reciprocal(denom, approx=True)
        h = jnp.maximum(agg + skip, jnp.float32(0.0))                     # F.relu

    # epilogue: global_mean_pool -> Linear -> ReLU -> Linear (same call)
    hg = jnp.dot(pool, h.astype(jnp.bfloat16),
                 preferred_element_type=jnp.float32) * invc_ref[...]      # (G_pad, 128)
    h1 = jnp.maximum(
        jnp.dot(hg.astype(jnp.bfloat16), w1_ref[...],
                preferred_element_type=jnp.float32) + b1_ref[...],
        jnp.float32(0.0))
    o_ref[...] = jnp.dot(h1.astype(jnp.bfloat16), w2_ref[...],
                         preferred_element_type=jnp.float32) + b2_ref[...]


# ----------------------------------------------------------------------------
# Wrapper: padding / packing + single fused pallas_call
# ----------------------------------------------------------------------------
_VMEM = pl.BlockSpec(memory_space=pltpu.MemorySpace.VMEM)


def _pick_vmem_limit(n_pad, e_pad, g_pad):
    """Shape-derived scoped-VMEM limit, clamped to the chip's capacity."""
    # per-(n,e): S bf16 + mask i1 + scores f32 + exp/where f32 + p bf16
    need = (2 + 1 + 4 + 4 + 2) * n_pad * e_pad
    need += 4 * HID * (6 * n_pad + 4 * e_pad + 2 * g_pad)          # f32 activations
    need += 2 * HID * HID * (3 * 4 + 3 + 2)                        # bf16 weights
    need = 2 * need + (8 << 20)                                    # I/O buffers + compiler temps
    try:
        cap = pltpu.get_tpu_info().vmem_capacity_bytes             # 128 MiB v5e/v6e, 64 MiB v7x
    except Exception:
        cap = 64 * 1024 * 1024                                     # conservative (v7x) fallback
    return int(max(32 * 1024 * 1024, min(need, cap - 16 * 1024 * 1024)))


def tfnn_forward(params, x, edge_index, edge_attr, batch, num_graphs):
    N, Fin = x.shape
    E, Fe = edge_attr.shape
    G = num_graphs
    dim_out = params["fc2"][0].shape[1]
    assert Fin <= HID and Fe <= HID and dim_out <= HID, \
        "this fused kernel packs feature dims into 128-lane slots"

    N_pad = _round_up(N, 8)
    E_pad = _round_up(E, 128)
    G_pad = _round_up(G, 8)

    # --- padded node/edge features + int32 graph structure (densified in-kernel)
    x_p = jnp.zeros((N_pad, HID), jnp.float32).at[:N, :Fin].set(x)
    ea_p = jnp.zeros((E_pad, HID), jnp.float32).at[:E, :Fe].set(edge_attr)

    src = edge_index[0].astype(jnp.int32)
    dst = edge_index[1].astype(jnp.int32)
    src_p = jnp.full((E_pad, 1), -1, jnp.int32).at[:E, 0].set(src)
    dst_p = jnp.full((1, E_pad), -1, jnp.int32).at[0, :E].set(dst)
    bat_p = jnp.full((1, N_pad), -1, jnp.int32).at[0, :N].set(batch.astype(jnp.int32))
    counts = jax.ops.segment_sum(jnp.ones((N,), jnp.float32), batch,
                                 num_segments=G)
    invc = jnp.zeros((G_pad, 1), jnp.float32).at[:G, 0].set(
        1.0 / jnp.maximum(counts, 1.0))

    # --- pack / pad weights: [wq/sqrt(d) | wk | wv | wskip] per layer ---------
    W_list, b_list, We_list = [], [], []
    for name in ("gc1", "gc2", "gc3"):
        lp = params[name]
        fin = lp["wq"].shape[0]
        # packed-W design assumes all four per-layer projections share fan-in
        assert (lp["wk"].shape[0] == fin and lp["wv"].shape[0] == fin
                and lp["ws"].shape[0] == fin)
        Wl = jnp.concatenate([lp["wq"] * INV_SQRT_D, lp["wk"], lp["wv"], lp["ws"]],
                             axis=1)                                      # (fin, 512)
        Wl = jnp.zeros((HID, 4 * HID), jnp.float32).at[:fin, :].set(Wl)
        bl = jnp.concatenate([lp["bq"] * INV_SQRT_D, lp["bk"], lp["bv"], lp["bs"]],
                             axis=1)                                      # (1, 512)
        Wel = jnp.zeros((HID, HID), jnp.float32).at[:Fe, :].set(lp["we"])
        W_list.append(Wl); b_list.append(bl); We_list.append(Wel)
    # weights feed the MXU -> store them as bf16 (f32xf32 matmuls cost 3-6 bf16
    # passes); biases stay f32 (6 KB total, added to f32 accumulators).
    W_all = jnp.stack(W_list).astype(jnp.bfloat16)     # (3, 128, 512)
    b_all = jnp.stack(b_list)                          # (3, 1, 512)   f32
    We_all = jnp.stack(We_list).astype(jnp.bfloat16)   # (3, 128, 128)

    w1, b1 = params["fc1"]
    w2, b2 = params["fc2"]
    w1_p = jnp.zeros((HID, HID), jnp.float32).at[:, :FC1].set(w1).astype(jnp.bfloat16)
    b1_p = jnp.zeros((1, HID), jnp.float32).at[:, :FC1].set(b1)
    w2_p = jnp.zeros((HID, HID), jnp.float32).at[:FC1, :dim_out].set(w2).astype(jnp.bfloat16)
    b2_p = jnp.zeros((1, HID), jnp.float32).at[:, :dim_out].set(b2)

    # TODO(synk): once ~13 B * N_pad * E_pad approaches the VMEM limit (large
    # graphs), switch to an E-tiled online-softmax grid (E as the trailing
    # 'arbitrary' axis) with a 'parallel' N-tile axis so v7x's two TensorCores
    # split the target nodes, and replace the dense one-hot K/V gather with a
    # PrefetchScalarGridSpec sparse row gather (the one-hot matmul is O(E*N*256)
    # MXU flops for an O(E*256) copy).
    out_p = pl.pallas_call(
        _tfnn_fused_kernel,
        out_shape=jax.ShapeDtypeStruct((G_pad, HID), jnp.float32),
        in_specs=[_VMEM] * 13,
        out_specs=_VMEM,
        compiler_params=pltpu.CompilerParams(
            vmem_limit_bytes=_pick_vmem_limit(N_pad, E_pad, G_pad)),
    )(x_p, ea_p, src_p, dst_p, bat_p, invc,
      W_all, b_all, We_all, w1_p, b1_p, w2_p, b2_p)

    return out_p[:G, :dim_out]


# ----------------------------------------------------------------------------
# Deterministic parameter init (shapes from TransformerConv / nn.Linear)
# ----------------------------------------------------------------------------
def _linear_init(key, fan_in, fan_out, bias=True):
    kw, kb = jax.random.split(key)
    bound = 1.0 / np.sqrt(fan_in)
    w = jax.random.uniform(kw, (fan_in, fan_out), jnp.float32, -bound, bound)
    b = (jax.random.uniform(kb, (1, fan_out), jnp.float32, -bound, bound)
         if bias else None)
    return w, b


def init_params(key, n_node_feats, n_edge_feats, dim_out):
    ks = jax.random.split(key, 5)
    params = {}
    in_dims = (n_node_feats, HID, HID)
    for fin, name, kk in zip(in_dims, ("gc1", "gc2", "gc3"), ks[:3]):
        kq, kkey, kv, ke, ksk = jax.random.split(kk, 5)
        wq, bq = _linear_init(kq, fin, HID)
        wk, bk = _linear_init(kkey, fin, HID)
        wv, bv = _linear_init(kv, fin, HID)
        we, _ = _linear_init(ke, n_edge_feats, HID, bias=False)
        ws, bs = _linear_init(ksk, fin, HID)
        params[name] = dict(wq=wq, bq=bq, wk=wk, bk=bk, wv=wv, bv=bv,
                            we=we, ws=ws, bs=bs)
    params["fc1"] = _linear_init(ks[3], HID, FC1)
    params["fc2"] = _linear_init(ks[4], FC1, dim_out)
    return params


# ----------------------------------------------------------------------------
# Pure-JAX f32 reference (scatter/segment based, mirrors PyG TransformerConv)
# ----------------------------------------------------------------------------
def _ref_tconv(x, edge_attr, src, dst, p, num_nodes):
    Q = x @ p["wq"] + p["bq"]
    K = x @ p["wk"] + p["bk"]
    V = x @ p["wv"] + p["bv"]
    Ee = edge_attr @ p["we"]
    k_e = K[src] + Ee
    v_e = V[src] + Ee
    q_e = Q[dst]
    alpha = jnp.sum(q_e * k_e, axis=-1) * INV_SQRT_D
    amax = jax.ops.segment_max(alpha, dst, num_segments=num_nodes)
    amax = jnp.where(jnp.isfinite(amax), amax, 0.0)
    ex = jnp.exp(alpha - amax[dst])
    den = jax.ops.segment_sum(ex, dst, num_segments=num_nodes) + 1e-16
    w = ex / den[dst]
    out = jax.ops.segment_sum(w[:, None] * v_e, dst, num_segments=num_nodes)
    out = out + x @ p["ws"] + p["bs"]
    return jnp.maximum(out, 0.0)


def tfnn_reference(params, x, edge_index, edge_attr, batch, num_graphs):
    N = x.shape[0]
    src, dst = edge_index[0], edge_index[1]
    h = x
    for name in ("gc1", "gc2", "gc3"):
        h = _ref_tconv(h, edge_attr, src, dst, params[name], N)
    counts = jax.ops.segment_sum(jnp.ones((N,), jnp.float32), batch,
                                 num_segments=num_graphs)
    hg = jax.ops.segment_sum(h, batch, num_segments=num_graphs) \
        / jnp.maximum(counts, 1.0)[:, None]
    w1, b1 = params["fc1"]
    w2, b2 = params["fc2"]
    h1 = jnp.maximum(hg @ w1 + b1, 0.0)
    return h1 @ w2 + b2


# ----------------------------------------------------------------------------
if __name__ == "__main__":
    key = jax.random.PRNGKey(0)
    n_node_feats, n_edge_feats, dim_out = 4, 6, 3
    N, E, G = 12, 24, 2

    keys = jax.random.split(key, 8)
    x = jax.random.normal(keys[0], (N, n_node_feats), jnp.float32)
    edge_attr = jax.random.normal(keys[1], (E, n_edge_feats), jnp.float32)

    # two graphs: nodes 0..5 -> graph 0, nodes 6..11 -> graph 1
    batch = jnp.array([0] * 6 + [1] * 6, dtype=jnp.int32)
    src = jnp.concatenate([jax.random.randint(keys[2], (E // 2,), 0, 6),
                           jax.random.randint(keys[3], (E // 2,), 6, 12)]).astype(jnp.int32)
    dst = jnp.concatenate([jax.random.randint(keys[4], (E // 2,), 0, 6),
                           jax.random.randint(keys[5], (E // 2,), 6, 12)]).astype(jnp.int32)
    edge_index = jnp.stack([src, dst])          # row 0 = source, row 1 = target

    params = init_params(keys[6], n_node_feats, n_edge_feats, dim_out)

    out = tfnn_forward(params, x, edge_index, edge_attr, batch, num_graphs=G)
    out = jax.block_until_ready(out)

    ref = tfnn_reference(params, x, edge_index, edge_attr, batch, num_graphs=G)
    # Loosened tolerance: all MXU matmuls (projections, gathers, attention,
    # aggregation, pooling, MLP head) use bf16 operands with f32 accumulation.
    np.testing.assert_allclose(np.asarray(out), np.asarray(ref),
                               rtol=5e-2, atol=5e-2)

    # TODO(synk): fit/predict/emb (training loop, DataLoader glue) are host-side
    # driver code with no kernel equivalent; only the forward pass is implemented.
    print("KERNEL_OK")
</pallas_src>

<mosaic_0001>
module attributes {stable_mosaic.version = 11 : i64} {
  func.func @_tfnn_fused_kernel(%arg0: memref<16x128xf32, #tpu.memory_space<vmem>>, %arg1: memref<128x128xf32, #tpu.memory_space<vmem>>, %arg2: memref<128x1xi32, #tpu.memory_space<vmem>>, %arg3: memref<1x128xi32, #tpu.memory_space<vmem>>, %arg4: memref<1x16xi32, #tpu.memory_space<vmem>>, %arg5: memref<8x1xf32, #tpu.memory_space<vmem>>, %arg6: memref<3x128x512xbf16, #tpu.memory_space<vmem>>, %arg7: memref<3x1x512xf32, #tpu.memory_space<vmem>>, %arg8: memref<3x128x128xbf16, #tpu.memory_space<vmem>>, %arg9: memref<128x128xbf16, #tpu.memory_space<vmem>>, %arg10: memref<1x128xf32, #tpu.memory_space<vmem>>, %arg11: memref<128x128xbf16, #tpu.memory_space<vmem>>, %arg12: memref<1x128xf32, #tpu.memory_space<vmem>>, %arg13: memref<8x128xf32, #tpu.memory_space<vmem>>) attributes {dimension_semantics = [], scalar_prefetch = 0 : i64, scratch_operands = 0 : i64, tpu.core_type = #tpu.core_type<tc>} {
    %0 = tpu.iota {dimensions = array<i32: 1>} : vector<128x16xi32>
    %c0 = arith.constant 0 : index
    %c0_0 = arith.constant 0 : index
    %1 = vector.load %arg2[%c0, %c0_0] : memref<128x1xi32, #tpu.memory_space<vmem>>, vector<128x1xi32>
    %2 = vector.broadcast %1 : vector<128x1xi32> to vector<128x16xi32>
    %3 = arith.cmpi eq, %0, %2 : vector<128x16xi32>
    %4 = arith.extui %3 : vector<128x16xi1> to vector<128x16xi32>
    %5 = arith.sitofp %4 : vector<128x16xi32> to vector<128x16xf32>
    %6 = arith.truncf %5 : vector<128x16xf32> to vector<128x16xbf16>
    %7 = tpu.iota {dimensions = array<i32: 0>} : vector<16x128xi32>
    %c0_1 = arith.constant 0 : index
    %c0_2 = arith.constant 0 : index
    %8 = vector.load %arg3[%c0_1, %c0_2] : memref<1x128xi32, #tpu.memory_space<vmem>>, vector<1x128xi32>
    %9 = vector.broadcast %8 : vector<1x128xi32> to vector<16x128xi32>
    %10 = arith.cmpi eq, %7, %9 : vector<16x128xi32>
    %11 = tpu.iota {dimensions = array<i32: 0>} : vector<8x16xi32>
    %c0_3 = arith.constant 0 : index
    %c0_4 = arith.constant 0 : index
    %12 = vector.load %arg4[%c0_3, %c0_4] : memref<1x16xi32, #tpu.memory_space<vmem>>, vector<1x16xi32>
    %13 = vector.broadcast %12 : vector<1x16xi32> to vector<8x16xi32>
    %14 = arith.cmpi eq, %11, %13 : vector<8x16xi32>
    %15 = arith.extui %14 : vector<8x16xi1> to vector<8x16xi32>
    %16 = arith.sitofp %15 : vector<8x16xi32> to vector<8x16xf32>
    %17 = arith.truncf %16 : vector<8x16xf32> to vector<8x16xbf16>
    %c0_5 = arith.constant 0 : index
    %c0_6 = arith.constant 0 : index
    %18 = vector.load %arg0[%c0_5, %c0_6] : memref<16x128xf32, #tpu.memory_space<vmem>>, vector<16x128xf32>
    %c0_7 = arith.constant 0 : index
    %c0_8 = arith.constant 0 : index
    %19 = vector.load %arg1[%c0_7, %c0_8] : memref<128x128xf32, #tpu.memory_space<vmem>>, vector<128x128xf32>
    %20 = arith.truncf %19 : vector<128x128xf32> to vector<128x128xbf16>
    %21 = arith.truncf %18 : vector<16x128xf32> to vector<16x128xbf16>
    %c0_9 = arith.constant 0 : index
    %c0_10 = arith.constant 0 : index
    %c0_11 = arith.constant 0 : index
    %22 = vector.load %arg6[%c0_9, %c0_10, %c0_11] : memref<3x128x512xbf16, #tpu.memory_space<vmem>>, vector<1x128x512xbf16>
    %23 = vector.shape_cast %22 : vector<1x128x512xbf16> to vector<128x512xbf16>
    %cst = arith.constant dense<0.000000e+00> : vector<16x512xf32>
    %24 = tpu.matmul %21, %23, %cst {dimension_numbers = #tpu.dot_dimension_numbers<[1], [0], [0], [1], [0, 0, 1, 1], [], []>} : vector<16x128xbf16>, vector<128x512xbf16>, vector<16x512xf32> -> vector<16x512xf32>
    %c0_12 = arith.constant 0 : index
    %c0_13 = arith.constant 0 : index
    %c0_14 = arith.constant 0 : index
    %25 = vector.load %arg7[%c0_12, %c0_13, %c0_14] : memref<3x1x512xf32, #tpu.memory_space<vmem>>, vector<1x1x512xf32>
    %26 = vector.shape_cast %25 : vector<1x1x512xf32> to vector<1x512xf32>
    %27 = vector.broadcast %26 : vector<1x512xf32> to vector<16x512xf32>
    %28 = arith.addf %24, %27 : vector<16x512xf32>
    %29 = vector.extract_strided_slice %28 {offsets = [0, 0], sizes = [16, 128], strides = [1, 1]} : vector<16x512xf32> to vector<16x128xf32>
    %30 = vector.extract_strided_slice %28 {offsets = [0, 128], sizes = [16, 256], strides = [1, 1]} : vector<16x512xf32> to vector<16x256xf32>
    %31 = arith.truncf %30 : vector<16x256xf32> to vector<16x256xbf16>
    %32 = vector.extract_strided_slice %28 {offsets = [0, 384], sizes = [16, 128], strides = [1, 1]} : vector<16x512xf32> to vector<16x128xf32>
    %c0_15 = arith.constant 0 : index
    %c0_16 = arith.constant 0 : index
    %c0_17 = arith.constant 0 : index
    %33 = vector.load %arg8[%c0_15, %c0_16, %c0_17] : memref<3x128x128xbf16, #tpu.memory_space<vmem>>, vector<1x128x128xbf16>
    %34 = vector.shape_cast %33 : vector<1x128x128xbf16> to vector<128x128xbf16>
    %cst_18 = arith.constant dense<0.000000e+00> : vector<128x128xf32>
    %35 = tpu.matmul %20, %34, %cst_18 {dimension_numbers = #tpu.dot_dimension_numbers<[1], [0], [0], [1], [0, 0, 1, 1], [], []>} : vector<128x128xbf16>, vector<128x128xbf16>, vector<128x128xf32> -> vector<128x128xf32>
    %cst_19 = arith.constant dense<0.000000e+00> : vector<128x256xf32>
    %36 = tpu.matmul %6, %31, %cst_19 {dimension_numbers = #tpu.dot_dimension_numbers<[1], [0], [0], [1], [0, 0, 1, 1], [], []>} : vector<128x16xbf16>, vector<16x256xbf16>, vector<128x256xf32> -> vector<128x256xf32>
    %37 = vector.extract_strided_slice %36 {offsets = [0, 0], sizes = [128, 128], strides = [1, 1]} : vector<128x256xf32> to vector<128x128xf32>
    %38 = arith.addf %37, %35 : vector<128x128xf32>
    %39 = vector.extract_strided_slice %36 {offsets = [0, 128], sizes = [128, 128], strides = [1, 1]} : vector<128x256xf32> to vector<128x128xf32>
    %40 = arith.addf %39, %35 : vector<128x128xf32>
    %41 = arith.truncf %40 : vector<128x128xf32> to vector<128x128xbf16>
    %42 = arith.truncf %29 : vector<16x128xf32> to vector<16x128xbf16>
    %43 = arith.truncf %38 : vector<128x128xf32> to vector<128x128xbf16>
    %cst_20 = arith.constant dense<0.000000e+00> : vector<16x128xf32>
    %44 = tpu.matmul %42, %43, %cst_20 {dimension_numbers = #tpu.dot_dimension_numbers<[1], [1], [0], [0], [0, 0, 1, 0], [], []>} : vector<16x128xbf16>, vector<128x128xbf16>, vector<16x128xf32> -> vector<16x128xf32>
    %cst_21 = arith.constant -1.000000e+30 : f32
    %45 = vector.broadcast %cst_21 : f32 to vector<16x128xf32>
    %46 = arith.select %10, %44, %45 : vector<16x128xi1>, vector<16x128xf32>
    %cst_22 = arith.constant dense<0xFF800000> : vector<16xf32>
    %47 = vector.multi_reduction <maximumf>, %46, %cst_22 [1] : vector<16x128xf32> to vector<16xf32>
    %48 = vector.shape_cast %47 : vector<16xf32> to vector<16x1xf32>
    %49 = vector.broadcast %48 : vector<16x1xf32> to vector<16x128xf32>
    %50 = arith.subf %44, %49 : vector<16x128xf32>
    %51 = math.exp %50 : vector<16x128xf32>
    %cst_23 = arith.constant 0.000000e+00 : f32
    %52 = vector.broadcast %cst_23 : f32 to vector<16x128xf32>
    %53 = arith.select %10, %51, %52 : vector<16x128xi1>, vector<16x128xf32>
    %54 = arith.truncf %53 : vector<16x128xf32> to vector<16x128xbf16>
    %55 = arith.extf %54 : vector<16x128xbf16> to vector<16x128xf32>
    %cst_24 = arith.constant dense<0.000000e+00> : vector<16xf32>
    %56 = vector.multi_reduction <add>, %55, %cst_24 [1] : vector<16x128xf32> to vector<16xf32>
    %57 = vector.shape_cast %56 : vector<16xf32> to vector<16x1xf32>
    %cst_25 = arith.constant 1.000000e-16 : f32
    %58 = vector.broadcast %cst_25 : f32 to vector<16x1xf32>
    %59 = arith.addf %57, %58 : vector<16x1xf32>
    %cst_26 = arith.constant dense<0.000000e+00> : vector<16x128xf32>
    %60 = tpu.matmul %54, %41, %cst_26 {dimension_numbers = #tpu.dot_dimension_numbers<[1], [0], [0], [1], [0, 0, 1, 1], [], []>} : vector<16x128xbf16>, vector<128x128xbf16>, vector<16x128xf32> -> vector<16x128xf32>
    %61 = tpu.reciprocal %59 {approx = true} : vector<16x1xf32> -> vector<16x1xf32>
    %62 = vector.broadcast %61 : vector<16x1xf32> to vector<16x128xf32>
    %63 = arith.mulf %60, %62 : vector<16x128xf32>
    %64 = arith.addf %63, %32 : vector<16x128xf32>
    %cst_27 = arith.constant 0.000000e+00 : f32
    %65 = vector.broadcast %cst_27 : f32 to vector<16x128xf32>
    %66 = arith.maximumf %64, %65 : vector<16x128xf32>
    %67 = arith.truncf %66 : vector<16x128xf32> to vector<16x128xbf16>
    %c1 = arith.constant 1 : index
    %c0_28 = arith.constant 0 : index
    %c0_29 = arith.constant 0 : index
    %68 = vector.load %arg6[%c1, %c0_28, %c0_29] : memref<3x128x512xbf16, #tpu.memory_space<vmem>>, vector<1x128x512xbf16>
    %69 = vector.shape_cast %68 : vector<1x128x512xbf16> to vector<128x512xbf16>
    %cst_30 = arith.constant dense<0.000000e+00> : vector<16x512xf32>
    %70 = tpu.matmul %67, %69, %cst_30 {dimension_numbers = #tpu.dot_dimension_numbers<[1], [0], [0], [1], [0, 0, 1, 1], [], []>} : vector<16x128xbf16>, vector<128x512xbf16>, vector<16x512xf32> -> vector<16x512xf32>
    %c1_31 = arith.constant 1 : index
    %c0_32 = arith.constant 0 : index
    %c0_33 = arith.constant 0 : index
    %71 = vector.load %arg7[%c1_31, %c0_32, %c0_33] : memref<3x1x512xf32, #tpu.memory_space<vmem>>, vector<1x1x512xf32>
    %72 = vector.shape_cast %71 : vector<1x1x512xf32> to vector<1x512xf32>
    %73 = vector.broadcast %72 : vector<1x512xf32> to vector<16x512xf32>
    %74 = arith.addf %70, %73 : vector<16x512xf32>
    %75 = vector.extract_strided_slice %74 {offsets = [0, 0], sizes = [16, 128], strides = [1, 1]} : vector<16x512xf32> to vector<16x128xf32>
    %76 = vector.extract_strided_slice %74 {offsets = [0, 128], sizes = [16, 256], strides = [1, 1]} : vector<16x512xf32> to vector<16x256xf32>
    %77 = arith.truncf %76 : vector<16x256xf32> to vector<16x256xbf16>
    %78 = vector.extract_strided_slice %74 {offsets = [0, 384], sizes = [16, 128], strides = [1, 1]} : vector<16x512xf32> to vector<16x128xf32>
    %c1_34 = arith.constant 1 : index
    %c0_35 = arith.constant 0 : index
    %c0_36 = arith.constant 0 : index
    %79 = vector.load %arg8[%c1_34, %c0_35, %c0_36] : memref<3x128x128xbf16, #tpu.memory_space<vmem>>, vector<1x128x128xbf16>
    %80 = vector.shape_cast %79 : vector<1x128x128xbf16> to vector<128x128xbf16>
    %cst_37 = arith.constant dense<0.000000e+00> : vector<128x128xf32>
    %81 = tpu.matmul %20, %80, %cst_37 {dimension_numbers = #tpu.dot_dimension_numbers<[1], [0], [0], [1], [0, 0, 1, 1], [], []>} : vector<128x128xbf16>, vector<128x128xbf16>, vector<128x128xf32> -> vector<128x128xf32>
    %cst_38 = arith.constant dense<0.000000e+00> : vector<128x256xf32>
    %82 = tpu.matmul %6, %77, %cst_38 {dimension_numbers = #tpu.dot_dimension_numbers<[1], [0], [0], [1], [0, 0, 1, 1], [], []>} : vector<128x16xbf16>, vector<16x256xbf16>, vector<128x256xf32> -> vector<128x256xf32>
    %83 = vector.extract_strided_slice %82 {offsets = [0, 0], sizes = [128, 128], strides = [1, 1]} : vector<128x256xf32> to vector<128x128xf32>
    %84 = arith.addf %83, %81 : vector<128x128xf32>
    %85 = vector.extract_strided_slice %82 {offsets = [0, 128], sizes = [128, 128], strides = [1, 1]} : vector<128x256xf32> to vector<128x128xf32>
    %86 = arith.addf %85, %81 : vector<128x128xf32>
    %87 = arith.truncf %86 : vector<128x128xf32> to vector<128x128xbf16>
    %88 = arith.truncf %75 : vector<16x128xf32> to vector<16x128xbf16>
    %89 = arith.truncf %84 : vector<128x128xf32> to vector<128x128xbf16>
    %cst_39 = arith.constant dense<0.000000e+00> : vector<16x128xf32>
    %90 = tpu.matmul %88, %89, %cst_39 {dimension_numbers = #tpu.dot_dimension_numbers<[1], [1], [0], [0], [0, 0, 1, 0], [], []>} : vector<16x128xbf16>, vector<128x128xbf16>, vector<16x128xf32> -> vector<16x128xf32>
    %cst_40 = arith.constant -1.000000e+30 : f32
    %91 = vector.broadcast %cst_40 : f32 to vector<16x128xf32>
    %92 = arith.select %10, %90, %91 : vector<16x128xi1>, vector<16x128xf32>
    %cst_41 = arith.constant dense<0xFF800000> : vector<16xf32>
    %93 = vector.multi_reduction <maximumf>, %92, %cst_41 [1] : vector<16x128xf32> to vector<16xf32>
    %94 = vector.shape_cast %93 : vector<16xf32> to vector<16x1xf32>
    %95 = vector.broadcast %94 : vector<16x1xf32> to vector<16x128xf32>
    %96 = arith.subf %90, %95 : vector<16x128xf32>
    %97 = math.exp %96 : vector<16x128xf32>
    %cst_42 = arith.constant 0.000000e+00 : f32
    %98 = vector.broadcast %cst_42 : f32 to vector<16x128xf32>
    %99 = arith.select %10, %97, %98 : vector<16x128xi1>, vector<16x128xf32>
    %100 = arith.truncf %99 : vector<16x128xf32> to vector<16x128xbf16>
    %101 = arith.extf %100 : vector<16x128xbf16> to vector<16x128xf32>
    %cst_43 = arith.constant dense<0.000000e+00> : vector<16xf32>
    %102 = vector.multi_reduction <add>, %101, %cst_43 [1] : vector<16x128xf32> to vector<16xf32>
    %103 = vector.shape_cast %102 : vector<16xf32> to vector<16x1xf32>
    %cst_44 = arith.constant 1.000000e-16 : f32
    %104 = vector.broadcast %cst_44 : f32 to vector<16x1xf32>
    %105 = arith.addf %103, %104 : vector<16x1xf32>
    %cst_45 = arith.constant dense<0.000000e+00> : vector<16x128xf32>
    %106 = tpu.matmul %100, %87, %cst_45 {dimension_numbers = #tpu.dot_dimension_numbers<[1], [0], [0], [1], [0, 0, 1, 1], [], []>} : vector<16x128xbf16>, vector<128x128xbf16>, vector<16x128xf32> -> vector<16x128xf32>
    %107 = tpu.reciprocal %105 {approx = true} : vector<16x1xf32> -> vector<16x1xf32>
    %108 = vector.broadcast %107 : vector<16x1xf32> to vector<16x128xf32>
    %109 = arith.mulf %106, %108 : vector<16x128xf32>
    %110 = arith.addf %109, %78 : vector<16x128xf32>
    %cst_46 = arith.constant 0.000000e+00 : f32
    %111 = vector.broadcast %cst_46 : f32 to vector<16x128xf32>
    %112 = arith.maximumf %110, %111 : vector<16x128xf32>
    %113 = arith.truncf %112 : vector<16x128xf32> to vector<16x128xbf16>
    %c2 = arith.constant 2 : index
    %c0_47 = arith.constant 0 : index
    %c0_48 = arith.constant 0 : index
    %114 = vector.load %arg6[%c2, %c0_47, %c0_48] : memref<3x128x512xbf16, #tpu.memory_space<vmem>>, vector<1x128x512xbf16>
    %115 = vector.shape_cast %114 : vector<1x128x512xbf16> to vector<128x512xbf16>
    %cst_49 = arith.constant dense<0.000000e+00> : vector<16x512xf32>
    %116 = tpu.matmul %113, %115, %cst_49 {dimension_numbers = #tpu.dot_dimension_numbers<[1], [0], [0], [1], [0, 0, 1, 1], [], []>} : vector<16x128xbf16>, vector<128x512xbf16>, vector<16x512xf32> -> vector<16x512xf32>
    %c2_50 = arith.constant 2 : index
    %c0_51 = arith.constant 0 : index
    %c0_52 = arith.constant 0 : index
    %117 = vector.load %arg7[%c2_50, %c0_51, %c0_52] : memref<3x1x512xf32, #tpu.memory_space<vmem>>, vector<1x1x512xf32>
    %118 = vector.shape_cast %117 : vector<1x1x512xf32> to vector<1x512xf32>
    %119 = vector.broadcast %118 : vector<1x512xf32> to vector<16x512xf32>
    %120 = arith.addf %116, %119 : vector<16x512xf32>
    %121 = vector.extract_strided_slice %120 {offsets = [0, 0], sizes = [16, 128], strides = [1, 1]} : vector<16x512xf32> to vector<16x128xf32>
    %122 = vector.extract_strided_slice %120 {offsets = [0, 128], sizes = [16, 256], strides = [1, 1]} : vector<16x512xf32> to vector<16x256xf32>
    %123 = arith.truncf %122 : vector<16x256xf32> to vector<16x256xbf16>
    %124 = vector.extract_strided_slice %120 {offsets = [0, 384], sizes = [16, 128], strides = [1, 1]} : vector<16x512xf32> to vector<16x128xf32>
    %c2_53 = arith.constant 2 : index
    %c0_54 = arith.constant 0 : index
    %c0_55 = arith.constant 0 : index
    %125 = vector.load %arg8[%c2_53, %c0_54, %c0_55] : memref<3x128x128xbf16, #tpu.memory_space<vmem>>, vector<1x128x128xbf16>
    %126 = vector.shape_cast %125 : vector<1x128x128xbf16> to vector<128x128xbf16>
    %cst_56 = arith.constant dense<0.000000e+00> : vector<128x128xf32>
    %127 = tpu.matmul %20, %126, %cst_56 {dimension_numbers = #tpu.dot_dimension_numbers<[1], [0], [0], [1], [0, 0, 1, 1], [], []>} : vector<128x128xbf16>, vector<128x128xbf16>, vector<128x128xf32> -> vector<128x128xf32>
    %cst_57 = arith.constant dense<0.000000e+00> : vector<128x256xf32>
    %128 = tpu.matmul %6, %123, %cst_57 {dimension_numbers = #tpu.dot_dimension_numbers<[1], [0], [0], [1], [0, 0, 1, 1], [], []>} : vector<128x16xbf16>, vector<16x256xbf16>, vector<128x256xf32> -> vector<128x256xf32>
    %129 = vector.extract_strided_slice %128 {offsets = [0, 0], sizes = [128, 128], strides = [1, 1]} : vector<128x256xf32> to vector<128x128xf32>
    %130 = arith.addf %129, %127 : vector<128x128xf32>
    %131 = vector.extract_strided_slice %128 {offsets = [0, 128], sizes = [128, 128], strides = [1, 1]} : vector<128x256xf32> to vector<128x128xf32>
    %132 = arith.addf %131, %127 : vector<128x128xf32>
    %133 = arith.truncf %132 : vector<128x128xf32> to vector<128x128xbf16>
    %134 = arith.truncf %121 : vector<16x128xf32> to vector<16x128xbf16>
    %135 = arith.truncf %130 : vector<128x128xf32> to vector<128x128xbf16>
    %cst_58 = arith.constant dense<0.000000e+00> : vector<16x128xf32>
    %136 = tpu.matmul %134, %135, %cst_58 {dimension_numbers = #tpu.dot_dimension_numbers<[1], [1], [0], [0], [0, 0, 1, 0], [], []>} : vector<16x128xbf16>, vector<128x128xbf16>, vector<16x128xf32> -> vector<16x128xf32>
    %cst_59 = arith.constant -1.000000e+30 : f32
    %137 = vector.broadcast %cst_59 : f32 to vector<16x128xf32>
    %138 = arith.select %10, %136, %137 : vector<16x128xi1>, vector<16x128xf32>
    %cst_60 = arith.constant dense<0xFF800000> : vector<16xf32>
    %139 = vector.multi_reduction <maximumf>, %138, %cst_60 [1] : vector<16x128xf32> to vector<16xf32>
    %140 = vector.shape_cast %139 : vector<16xf32> to vector<16x1xf32>
    %141 = vector.broadcast %140 : vector<16x1xf32> to vector<16x128xf32>
    %142 = arith.subf %136, %141 : vector<16x128xf32>
    %143 = math.exp %142 : vector<16x128xf32>
    %cst_61 = arith.constant 0.000000e+00 : f32
    %144 = vector.broadcast %cst_61 : f32 to vector<16x128xf32>
    %145 = arith.select %10, %143, %144 : vector<16x128xi1>, vector<16x128xf32>
    %146 = arith.truncf %145 : vector<16x128xf32> to vector<16x128xbf16>
    %147 = arith.extf %146 : vector<16x128xbf16> to vector<16x128xf32>
    %cst_62 = arith.constant dense<0.000000e+00> : vector<16xf32>
    %148 = vector.multi_reduction <add>, %147, %cst_62 [1] : vector<16x128xf32> to vector<16xf32>
    %149 = vector.shape_cast %148 : vector<16xf32> to vector<16x1xf32>
    %cst_63 = arith.constant 1.000000e-16 : f32
    %150 = vector.broadcast %cst_63 : f32 to vector<16x1xf32>
    %151 = arith.addf %149, %150 : vector<16x1xf32>
    %cst_64 = arith.constant dense<0.000000e+00> : vector<16x128xf32>
    %152 = tpu.matmul %146, %133, %cst_64 {dimension_numbers = #tpu.dot_dimension_numbers<[1], [0], [0], [1], [0, 0, 1, 1], [], []>} : vector<16x128xbf16>, vector<128x128xbf16>, vector<16x128xf32> -> vector<16x128xf32>
    %153 = tpu.reciprocal %151 {approx = true} : vector<16x1xf32> -> vector<16x1xf32>
    %154 = vector.broadcast %153 : vector<16x1xf32> to vector<16x128xf32>
    %155 = arith.mulf %152, %154 : vector<16x128xf32>
    %156 = arith.addf %155, %124 : vector<16x128xf32>
    %cst_65 = arith.constant 0.000000e+00 : f32
    %157 = vector.broadcast %cst_65 : f32 to vector<16x128xf32>
    %158 = arith.maximumf %156, %157 : vector<16x128xf32>
    %159 = arith.truncf %158 : vector<16x128xf32> to vector<16x128xbf16>
    %cst_66 = arith.constant dense<0.000000e+00> : vector<8x128xf32>
    %160 = tpu.matmul %17, %159, %cst_66 {dimension_numbers = #tpu.dot_dimension_numbers<[1], [0], [0], [1], [0, 0, 1, 1], [], []>} : vector<8x16xbf16>, vector<16x128xbf16>, vector<8x128xf32> -> vector<8x128xf32>
    %c0_67 = arith.constant 0 : index
    %c0_68 = arith.constant 0 : index
    %161 = vector.load %arg5[%c0_67, %c0_68] : memref<8x1xf32, #tpu.memory_space<vmem>>, vector<8x1xf32>
    %162 = vector.broadcast %161 : vector<8x1xf32> to vector<8x128xf32>
    %163 = arith.mulf %160, %162 : vector<8x128xf32>
    %164 = arith.truncf %163 : vector<8x128xf32> to vector<8x128xbf16>
    %c0_69 = arith.constant 0 : index
    %c0_70 = arith.constant 0 : index
    %165 = vector.load %arg9[%c0_69, %c0_70] : memref<128x128xbf16, #tpu.memory_space<vmem>>, vector<128x128xbf16>
    %cst_71 = arith.constant dense<0.000000e+00> : vector<8x128xf32>
    %166 = tpu.matmul %164, %165, %cst_71 {dimension_numbers = #tpu.dot_dimension_numbers<[1], [0], [0], [1], [0, 0, 1, 1], [], []>} : vector<8x128xbf16>, vector<128x128xbf16>, vector<8x128xf32> -> vector<8x128xf32>
    %c0_72 = arith.constant 0 : index
    %c0_73 = arith.constant 0 : index
    %167 = vector.load %arg10[%c0_72, %c0_73] : memref<1x128xf32, #tpu.memory_space<vmem>>, vector<1x128xf32>
    %168 = vector.broadcast %167 : vector<1x128xf32> to vector<8x128xf32>
    %169 = arith.addf %166, %168 : vector<8x128xf32>
    %cst_74 = arith.constant 0.000000e+00 : f32
    %170 = vector.broadcast %cst_74 : f32 to vector<8x128xf32>
    %171 = arith.maximumf %169, %170 : vector<8x128xf32>
    %172 = arith.truncf %171 : vector<8x128xf32> to vector<8x128xbf16>
    %c0_75 = arith.constant 0 : index
    %c0_76 = arith.constant 0 : index
    %173 = vector.load %arg11[%c0_75, %c0_76] : memref<128x128xbf16, #tpu.memory_space<vmem>>, vector<128x128xbf16>
    %cst_77 = arith.constant dense<0.000000e+00> : vector<8x128xf32>
    %174 = tpu.matmul %172, %173, %cst_77 {dimension_numbers = #tpu.dot_dimension_numbers<[1], [0], [0], [1], [0, 0, 1, 1], [], []>} : vector<8x128xbf16>, vector<128x128xbf16>, vector<8x128xf32> -> vector<8x128xf32>
    %c0_78 = arith.constant 0 : index
    %c0_79 = arith.constant 0 : index
    %175 = vector.load %arg12[%c0_78, %c0_79] : memref<1x128xf32, #tpu.memory_space<vmem>>, vector<1x128xf32>
    %176 = vector.broadcast %175 : vector<1x128xf32> to vector<8x128xf32>
    %177 = arith.addf %174, %176 : vector<8x128xf32>
    %c0_80 = arith.constant 0 : index
    %c0_81 = arith.constant 0 : index
    %178 = vector.load %arg13[%c0_80, %c0_81] : memref<8x128xf32, #tpu.memory_space<vmem>>, vector<8x128xf32>
    tpu.vector_store %arg13[%c0_80, %c0_81], %177 {strides = array<i32>} : memref<8x128xf32, #tpu.memory_space<vmem>>, vector<8x128xf32>,
    return
  }
}

</mosaic_0001>

<llo_original>
// kernel: tpu_custom_call.1
$region0: #{tpu_custom_call.1}
  #allocation0 [shape = 'u32[]', space=smem, size = 0x4, offset = 0x4, fixed_abs, tag = 'smem constant byte address 0x4 - core index']
  #allocation1 [shape = 'u32[144,128]{1,0:T(1,128)}', space=vmem, size = 0x12000, scoped, tag = 'internal scratch']
  %s0 = inlined_call_operand.hbm [shape: f32[16,128], index: 0, kind: input, shape index: {}]
  %s1 = inlined_call_operand.vmem [shape: f32[128,128], index: 1, kind: input, shape index: {}]
  %s2 = inlined_call_operand.vmem [shape: s32[128,1], index: 2, kind: input, shape index: {}]
  %s3 = inlined_call_operand.vmem [shape: s32[1,128], index: 3, kind: input, shape index: {}]
  %s4 = inlined_call_operand.vmem [shape: s32[1,16], index: 4, kind: input, shape index: {}]
  %s5 = inlined_call_operand.vmem [shape: f32[8,1], index: 5, kind: input, shape index: {}]
  %s6 = inlined_call_operand.hbm [shape: bf16[3,128,512], index: 6, kind: input, shape index: {}]
  %s7 = inlined_call_operand.vmem [shape: f32[3,1,512], index: 7, kind: input, shape index: {}]
  %s8 = inlined_call_operand.hbm [shape: bf16[3,128,128], index: 8, kind: input, shape index: {}]
  %s9 = inlined_call_operand.hbm [shape: bf16[128,128], index: 9, kind: input, shape index: {}]
  %s10 = inlined_call_operand.vmem [shape: f32[1,128], index: 10, kind: input, shape index: {}]
  %s11 = inlined_call_operand.hbm [shape: bf16[128,128], index: 11, kind: input, shape index: {}]
  %s12 = inlined_call_operand.vmem [shape: f32[1,128], index: 12, kind: input, shape index: {}]
  %s13 = inlined_call_operand.hbm [shape: f32[8,128], index: 13, kind: output, shape index: {}]
  %s14 = sld [smem:[#allocation0]]
  $region82: #{tpu_custom_call.1} parent=0
    _
  %s16 = ssub.s32 1, %s14
  %s17 = scalar_select 0, %s16, %s14
  $region1: #{tpu_custom_call.1} parent=0
    #allocation2 [shape = 'u8[8192]{0}', space=vmem, size = 0x2000, scoped, tag = 'input window, operand 0, single buffered']
    #allocation3 [shape = 's32[1]{0}', space=sflag, size = 0x4, scoped, tag = 'scoped memory for tpu_custom_call.1']
    #allocation4 [shape = 's32[1]{0}', space=sflag, size = 0x4, scoped, tag = 'scoped memory for tpu_custom_call.1']
    #allocation5 [shape = 'u8[393216]{0}', space=vmem, size = 0x60000, scoped, tag = 'input window, operand 6, single buffered']
    #allocation6 [shape = 's32[1]{0}', space=sflag, size = 0x4, scoped, tag = 'scoped memory for tpu_custom_call.1']
    #allocation7 [shape = 'u8[98304]{0}', space=vmem, size = 0x18000, scoped, tag = 'input window, operand 8, single buffered']
    #allocation8 [shape = 'u8[32768]{0}', space=vmem, size = 0x8000, scoped, tag = 'input window, operand 9, single buffered']
    #allocation9 [shape = 's32[1]{0}', space=sflag, size = 0x4, scoped, tag = 'scoped memory for tpu_custom_call.1']
    #allocation10 [shape = 'u8[32768]{0}', space=vmem, size = 0x8000, scoped, tag = 'input window, operand 11, single buffered']
    #allocation11 [shape = 'u8[4096]{0}', space=vmem, size = 0x1000, scoped, tag = 'output window, operand 0, single buffered']
    %18 = vsyncpa [#allocation3], 0
    %19 = vsyncpa [#allocation6], 0
    %20 = vsyncpa [#allocation9], 0
    %21 = vsyncpa [#allocation4], 0
    // Predicated region
    $region2: #{tpu_custom_call.1} parent=1 // pred_check
      _
    $region3: #{tpu_custom_call.1} parent=1 // pred_check_branch
      %23 = sbr.rel (0) target = $region5
    $region4: #{tpu_custom_call.1} parent=1 // pred_region
      %s25 = ssub.s32 256, 256
      %26 = vsyncadd [#allocation3], %s25
      %s27 = sshll.u32 [#allocation2], 4
      %s28 = int_to_ptr.vmem [resolvable:$true] %s27
      %33 = dma.hbm_to_vmem [thread:$0]  %s0, 256, %s28, [#allocation3], 128, 128, 8
    $region5: #{tpu_custom_call.1} parent=1 // pred_fallthru
      _
    // Predicated region
    $region6: #{tpu_custom_call.1} parent=1 // pred_check
      _
    $region7: #{tpu_custom_call.1} parent=1 // pred_check_branch
      %35 = sbr.rel (0) target = $region9
    $region8: #{tpu_custom_call.1} parent=1 // pred_region
      _
    $region9: #{tpu_custom_call.1} parent=1 // pred_fallthru
      _
    // Predicated region
    $region10: #{tpu_custom_call.1} parent=1 // pred_check
      _
    $region11: #{tpu_custom_call.1} parent=1 // pred_check_branch
      %37 = sbr.rel (0) target = $region13
    $region12: #{tpu_custom_call.1} parent=1 // pred_region
      _
    $region13: #{tpu_custom_call.1} parent=1 // pred_fallthru
      _
    // Predicated region
    $region14: #{tpu_custom_call.1} parent=1 // pred_check
      _
    $region15: #{tpu_custom_call.1} parent=1 // pred_check_branch
      %39 = sbr.rel (0) target = $region17
    $region16: #{tpu_custom_call.1} parent=1 // pred_region
      _
    $region17: #{tpu_custom_call.1} parent=1 // pred_fallthru
      _
    // Predicated region
    $region18: #{tpu_custom_call.1} parent=1 // pred_check
      _
    $region19: #{tpu_custom_call.1} parent=1 // pred_check_branch
      %41 = sbr.rel (0) target = $region21
    $region20: #{tpu_custom_call.1} parent=1 // pred_region
      _
    $region21: #{tpu_custom_call.1} parent=1 // pred_fallthru
      _
    // Predicated region
    $region22: #{tpu_custom_call.1} parent=1 // pred_check
      _
    $region23: #{tpu_custom_call.1} parent=1 // pred_check_branch
      %43 = sbr.rel (0) target = $region25
    $region24: #{tpu_custom_call.1} parent=1 // pred_region
      _
    $region25: #{tpu_custom_call.1} parent=1 // pred_fallthru
      _
    // Predicated region
    $region26: #{tpu_custom_call.1} parent=1 // pred_check
      _
    $region27: #{tpu_custom_call.1} parent=1 // pred_check_branch
      %45 = sbr.rel (0) target = $region29
    $region28: #{tpu_custom_call.1} parent=1 // pred_region
      %s47 = ssub.s32 12288, 12288
      %48 = vsyncadd [#allocation6], %s47
      %s49 = sshll.u32 [#allocation5], 4
      %s50 = int_to_ptr.vmem [resolvable:$true] %s49
      %55 = dma.hbm_to_vmem [thread:$0]  %s6, 12288, %s50, [#allocation6], 256, 256, 16
    $region29: #{tpu_custom_call.1} parent=1 // pred_fallthru
      _
    // Predicated region
    $region30: #{tpu_custom_call.1} parent=1 // pred_check
      _
    $region31: #{tpu_custom_call.1} parent=1 // pred_check_branch
      %57 = sbr.rel (0) target = $region33
    $region32: #{tpu_custom_call.1} parent=1 // pred_region
      _
    $region33: #{tpu_custom_call.1} parent=1 // pred_fallthru
      _
    // Predicated region
    $region34: #{tpu_custom_call.1} parent=1 // pred_check
      _
    $region35: #{tpu_custom_call.1} parent=1 // pred_check_branch
      %59 = sbr.rel (0) target = $region37
    $region36: #{tpu_custom_call.1} parent=1 // pred_region
      %s61 = ssub.s32 3072, 3072
      %62 = vsyncadd [#allocation6], %s61
      %s63 = sshll.u32 [#allocation7], 4
      %s64 = int_to_ptr.vmem [resolvable:$true] %s63
      %69 = dma.hbm_to_vmem [thread:$0]  %s8, 3072, %s64, [#allocation6], 64, 64, 4
    $region37: #{tpu_custom_call.1} parent=1 // pred_fallthru
      _
    // Predicated region
    $region38: #{tpu_custom_call.1} parent=1 // pred_check
      _
    $region39: #{tpu_custom_call.1} parent=1 // pred_check_branch
      %71 = sbr.rel (0) target = $region41
    $region40: #{tpu_custom_call.1} parent=1 // pred_region
      %s73 = ssub.s32 1024, 1024
      %74 = vsyncadd [#allocation9], %s73
      %s75 = sshll.u32 [#allocation8], 4
      %s76 = int_to_ptr.vmem [resolvable:$true] %s75
      %81 = dma.hbm_to_vmem [thread:$0]  %s9, 1024, %s76, [#allocation9], 64, 64, 4
    $region41: #{tpu_custom_call.1} parent=1 // pred_fallthru
      _
    // Predicated region
    $region42: #{tpu_custom_call.1} parent=1 // pred_check
      _
    $region43: #{tpu_custom_call.1} parent=1 // pred_check_branch
      %83 = sbr.rel (0) target = $region45
    $region44: #{tpu_custom_call.1} parent=1 // pred_region
      _
    $region45: #{tpu_custom_call.1} parent=1 // pred_fallthru
      _
    // Predicated region
    $region46: #{tpu_custom_call.1} parent=1 // pred_check
      _
    $region47: #{tpu_custom_call.1} parent=1 // pred_check_branch
      %85 = sbr.rel (0) target = $region49
    $region48: #{tpu_custom_call.1} parent=1 // pred_region
      %s87 = ssub.s32 1024, 1024
      %88 = vsyncadd [#allocation9], %s87
      %s89 = sshll.u32 [#allocation10], 4
      %s90 = int_to_ptr.vmem [resolvable:$true] %s89
      %95 = dma.hbm_to_vmem [thread:$0]  %s11, 1024, %s90, [#allocation9], 64, 64, 4
    $region49: #{tpu_custom_call.1} parent=1 // pred_fallthru
      _
    // Predicated region
    $region50: #{tpu_custom_call.1} parent=1 // pred_check
      _
    $region51: #{tpu_custom_call.1} parent=1 // pred_check_branch
      %97 = sbr.rel (0) target = $region53
    $region52: #{tpu_custom_call.1} parent=1 // pred_region
      _
    $region53: #{tpu_custom_call.1} parent=1 // pred_fallthru
      _
    // Predicated region
    $region54: #{tpu_custom_call.1} parent=1 // pred_check
      _
    $region55: #{tpu_custom_call.1} parent=1 // pred_check_branch
      %99 = sbr.rel (0) target = $region57
    $region56: #{tpu_custom_call.1} parent=1 // pred_region
      %100 = dma.done [#allocation3], 256
    $region57: #{tpu_custom_call.1} parent=1 // pred_fallthru
      _
    // Predicated region
    $region58: #{tpu_custom_call.1} parent=1 // pred_check
      _
    $region59: #{tpu_custom_call.1} parent=1 // pred_check_branch
      %102 = sbr.rel (0) target = $region61
    $region60: #{tpu_custom_call.1} parent=1 // pred_region
      %103 = dma.done [#allocation6], 12288
    $region61: #{tpu_custom_call.1} parent=1 // pred_fallthru
      _
    // Predicated region
    $region62: #{tpu_custom_call.1} parent=1 // pred_check
      _
    $region63: #{tpu_custom_call.1} parent=1 // pred_check_branch
      %105 = sbr.rel (0) target = $region65
    $region64: #{tpu_custom_call.1} parent=1 // pred_region
      %106 = dma.done [#allocation6], 3072
    $region65: #{tpu_custom_call.1} parent=1 // pred_fallthru
      _
    // Predicated region
    $region66: #{tpu_custom_call.1} parent=1 // pred_check
      _
    $region67: #{tpu_custom_call.1} parent=1 // pred_check_branch
      %108 = sbr.rel (0) target = $region69
    $region68: #{tpu_custom_call.1} parent=1 // pred_region
      %109 = dma.done [#allocation9], 1024
    $region69: #{tpu_custom_call.1} parent=1 // pred_fallthru
      _
    // Predicated region
    $region70: #{tpu_custom_call.1} parent=1 // pred_check
      _
    $region71: #{tpu_custom_call.1} parent=1 // pred_check_branch
      %111 = sbr.rel (0) target = $region73
    $region72: #{tpu_custom_call.1} parent=1 // pred_region
      %112 = dma.done [#allocation9], 1024
    $region73: #{tpu_custom_call.1} parent=1 // pred_fallthru
      _
    %v114 = vlaneseq
    %v115 = vand.u32 %v114, 127
    %v116 = vld [vmem:[%s2] sm:$0xff]
    %v117 = vld [vmem:[%s2 + $0x8] sm:$0xff]
    %v118 = vld [vmem:[%s2 + $0x10] sm:$0xff]
    %v119 = vld [vmem:[%s2 + $0x18] sm:$0xff]
    %v120 = vld [vmem:[%s2 + $0x20] sm:$0xff]
    %v121 = vld [vmem:[%s2 + $0x28] sm:$0xff]
    %v122 = vld [vmem:[%s2 + $0x30] sm:$0xff]
    %v123 = vld [vmem:[%s2 + $0x38] sm:$0xff]
    %v124 = vld [vmem:[%s2 + $0x40] sm:$0xff]
    %v125 = vld [vmem:[%s2 + $0x48] sm:$0xff]
    %v126 = vld [vmem:[%s2 + $0x50] sm:$0xff]
    %v127 = vld [vmem:[%s2 + $0x58] sm:$0xff]
    %v128 = vld [vmem:[%s2 + $0x60] sm:$0xff]
    %v129 = vld [vmem:[%s2 + $0x68] sm:$0xff]
    %v130 = vld [vmem:[%s2 + $0x70] sm:$0xff]
    %v131 = vld [vmem:[%s2 + $0x78] sm:$0xff]
    %132 = vset.pattern.permute.xlu0 0
    %133 = vperm.xlu0 %132, %v116
    %v134 = vpop.permute.xlu0 %133
    %135 = vset.pattern.permute.xlu0 0
    %136 = vperm.xlu0 %135, %v117
    %v137 = vpop.permute.xlu0 %136
    %138 = vset.pattern.permute.xlu0 0
    %139 = vperm.xlu0 %138, %v118
    %v140 = vpop.permute.xlu0 %139
    %141 = vset.pattern.permute.xlu0 0
    %142 = vperm.xlu0 %141, %v119
    %v143 = vpop.permute.xlu0 %142
    %144 = vset.pattern.permute.xlu0 0
    %145 = vperm.xlu0 %144, %v120
    %v146 = vpop.permute.xlu0 %145
    %147 = vset.pattern.permute.xlu0 0
    %148 = vperm.xlu0 %147, %v121
    %v149 = vpop.permute.xlu0 %148
    %150 = vset.pattern.permute.xlu0 0
    %151 = vperm.xlu0 %150, %v122
    %v152 = vpop.permute.xlu0 %151
    %153 = vset.pattern.permute.xlu0 0
    %154 = vperm.xlu0 %153, %v123
    %v155 = vpop.permute.xlu0 %154
    %156 = vset.pattern.permute.xlu0 0
    %157 = vperm.xlu0 %156, %v124
    %v158 = vpop.permute.xlu0 %157
    %159 = vset.pattern.permute.xlu0 0
    %160 = vperm.xlu0 %159, %v125
    %v161 = vpop.permute.xlu0 %160
    %162 = vset.pattern.permute.xlu0 0
    %163 = vperm.xlu0 %162, %v126
    %v164 = vpop.permute.xlu0 %163
    %165 = vset.pattern.permute.xlu0 0
    %166 = vperm.xlu0 %165, %v127
    %v167 = vpop.permute.xlu0 %166
    %168 = vset.pattern.permute.xlu0 0
    %169 = vperm.xlu0 %168, %v128
    %v170 = vpop.permute.xlu0 %169
    %171 = vset.pattern.permute.xlu0 0
    %172 = vperm.xlu0 %171, %v129
    %v173 = vpop.permute.xlu0 %172
    %174 = vset.pattern.permute.xlu0 0
    %175 = vperm.xlu0 %174, %v130
    %v176 = vpop.permute.xlu0 %175
    %177 = vset.pattern.permute.xlu0 0
    %178 = vperm.xlu0 %177, %v131
    %v179 = vpop.permute.xlu0 %178
    %vm180 = vcmp.eq.s32.totalorder %v115, %v134
    %vm181 = vcmp.eq.s32.totalorder %v115, %v137
    %vm182 = vcmp.eq.s32.totalorder %v115, %v140
    %vm183 = vcmp.eq.s32.totalorder %v115, %v143
    %vm184 = vcmp.eq.s32.totalorder %v115, %v146
    %vm185 = vcmp.eq.s32.totalorder %v115, %v149
    %vm186 = vcmp.eq.s32.totalorder %v115, %v152
    %vm187 = vcmp.eq.s32.totalorder %v115, %v155
    %vm188 = vcmp.eq.s32.totalorder %v115, %v158
    %vm189 = vcmp.eq.s32.totalorder %v115, %v161
    %vm190 = vcmp.eq.s32.totalorder %v115, %v164
    %vm191 = vcmp.eq.s32.totalorder %v115, %v167
    %vm192 = vcmp.eq.s32.totalorder %v115, %v170
    %vm193 = vcmp.eq.s32.totalorder %v115, %v173
    %vm194 = vcmp.eq.s32.totalorder %v115, %v176
    %vm195 = vcmp.eq.s32.totalorder %v115, %v179
    %v196 = vsel %vm180, 1, 0
    %v197 = vsel %vm181, 1, 0
    %v198 = vsel %vm182, 1, 0
    %v199 = vsel %vm183, 1, 0
    %v200 = vsel %vm184, 1, 0
    %v201 = vsel %vm185, 1, 0
    %v202 = vsel %vm186, 1, 0
    %v203 = vsel %vm187, 1, 0
    %v204 = vsel %vm188, 1, 0
    %v205 = vsel %vm189, 1, 0
    %v206 = vsel %vm190, 1, 0
    %v207 = vsel %vm191, 1, 0
    %v208 = vsel %vm192, 1, 0
    %v209 = vsel %vm193, 1, 0
    %v210 = vsel %vm194, 1, 0
    %v211 = vsel %vm195, 1, 0
    %v212 = vcvt.s32.f32 %v196
    %v213 = vcvt.s32.f32 %v197
    %v214 = vcvt.s32.f32 %v198
    %v215 = vcvt.s32.f32 %v199
    %v216 = vcvt.s32.f32 %v200
    %v217 = vcvt.s32.f32 %v201
    %v218 = vcvt.s32.f32 %v202
    %v219 = vcvt.s32.f32 %v203
    %v220 = vcvt.s32.f32 %v204
    %v221 = vcvt.s32.f32 %v205
    %v222 = vcvt.s32.f32 %v206
    %v223 = vcvt.s32.f32 %v207
    %v224 = vcvt.s32.f32 %v208
    %v225 = vcvt.s32.f32 %v209
    %v226 = vcvt.s32.f32 %v210
    %v227 = vcvt.s32.f32 %v211
    %v228 = vpack.c.bf16 %v213, %v212
    %v229 = vpack.c.bf16 %v215, %v214
    %v230 = vpack.c.bf16 %v217, %v216
    %v231 = vpack.c.bf16 %v219, %v218
    %v232 = vpack.c.bf16 %v221, %v220
    %v233 = vpack.c.bf16 %v223, %v222
    %v234 = vpack.c.bf16 %v225, %v224
    %v235 = vpack.c.bf16 %v227, %v226
    %v236 = vlaneseq
    %v237 = vshrl.u32 %v236, 7
    %v238 = vadd.s32 %v237, 8
    %v239 = vld [vmem:[%s3] sm:$0x1]
    %v240 = vlaneseq
    %v241 = vshrl.u32 %v240, 7
    %v242 = vsub.s32 0, %v241
    %v243 = vrot.slane %v239, %v242
    %vm244 = vcmp.eq.s32.totalorder %v237, %v243
    %vm245 = vcmp.eq.s32.totalorder %v238, %v243
    %v246 = vld [vmem:[%s4] sm:$0x1]
    %v247 = vlaneseq
    %v248 = vshrl.u32 %v247, 7
    %v249 = vsub.s32 0, %v248
    %v250 = vrot.slane %v246, %v249
    %vm251 = vcmp.eq.s32.totalorder %v237, %v250
    %v252 = vsel %vm251, 1, 0
    %v253 = vcvt.s32.f32 %v252
    %v254 = vpack.c.bf16 %v253, %v253
    %v255 = vld [vmem:[#allocation2] sm:$0xff]
    %v256 = vld [vmem:[#allocation2 + $0x8] sm:$0xff]
    %v257 = vld [vmem:[%s1] sm:$0xff]
    %v258 = vld [vmem:[%s1 + $0x8] sm:$0xff]
    %v259 = vld [vmem:[%s1 + $0x10] sm:$0xff]
    %v260 = vld [vmem:[%s1 + $0x18] sm:$0xff]
    %v261 = vld [vmem:[%s1 + $0x20] sm:$0xff]
    %v262 = vld [vmem:[%s1 + $0x28] sm:$0xff]
    %v263 = vld [vmem:[%s1 + $0x30] sm:$0xff]
    %v264 = vld [vmem:[%s1 + $0x38] sm:$0xff]
    %v265 = vld [vmem:[%s1 + $0x40] sm:$0xff]
    %v266 = vld [vmem:[%s1 + $0x48] sm:$0xff]
    %v267 = vld [vmem:[%s1 + $0x50] sm:$0xff]
    %v268 = vld [vmem:[%s1 + $0x58] sm:$0xff]
    %v269 = vld [vmem:[%s1 + $0x60] sm:$0xff]
    %v270 = vld [vmem:[%s1 + $0x68] sm:$0xff]
    %v271 = vld [vmem:[%s1 + $0x70] sm:$0xff]
    %v272 = vld [vmem:[%s1 + $0x78] sm:$0xff]
    %v273 = vpack.c.bf16 %v258, %v257
    %v274 = vpack.c.bf16 %v260, %v259
    %v275 = vpack.c.bf16 %v262, %v261
    %v276 = vpack.c.bf16 %v264, %v263
    %v277 = vpack.c.bf16 %v266, %v265
    %v278 = vpack.c.bf16 %v268, %v267
    %v279 = vpack.c.bf16 %v270, %v269
    %v280 = vpack.c.bf16 %v272, %v271
    %v281 = vpack.c.bf16 %v256, %v255
    %v282 = vld [vmem:[#allocation5] sm:$0xff]
    %v283 = vld [vmem:[#allocation5 + $0x8] sm:$0xff]
    %v284 = vld [vmem:[#allocation5 + $0x10] sm:$0xff]
    %v285 = vld [vmem:[#allocation5 + $0x18] sm:$0xff]
    %v286 = vld [vmem:[#allocation5 + $0x20] sm:$0xff]
    %v287 = vld [vmem:[#allocation5 + $0x28] sm:$0xff]
    %v288 = vld [vmem:[#allocation5 + $0x30] sm:$0xff]
    %v289 = vld [vmem:[#allocation5 + $0x38] sm:$0xff]
    %v290 = vld [vmem:[#allocation5 + $0x40] sm:$0xff]
    %v291 = vld [vmem:[#allocation5 + $0x48] sm:$0xff]
    %v292 = vld [vmem:[#allocation5 + $0x50] sm:$0xff]
    %v293 = vld [vmem:[#allocation5 + $0x58] sm:$0xff]
    %v294 = vld [vmem:[#allocation5 + $0x60] sm:$0xff]
    %v295 = vld [vmem:[#allocation5 + $0x68] sm:$0xff]
    %v296 = vld [vmem:[#allocation5 + $0x70] sm:$0xff]
    %v297 = vld [vmem:[#allocation5 + $0x78] sm:$0xff]
    %v298 = vld [vmem:[#allocation5 + $0x80] sm:$0xff]
    %v299 = vld [vmem:[#allocation5 + $0x88] sm:$0xff]
    %v300 = vld [vmem:[#allocation5 + $0x90] sm:$0xff]
    %v301 = vld [vmem:[#allocation5 + $0x98] sm:$0xff]
    %v302 = vld [vmem:[#allocation5 + $0xa0] sm:$0xff]
    %v303 = vld [vmem:[#allocation5 + $0xa8] sm:$0xff]
    %v304 = vld [vmem:[#allocation5 + $0xb0] sm:$0xff]
    %v305 = vld [vmem:[#allocation5 + $0xb8] sm:$0xff]
    %v306 = vld [vmem:[#allocation5 + $0xc0] sm:$0xff]
    %v307 = vld [vmem:[#allocation5 + $0xc8] sm:$0xff]
    %v308 = vld [vmem:[#allocation5 + $0xd0] sm:$0xff]
    %v309 = vld [vmem:[#allocation5 + $0xd8] sm:$0xff]
    %v310 = vld [vmem:[#allocation5 + $0xe0] sm:$0xff]
    %v311 = vld [vmem:[#allocation5 + $0xe8] sm:$0xff]
    %v312 = vld [vmem:[#allocation5 + $0xf0] sm:$0xff]
    %v313 = vld [vmem:[#allocation5 + $0xf8] sm:$0xff]
    %v314 = vld [vmem:[%s7] sm:$0xf]
    %v316 = vlaneseq
    %v317 = vshrl.u32 %v316, 7
    %v318 = vsub.s32 0, %v317
    %v319 = vrot.slane %v314, %v318
    %v320 = vlaneseq
    %v321 = vshrl.u32 %v320, 7
    %v322 = vsub.s32 1, %v321
    %v323 = vrot.slane %v314, %v322
    %v324 = vlaneseq
    %v325 = vshrl.u32 %v324, 7
    %v326 = vsub.s32 2, %v325
    %v327 = vrot.slane %v314, %v326
    %v328 = vlaneseq
    %v329 = vshrl.u32 %v328, 7
    %v330 = vsub.s32 3, %v329
    %v331 = vrot.slane %v314, %v330
    %v368 = vunpack.c.l.b16 %v282
    %v369 = vunpack.c.h.b16 %v282
    %v370 = vunpack.c.l.b16 %v283
    %v371 = vunpack.c.h.b16 %v283
    %v372 = vunpack.c.l.b16 %v284
    %v373 = vunpack.c.h.b16 %v284
    %v374 = vunpack.c.l.b16 %v285
    %v375 = vunpack.c.h.b16 %v285
    %v376 = vunpack.c.l.b16 %v286
    %v377 = vunpack.c.h.b16 %v286
    %v378 = vunpack.c.l.b16 %v287
    %v379 = vunpack.c.h.b16 %v287
    %v380 = vunpack.c.l.b16 %v288
    %v381 = vunpack.c.h.b16 %v288
    %v382 = vunpack.c.l.b16 %v289
    %v383 = vunpack.c.h.b16 %v289
    %v384 = vunpack.c.l.b16 %v290
    %v385 = vunpack.c.h.b16 %v290
    %v386 = vunpack.c.l.b16 %v291
    %v387 = vunpack.c.h.b16 %v291
    %v388 = vunpack.c.l.b16 %v292
    %v389 = vunpack.c.h.b16 %v292
    %v390 = vunpack.c.l.b16 %v293
    %v391 = vunpack.c.h.b16 %v293
    %v392 = vunpack.c.l.b16 %v294
    %v393 = vunpack.c.h.b16 %v294
    %v394 = vunpack.c.l.b16 %v295
    %v395 = vunpack.c.h.b16 %v295
    %v396 = vunpack.c.l.b16 %v296
    %v397 = vunpack.c.h.b16 %v296
    %v398 = vunpack.c.l.b16 %v297
    %v399 = vunpack.c.h.b16 %v297
    %v400 = vunpack.c.l.b16 %v298
    %v401 = vunpack.c.h.b16 %v298
    %v402 = vunpack.c.l.b16 %v299
    %v403 = vunpack.c.h.b16 %v299
    %v404 = vunpack.c.l.b16 %v300
    %v405 = vunpack.c.h.b16 %v300
    %v406 = vunpack.c.l.b16 %v301
    %v407 = vunpack.c.h.b16 %v301
    %v408 = vunpack.c.l.b16 %v302
    %v409 = vunpack.c.h.b16 %v302
    %v410 = vunpack.c.l.b16 %v303
    %v411 = vunpack.c.h.b16 %v303
    %v412 = vunpack.c.l.b16 %v304
    %v413 = vunpack.c.h.b16 %v304
    %v414 = vunpack.c.l.b16 %v305
    %v415 = vunpack.c.h.b16 %v305
    %v416 = vunpack.c.l.b16 %v306
    %v417 = vunpack.c.h.b16 %v306
    %v418 = vunpack.c.l.b16 %v307
    %v419 = vunpack.c.h.b16 %v307
    %v420 = vunpack.c.l.b16 %v308
    %v421 = vunpack.c.h.b16 %v308
    %v422 = vunpack.c.l.b16 %v309
    %v423 = vunpack.c.h.b16 %v309
    %v424 = vunpack.c.l.b16 %v310
    %v425 = vunpack.c.h.b16 %v310
    %v426 = vunpack.c.l.b16 %v311
    %v427 = vunpack.c.h.b16 %v311
    %v428 = vunpack.c.l.b16 %v312
    %v429 = vunpack.c.h.b16 %v312
    %v430 = vunpack.c.l.b16 %v313
    %v431 = vunpack.c.h.b16 %v313
    %v432 = vpack.c.b16 %v372, %v368
    %v433 = vpack.c.b16 %v373, %v369
    %v434 = vpack.c.b16 %v374, %v370
    %v435 = vpack.c.b16 %v375, %v371
    %v436 = vpack.c.b16 %v380, %v376
    %v437 = vpack.c.b16 %v381, %v377
    %v438 = vpack.c.b16 %v382, %v378
    %v439 = vpack.c.b16 %v383, %v379
    %v440 = vpack.c.b16 %v388, %v384
    %v441 = vpack.c.b16 %v389, %v385
    %v442 = vpack.c.b16 %v390, %v386
    %v443 = vpack.c.b16 %v391, %v387
    %v444 = vpack.c.b16 %v396, %v392
    %v445 = vpack.c.b16 %v397, %v393
    %v446 = vpack.c.b16 %v398, %v394
    %v447 = vpack.c.b16 %v399, %v395
    %v448 = vpack.c.b16 %v404, %v400
    %v449 = vpack.c.b16 %v405, %v401
    %v450 = vpack.c.b16 %v406, %v402
    %v451 = vpack.c.b16 %v407, %v403
    %v452 = vpack.c.b16 %v412, %v408
    %v453 = vpack.c.b16 %v413, %v409
    %v454 = vpack.c.b16 %v414, %v410
    %v455 = vpack.c.b16 %v415, %v411
    %v456 = vpack.c.b16 %v420, %v416
    %v457 = vpack.c.b16 %v421, %v417
    %v458 = vpack.c.b16 %v422, %v418
    %v459 = vpack.c.b16 %v423, %v419
    %v460 = vpack.c.b16 %v428, %v424
    %v461 = vpack.c.b16 %v429, %v425
    %v462 = vpack.c.b16 %v430, %v426
    %v463 = vpack.c.b16 %v431, %v427
    %496 = vmatprep.subr.bf16.mxu0 %v433
    %497 = vmatpush1.bf16.msra.mxu0 %v432
    %498 = vmatprep.subr.bf16.mxu0 %v437
    %499 = vmatpush1.bf16.msra.mxu0 %v436
    %500 = vmatprep.subr.bf16.mxu0 %v441
    %501 = vmatpush1.bf16.msra.mxu0 %v440
    %502 = vmatprep.subr.bf16.mxu0 %v445
    %503 = vmatpush1.bf16.msra.mxu0 %v444
    %504 = vmatprep.subr.bf16.mxu0 %v449
    %505 = vmatpush1.bf16.msra.mxu0 %v448
    %506 = vmatprep.subr.bf16.mxu0 %v453
    %507 = vmatpush1.bf16.msra.mxu0 %v452
    %508 = vmatprep.subr.bf16.mxu0 %v457
    %509 = vmatpush1.bf16.msra.mxu0 %v456
    %510 = vmatprep.subr.bf16.mxu0 %v461
    %511 = vmatpush1.bf16.msra.mxu0 %v460
    %512 = vmatprep.subr.bf16.mxu0 0
    %513 = vmatpush1.bf16.msra.mxu0 0
    %514 = vmatprep.subr.bf16.mxu0 0
    %515 = vmatpush1.bf16.msra.mxu0 0
    %516 = vmatprep.subr.bf16.mxu0 0
    %517 = vmatpush1.bf16.msra.mxu0 0
    %518 = vmatprep.subr.bf16.mxu0 0
    %519 = vmatpush1.bf16.msra.mxu0 0
    %520 = vmatprep.subr.bf16.mxu0 0
    %521 = vmatpush1.bf16.msra.mxu0 0
    %522 = vmatprep.subr.bf16.mxu0 0
    %523 = vmatpush1.bf16.msra.mxu0 0
    %524 = vmatprep.subr.bf16.mxu0 0
    %525 = vmatpush1.bf16.msra.mxu0 0
    %526 = vmatprep.subr.bf16.mxu0 0
    %527 = vmatpush1.bf16.msra.mxu0 0
    %528 = vmatprep.mubr.bf16.mxu0 0
    %529 = vmatmul.mubr.bf16.gmra.mrb[0].mxu0 %v281
    %v530 = vpop.f32.mrb[0].mxu0
    %v531 = vadd.f32 %v319, %v530
    %v532 = vpop.f32.mrb[0].mxu0
    %v533 = vadd.f32 %v323, %v532
    %v534 = vpop.f32.mrb[0].mxu0
    %v535 = vadd.f32 %v319, %v534
    %v536 = vpop.f32.mrb[0].mxu0
    %v537 = vadd.f32 %v323, %v536
    %538 = vdwg.mxu0
    %539 = vmatprep.subr.bf16.mxu0 %v435
    %540 = vmatpush1.bf16.msra.mxu0 %v434
    %541 = vmatprep.subr.bf16.mxu0 %v439
    %542 = vmatpush1.bf16.msra.mxu0 %v438
    %543 = vmatprep.subr.bf16.mxu0 %v443
    %544 = vmatpush1.bf16.msra.mxu0 %v442
    %545 = vmatprep.subr.bf16.mxu0 %v447
    %546 = vmatpush1.bf16.msra.mxu0 %v446
    %547 = vmatprep.subr.bf16.mxu0 %v451
    %548 = vmatpush1.bf16.msra.mxu0 %v450
    %549 = vmatprep.subr.bf16.mxu0 %v455
    %550 = vmatpush1.bf16.msra.mxu0 %v454
    %551 = vmatprep.subr.bf16.mxu0 %v459
    %552 = vmatpush1.bf16.msra.mxu0 %v458
    %553 = vmatprep.subr.bf16.mxu0 %v463
    %554 = vmatpush1.bf16.msra.mxu0 %v462
    %555 = vmatprep.subr.bf16.mxu0 0
    %556 = vmatpush1.bf16.msra.mxu0 0
    %557 = vmatprep.subr.bf16.mxu0 0
    %558 = vmatpush1.bf16.msra.mxu0 0
    %559 = vmatprep.subr.bf16.mxu0 0
    %560 = vmatpush1.bf16.msra.mxu0 0
    %561 = vmatprep.subr.bf16.mxu0 0
    %562 = vmatpush1.bf16.msra.mxu0 0
    %563 = vmatprep.subr.bf16.mxu0 0
    %564 = vmatpush1.bf16.msra.mxu0 0
    %565 = vmatprep.subr.bf16.mxu0 0
    %566 = vmatpush1.bf16.msra.mxu0 0
    %567 = vmatprep.subr.bf16.mxu0 0
    %568 = vmatpush1.bf16.msra.mxu0 0
    %569 = vmatprep.subr.bf16.mxu0 0
    %570 = vmatpush1.bf16.msra.mxu0 0
    %571 = vmatprep.mubr.bf16.mxu0 0
    %572 = vmatmul.mubr.bf16.gmra.mrb[0].mxu0 %v281
    %v573 = vpop.f32.mrb[0].mxu0
    %v574 = vadd.f32 %v327, %v573
    %v575 = vpop.f32.mrb[0].mxu0
    %v576 = vadd.f32 %v331, %v575
    %v577 = vpop.f32.mrb[0].mxu0
    %v578 = vadd.f32 %v327, %v577
    %v579 = vpop.f32.mrb[0].mxu0
    %v580 = vadd.f32 %v331, %v579
    %581 = vdwg.mxu0
    %v582 = vpack.c.bf16 %v537, %v533
    %v583 = vpack.c.bf16 %v578, %v574
    %v584 = vld [vmem:[#allocation7] sm:$0xf]
    %v585 = vld [vmem:[#allocation7 + $0x4] sm:$0xf]
    %v586 = vld [vmem:[#allocation7 + $0x8] sm:$0xf]
    %v587 = vld [vmem:[#allocation7 + $0xc] sm:$0xf]
    %v588 = vld [vmem:[#allocation7 + $0x10] sm:$0xf]
    %v589 = vld [vmem:[#allocation7 + $0x14] sm:$0xf]
    %v590 = vld [vmem:[#allocation7 + $0x18] sm:$0xf]
    %v591 = vld [vmem:[#allocation7 + $0x1c] sm:$0xf]
    %v592 = vld [vmem:[#allocation7 + $0x20] sm:$0xf]
    %v593 = vld [vmem:[#allocation7 + $0x24] sm:$0xf]
    %v594 = vld [vmem:[#allocation7 + $0x28] sm:$0xf]
    %v595 = vld [vmem:[#allocation7 + $0x2c] sm:$0xf]
    %v596 = vld [vmem:[#allocation7 + $0x30] sm:$0xf]
    %v597 = vld [vmem:[#allocation7 + $0x34] sm:$0xf]
    %v598 = vld [vmem:[#allocation7 + $0x38] sm:$0xf]
    %v599 = vld [vmem:[#allocation7 + $0x3c] sm:$0xf]
    %v616 = vunpack.c.l.b16 %v584
    %v617 = vunpack.c.l.b16 %v585
    %v618 = vunpack.c.l.b16 %v586
    %v619 = vunpack.c.l.b16 %v587
    %v620 = vunpack.c.l.b16 %v588
    %v621 = vunpack.c.l.b16 %v589
    %v622 = vunpack.c.l.b16 %v590
    %v623 = vunpack.c.l.b16 %v591
    %v624 = vunpack.c.l.b16 %v592
    %v625 = vunpack.c.l.b16 %v593
    %v626 = vunpack.c.l.b16 %v594
    %v627 = vunpack.c.l.b16 %v595
    %v628 = vunpack.c.l.b16 %v596
    %v629 = vunpack.c.l.b16 %v597
    %v630 = vunpack.c.l.b16 %v598
    %v631 = vunpack.c.l.b16 %v599
    %v632 = vpack.c.b16 %v617, %v616
    %v633 = vpack.c.b16 %v619, %v618
    %v634 = vpack.c.b16 %v621, %v620
    %v635 = vpack.c.b16 %v623, %v622
    %v636 = vpack.c.b16 %v625, %v624
    %v637 = vpack.c.b16 %v627, %v626
    %v638 = vpack.c.b16 %v629, %v628
    %v639 = vpack.c.b16 %v631, %v630
    %648 = vmatprep.subr.bf16.mxu0 0
    %649 = vmatpush1.bf16.msra.mxu0 %v632
    %650 = vmatprep.subr.bf16.mxu0 0
    %651 = vmatpush1.bf16.msra.mxu0 %v633
    %652 = vmatprep.subr.bf16.mxu0 0
    %653 = vmatpush1.bf16.msra.mxu0 %v634
    %654 = vmatprep.subr.bf16.mxu0 0
    %655 = vmatpush1.bf16.msra.mxu0 %v635
    %656 = vmatprep.subr.bf16.mxu0 0
    %657 = vmatpush1.bf16.msra.mxu0 %v636
    %658 = vmatprep.subr.bf16.mxu0 0
    %659 = vmatpush1.bf16.msra.mxu0 %v637
    %660 = vmatprep.subr.bf16.mxu0 0
    %661 = vmatpush1.bf16.msra.mxu0 %v638
    %662 = vmatprep.subr.bf16.mxu0 0
    %663 = vmatpush1.bf16.msra.mxu0 %v639
    %664 = vmatprep.subr.bf16.mxu0 0
    %665 = vmatpush1.bf16.msra.mxu0 0
    %666 = vmatprep.subr.bf16.mxu0 0
    %667 = vmatpush1.bf16.msra.mxu0 0
    %668 = vmatprep.subr.bf16.mxu0 0
    %669 = vmatpush1.bf16.msra.mxu0 0
    %670 = vmatprep.subr.bf16.mxu0 0
    %671 = vmatpush1.bf16.msra.mxu0 0
    %672 = vmatprep.subr.bf16.mxu0 0
    %673 = vmatpush1.bf16.msra.mxu0 0
    %674 = vmatprep.subr.bf16.mxu0 0
    %675 = vmatpush1.bf16.msra.mxu0 0
    %676 = vmatprep.subr.bf16.mxu0 0
    %677 = vmatpush1.bf16.msra.mxu0 0
    %678 = vmatprep.subr.bf16.mxu0 0
    %679 = vmatpush1.bf16.msra.mxu0 0
    %680 = vmatprep.mubr.bf16.mxu0 0
    %681 = vmatmul.mubr.bf16.gmra.mrb[0].mxu0 %v273
    %v682 = vpop.f32.mrb[0].mxu0
    %v683 = vadd.f32 0.0, %v682
    %v684 = vpop.f32.mrb[0].mxu0
    %v685 = vpop.f32.mrb[0].mxu0
    %v686 = vadd.f32 0.0, %v685
    %v687 = vpop.f32.mrb[0].mxu0
    %688 = vmatprep.mubr.bf16.mxu0 0
    %689 = vmatmul.mubr.bf16.gmra.mrb[0].mxu0 %v274
    %v690 = vpop.f32.mrb[0].mxu0
    %v691 = vadd.f32 0.0, %v690
    %v692 = vpop.f32.mrb[0].mxu0
    %v693 = vpop.f32.mrb[0].mxu0
    %v694 = vadd.f32 0.0, %v693
    %v695 = vpop.f32.mrb[0].mxu0
    %696 = vmatprep.mubr.bf16.mxu0 0
    %697 = vmatmul.mubr.bf16.gmra.mrb[0].mxu0 %v275
    %v698 = vpop.f32.mrb[0].mxu0
    %v699 = vadd.f32 0.0, %v698
    %v700 = vpop.f32.mrb[0].mxu0
    %v701 = vpop.f32.mrb[0].mxu0
    %v702 = vadd.f32 0.0, %v701
    %v703 = vpop.f32.mrb[0].mxu0
    %704 = vmatprep.mubr.bf16.mxu0 0
    %705 = vmatmul.mubr.bf16.gmra.mrb[0].mxu0 %v276
    %v706 = vpop.f32.mrb[0].mxu0
    %v707 = vadd.f32 0.0, %v706
    %v708 = vpop.f32.mrb[0].mxu0
    %v709 = vpop.f32.mrb[0].mxu0
    %v710 = vadd.f32 0.0, %v709
    %v711 = vpop.f32.mrb[0].mxu0
    %712 = vmatprep.mubr.bf16.mxu0 0
    %713 = vmatmul.mubr.bf16.gmra.mrb[0].mxu0 %v277
    %v714 = vpop.f32.mrb[0].mxu0
    %v715 = vadd.f32 0.0, %v714
    %v716 = vpop.f32.mrb[0].mxu0
    %v717 = vpop.f32.mrb[0].mxu0
    %v718 = vadd.f32 0.0, %v717
    %v719 = vpop.f32.mrb[0].mxu0
    %720 = vmatprep.mubr.bf16.mxu0 0
    %721 = vmatmul.mubr.bf16.gmra.mrb[0].mxu0 %v278
    %v722 = vpop.f32.mrb[0].mxu0
    %v723 = vadd.f32 0.0, %v722
    %v724 = vpop.f32.mrb[0].mxu0
    %v725 = vpop.f32.mrb[0].mxu0
    %v726 = vadd.f32 0.0, %v725
    %v727 = vpop.f32.mrb[0].mxu0
    %728 = vmatprep.mubr.bf16.mxu0 0
    %729 = vmatmul.mubr.bf16.gmra.mrb[0].mxu0 %v279
    %v730 = vpop.f32.mrb[0].mxu0
    %v731 = vadd.f32 0.0, %v730
    %v732 = vpop.f32.mrb[0].mxu0
    %v733 = vpop.f32.mrb[0].mxu0
    %v734 = vadd.f32 0.0, %v733
    %v735 = vpop.f32.mrb[0].mxu0
    %736 = vmatprep.mubr.bf16.mxu0 0
    %737 = vmatmul.mubr.bf16.gmra.mrb[0].mxu0 %v280
    %v738 = vpop.f32.mrb[0].mxu0
    %v739 = vadd.f32 0.0, %v738
    %v740 = vpop.f32.mrb[0].mxu0
    %v741 = vpop.f32.mrb[0].mxu0
    %v742 = vadd.f32 0.0, %v741
    %v743 = vpop.f32.mrb[0].mxu0
    %744 = vdwg.mxu0
    %vm745 = vcmask 130048
    %v747 = vsel %vm745, %v228, 0
    %v750 = vsel %vm745, %v229, 0
    %v753 = vsel %vm745, %v230, 0
    %v756 = vsel %vm745, %v231, 0
    %v759 = vsel %vm745, %v232, 0
    %v762 = vsel %vm745, %v233, 0
    %v765 = vsel %vm745, %v234, 0
    %v768 = vsel %vm745, %v235, 0
    %770 = vmatprep.subr.bf16.mxu0 %v583
    %771 = vmatpush1.bf16.msra.mxu0 %v582
    %772 = vmatprep.subr.bf16.mxu0 0
    %773 = vmatpush1.bf16.msra.mxu0 0
    %774 = vmatprep.subr.bf16.mxu0 0
    %775 = vmatpush1.bf16.msra.mxu0 0
    %776 = vmatprep.subr.bf16.mxu0 0
    %777 = vmatpush1.bf16.msra.mxu0 0
    %778 = vmatprep.subr.bf16.mxu0 0
    %779 = vmatpush1.bf16.msra.mxu0 0
    %780 = vmatprep.subr.bf16.mxu0 0
    %781 = vmatpush1.bf16.msra.mxu0 0
    %782 = vmatprep.subr.bf16.mxu0 0
    %783 = vmatpush1.bf16.msra.mxu0 0
    %784 = vmatprep.subr.bf16.mxu0 0
    %785 = vmatpush1.bf16.msra.mxu0 0
    %786 = vmatprep.subr.bf16.mxu0 0
    %787 = vmatpush1.bf16.msra.mxu0 0
    %788 = vmatprep.subr.bf16.mxu0 0
    %789 = vmatpush1.bf16.msra.mxu0 0
    %790 = vmatprep.subr.bf16.mxu0 0
    %791 = vmatpush1.bf16.msra.mxu0 0
    %792 = vmatprep.subr.bf16.mxu0 0
    %793 = vmatpush1.bf16.msra.mxu0 0
    %794 = vmatprep.subr.bf16.mxu0 0
    %795 = vmatpush1.bf16.msra.mxu0 0
    %796 = vmatprep.subr.bf16.mxu0 0
    %797 = vmatpush1.bf16.msra.mxu0 0
    %798 = vmatprep.subr.bf16.mxu0 0
    %799 = vmatpush1.bf16.msra.mxu0 0
    %800 = vmatprep.subr.bf16.mxu0 0
    %801 = vmatpush1.bf16.msra.mxu0 0
    %802 = vmatprep.mubr.bf16.mxu0 0
    %803 = vmatmul.mubr.bf16.gmra.mrb[0].mxu0 %v747
    %v804 = vpop.f32.mrb[0].mxu0
    %v805 = vadd.f32 0.0, %v804
    %v806 = vpop.f32.mrb[0].mxu0
    %v807 = vadd.f32 0.0, %v806
    %v808 = vpop.f32.mrb[0].mxu0
    %v809 = vadd.f32 0.0, %v808
    %v810 = vpop.f32.mrb[0].mxu0
    %v811 = vadd.f32 0.0, %v810
    %812 = vmatprep.mubr.bf16.mxu0 0
    %813 = vmatmul.mubr.bf16.gmra.mrb[0].mxu0 %v750
    %v814 = vpop.f32.mrb[0].mxu0
    %v815 = vadd.f32 0.0, %v814
    %v816 = vpop.f32.mrb[0].mxu0
    %v817 = vadd.f32 0.0, %v816
    %v818 = vpop.f32.mrb[0].mxu0
    %v819 = vadd.f32 0.0, %v818
    %v820 = vpop.f32.mrb[0].mxu0
    %v821 = vadd.f32 0.0, %v820
    %822 = vmatprep.mubr.bf16.mxu0 0
    %823 = vmatmul.mubr.bf16.gmra.mrb[0].mxu0 %v753
    %v824 = vpop.f32.mrb[0].mxu0
    %v825 = vadd.f32 0.0, %v824
    %v826 = vpop.f32.mrb[0].mxu0
    %v827 = vadd.f32 0.0, %v826
    %v828 = vpop.f32.mrb[0].mxu0
    %v829 = vadd.f32 0.0, %v828
    %v830 = vpop.f32.mrb[0].mxu0
    %v831 = vadd.f32 0.0, %v830
    %832 = vmatprep.mubr.bf16.mxu0 0
    %833 = vmatmul.mubr.bf16.gmra.mrb[0].mxu0 %v756
    %v834 = vpop.f32.mrb[0].mxu0
    %v835 = vadd.f32 0.0, %v834
    %v836 = vpop.f32.mrb[0].mxu0
    %v837 = vadd.f32 0.0, %v836
    %v838 = vpop.f32.mrb[0].mxu0
    %v839 = vadd.f32 0.0, %v838
    %v840 = vpop.f32.mrb[0].mxu0
    %v841 = vadd.f32 0.0, %v840
    %842 = vmatprep.mubr.bf16.mxu0 0
    %843 = vmatmul.mubr.bf16.gmra.mrb[0].mxu0 %v759
    %v844 = vpop.f32.mrb[0].mxu0
    %v845 = vadd.f32 0.0, %v844
    %v846 = vpop.f32.mrb[0].mxu0
    %v847 = vadd.f32 0.0, %v846
    %v848 = vpop.f32.mrb[0].mxu0
    %v849 = vadd.f32 0.0, %v848
    %v850 = vpop.f32.mrb[0].mxu0
    %v851 = vadd.f32 0.0, %v850
    %852 = vmatprep.mubr.bf16.mxu0 0
    %853 = vmatmul.mubr.bf16.gmra.mrb[0].mxu0 %v762
    %v854 = vpop.f32.mrb[0].mxu0
    %v855 = vadd.f32 0.0, %v854
    %v856 = vpop.f32.mrb[0].mxu0
    %v857 = vadd.f32 0.0, %v856
    %v858 = vpop.f32.mrb[0].mxu0
    %v859 = vadd.f32 0.0, %v858
    %v860 = vpop.f32.mrb[0].mxu0
    %v861 = vadd.f32 0.0, %v860
    %862 = vmatprep.mubr.bf16.mxu0 0
    %863 = vmatmul.mubr.bf16.gmra.mrb[0].mxu0 %v765
    %v864 = vpop.f32.mrb[0].mxu0
    %v865 = vadd.f32 0.0, %v864
    %v866 = vpop.f32.mrb[0].mxu0
    %v867 = vadd.f32 0.0, %v866
    %v868 = vpop.f32.mrb[0].mxu0
    %v869 = vadd.f32 0.0, %v868
    %v870 = vpop.f32.mrb[0].mxu0
    %v871 = vadd.f32 0.0, %v870
    %872 = vmatprep.mubr.bf16.mxu0 0
    %873 = vmatmul.mubr.bf16.gmra.mrb[0].mxu0 %v768
    %v874 = vpop.f32.mrb[0].mxu0
    %v875 = vadd.f32 0.0, %v874
    %v876 = vpop.f32.mrb[0].mxu0
    %v877 = vadd.f32 0.0, %v876
    %v878 = vpop.f32.mrb[0].mxu0
    %v879 = vadd.f32 0.0, %v878
    %v880 = vpop.f32.mrb[0].mxu0
    %v881 = vadd.f32 0.0, %v880
    %882 = vdwg.mxu0
    %v883 = vadd.f32 %v805, %v683
    %v884 = vadd.f32 %v809, %v686
    %v885 = vadd.f32 %v815, %v691
    %v886 = vadd.f32 %v819, %v694
    %v887 = vadd.f32 %v825, %v699
    %v888 = vadd.f32 %v829, %v702
    %v889 = vadd.f32 %v835, %v707
    %v890 = vadd.f32 %v839, %v710
    %v891 = vadd.f32 %v845, %v715
    %v892 = vadd.f32 %v849, %v718
    %v893 = vadd.f32 %v855, %v723
    %v894 = vadd.f32 %v859, %v726
    %v895 = vadd.f32 %v865, %v731
    %v896 = vadd.f32 %v869, %v734
    %v897 = vadd.f32 %v875, %v739
    %v898 = vadd.f32 %v879, %v742
    %v899 = vadd.f32 %v807, %v683
    %v900 = vadd.f32 %v811, %v686
    %v901 = vadd.f32 %v817, %v691
    %v902 = vadd.f32 %v821, %v694
    %v903 = vadd.f32 %v827, %v699
    %v904 = vadd.f32 %v831, %v702
    %v905 = vadd.f32 %v837, %v707
    %v906 = vadd.f32 %v841, %v710
    %v907 = vadd.f32 %v847, %v715
    %v908 = vadd.f32 %v851, %v718
    %v909 = vadd.f32 %v857, %v723
    %v910 = vadd.f32 %v861, %v726
    %v911 = vadd.f32 %v867, %v731
    %v912 = vadd.f32 %v871, %v734
    %v913 = vadd.f32 %v877, %v739
    %v914 = vadd.f32 %v881, %v742
    %v915 = vpack.c.bf16 %v900, %v899
    %v916 = vpack.c.bf16 %v902, %v901
    %v917 = vpack.c.bf16 %v904, %v903
    %v918 = vpack.c.bf16 %v906, %v905
    %v919 = vpack.c.bf16 %v908, %v907
    %v920 = vpack.c.bf16 %v910, %v909
    %v921 = vpack.c.bf16 %v912, %v911
    %v922 = vpack.c.bf16 %v914, %v913
    %v923 = vpack.c.bf16 %v535, %v531
    %v924 = vpack.c.bf16 %v884, %v883
    %v925 = vpack.c.bf16 %v886, %v885
    %v926 = vpack.c.bf16 %v888, %v887
    %v927 = vpack.c.bf16 %v890, %v889
    %v928 = vpack.c.bf16 %v892, %v891
    %v929 = vpack.c.bf16 %v894, %v893
    %v930 = vpack.c.bf16 %v896, %v895
    %v931 = vpack.c.bf16 %v898, %v897
    %932 = vmatprep.subr.bf16.mxu0 0
    %933 = vmatpush1.bf16.xpose.msra.mxu0 %v924
    %934 = vmatprep.subr.bf16.mxu0 0
    %935 = vmatpush1.bf16.xpose.msra.mxu0 %v925
    %936 = vmatprep.subr.bf16.mxu0 0
    %937 = vmatpush1.bf16.xpose.msra.mxu0 %v926
    %938 = vmatprep.subr.bf16.mxu0 0
    %939 = vmatpush1.bf16.xpose.msra.mxu0 %v927
    %940 = vmatprep.subr.bf16.mxu0 0
    %941 = vmatpush1.bf16.xpose.msra.mxu0 %v928
    %942 = vmatprep.subr.bf16.mxu0 0
    %943 = vmatpush1.bf16.xpose.msra.mxu0 %v929
    %944 = vmatprep.subr.bf16.mxu0 0
    %945 = vmatpush1.bf16.xpose.msra.mxu0 %v930
    %946 = vmatprep.subr.bf16.mxu0 0
    %947 = vmatpush1.bf16.xpose.msra.mxu0 %v931
    %948 = vmatprep.subr.bf16.mxu0 0
    %949 = vmatpush1.bf16.xpose.msra.mxu0 0
    %950 = vmatprep.subr.bf16.mxu0 0
    %951 = vmatpush1.bf16.xpose.msra.mxu0 0
    %952 = vmatprep.subr.bf16.mxu0 0
    %953 = vmatpush1.bf16.xpose.msra.mxu0 0
    %954 = vmatprep.subr.bf16.mxu0 0
    %955 = vmatpush1.bf16.xpose.msra.mxu0 0
    %956 = vmatprep.subr.bf16.mxu0 0
    %957 = vmatpush1.bf16.xpose.msra.mxu0 0
    %958 = vmatprep.subr.bf16.mxu0 0
    %959 = vmatpush1.bf16.xpose.msra.mxu0 0
    %960 = vmatprep.subr.bf16.mxu0 0
    %961 = vmatpush1.bf16.xpose.msra.mxu0 0
    %962 = vmatprep.subr.bf16.mxu0 0
    %963 = vmatpush1.bf16.xpose.msra.mxu0 0
    %964 = vmatprep.mubr.bf16.mxu0 0
    %965 = vmatmul.mubr.bf16.gmra.mrb[0].mxu0 %v923
    %v966 = vpop.f32.mrb[0].mxu0
    %v967 = vadd.f32 0.0, %v966
    %v968 = vpop.f32.mrb[0].mxu0
    %v969 = vpop.f32.mrb[0].mxu0
    %v970 = vadd.f32 0.0, %v969
    %v971 = vpop.f32.mrb[0].mxu0
    %972 = vdwg.mxu0
    %v973 = vsel %vm244, %v967, -1e+30
    %v974 = vsel %vm245, %v970, -1e+30
    %975 = vmax.xlane.f32.xlu0 %v973
    %v976 = vpop.xlane.xlu0 %975
    %977 = vmax.xlane.f32.xlu0 %v974
    %v978 = vpop.xlane.xlu0 %977
    %v979 = vsub.f32 %v967, %v976
    %v980 = vsub.f32 %v970, %v978
    %v981 = vmul.f32 %v979, 1.442695
    %v982 = vpow.pop %v981
    %v983 = vmul.f32 %v980, 1.442695
    %v984 = vpow.pop %v983
    %v985 = vsel %vm244, %v982, 0.0
    %v986 = vsel %vm245, %v984, 0.0
    %v987 = vpack.c.bf16 %v986, %v985
    %v988 = vunpack.c.l.bf16 %v987
    %v989 = vunpack.c.h.bf16 %v987
    %990 = vadd.xlane.f32.xlu0 %v988
    %v991 = vpop.xlane.xlu0 %990
    %992 = vadd.xlane.f32.xlu0 %v989
    %v993 = vpop.xlane.xlu0 %992
    %v994 = vadd.f32 %v991, 1e-16
    %v995 = vadd.f32 %v993, 1e-16
    %996 = vmatprep.subr.bf16.mxu0 0
    %997 = vmatpush1.bf16.msra.mxu0 %v915
    %998 = vmatprep.subr.bf16.mxu0 0
    %999 = vmatpush1.bf16.msra.mxu0 %v916
    %1000 = vmatprep.subr.bf16.mxu0 0
    %1001 = vmatpush1.bf16.msra.mxu0 %v917
    %1002 = vmatprep.subr.bf16.mxu0 0
    %1003 = vmatpush1.bf16.msra.mxu0 %v918
    %1004 = vmatprep.subr.bf16.mxu0 0
    %1005 = vmatpush1.bf16.msra.mxu0 %v919
    %1006 = vmatprep.subr.bf16.mxu0 0
    %1007 = vmatpush1.bf16.msra.mxu0 %v920
    %1008 = vmatprep.subr.bf16.mxu0 0
    %1009 = vmatpush1.bf16.msra.mxu0 %v921
    %1010 = vmatprep.subr.bf16.mxu0 0
    %1011 = vmatpush1.bf16.msra.mxu0 %v922
    %1012 = vmatprep.subr.bf16.mxu0 0
    %1013 = vmatpush1.bf16.msra.mxu0 0
    %1014 = vmatprep.subr.bf16.mxu0 0
    %1015 = vmatpush1.bf16.msra.mxu0 0
    %1016 = vmatprep.subr.bf16.mxu0 0
    %1017 = vmatpush1.bf16.msra.mxu0 0
    %1018 = vmatprep.subr.bf16.mxu0 0
    %1019 = vmatpush1.bf16.msra.mxu0 0
    %1020 = vmatprep.subr.bf16.mxu0 0
    %1021 = vmatpush1.bf16.msra.mxu0 0
    %1022 = vmatprep.subr.bf16.mxu0 0
    %1023 = vmatpush1.bf16.msra.mxu0 0
    %1024 = vmatprep.subr.bf16.mxu0 0
    %1025 = vmatpush1.bf16.msra.mxu0 0
    %1026 = vmatprep.subr.bf16.mxu0 0
    %1027 = vmatpush1.bf16.msra.mxu0 0
    %1028 = vmatprep.mubr.bf16.mxu0 0
    %1029 = vmatmul.mubr.bf16.gmra.mrb[0].mxu0 %v987
    %v1030 = vpop.f32.mrb[0].mxu0
    %v1031 = vadd.f32 0.0, %v1030
    %v1032 = vpop.f32.mrb[0].mxu0
    %v1033 = vpop.f32.mrb[0].mxu0
    %v1034 = vadd.f32 0.0, %v1033
    %v1035 = vpop.f32.mrb[0].mxu0
    %1036 = vdwg.mxu0
    %v1037 = vrcp.pop %v994
    %v1038 = vrcp.pop %v995
    %v1039 = vmul.f32 %v1031, %v1037
    %v1040 = vmul.f32 %v1034, %v1038
    %v1041 = vadd.f32 %v1039, %v576
    %v1042 = vadd.f32 %v1040, %v580
    %v1043 = vmax.f32 %v1041, 0.0
    %v1044 = vmax.f32 %v1042, 0.0
    %v1045 = vpack.c.bf16 %v1044, %v1043
    %s1046 = scalar_lea.vmem [#allocation5], 256
    %v1047 = vld [vmem:[%s1046] sm:$0xff]
    %v1048 = vld [vmem:[%s1046 + $0x8] sm:$0xff]
    %v1049 = vld [vmem:[%s1046 + $0x10] sm:$0xff]
    %v1050 = vld [vmem:[%s1046 + $0x18] sm:$0xff]
    %v1051 = vld [vmem:[%s1046 + $0x20] sm:$0xff]
    %v1052 = vld [vmem:[%s1046 + $0x28] sm:$0xff]
    %v1053 = vld [vmem:[%s1046 + $0x30] sm:$0xff]
    %v1054 = vld [vmem:[%s1046 + $0x38] sm:$0xff]
    %v1055 = vld [vmem:[%s1046 + $0x40] sm:$0xff]
    %v1056 = vld [vmem:[%s1046 + $0x48] sm:$0xff]
    %v1057 = vld [vmem:[%s1046 + $0x50] sm:$0xff]
    %v1058 = vld [vmem:[%s1046 + $0x58] sm:$0xff]
    %v1059 = vld [vmem:[%s1046 + $0x60] sm:$0xff]
    %v1060 = vld [vmem:[%s1046 + $0x68] sm:$0xff]
    %v1061 = vld [vmem:[%s1046 + $0x70] sm:$0xff]
    %v1062 = vld [vmem:[%s1046 + $0x78] sm:$0xff]
    %v1063 = vld [vmem:[%s1046 + $0x80] sm:$0xff]
    %v1064 = vld [vmem:[%s1046 + $0x88] sm:$0xff]
    %v1065 = vld [vmem:[%s1046 + $0x90] sm:$0xff]
    %v1066 = vld [vmem:[%s1046 + $0x98] sm:$0xff]
    %v1067 = vld [vmem:[%s1046 + $0xa0] sm:$0xff]
    %v1068 = vld [vmem:[%s1046 + $0xa8] sm:$0xff]
    %v1069 = vld [vmem:[%s1046 + $0xb0] sm:$0xff]
    %v1070 = vld [vmem:[%s1046 + $0xb8] sm:$0xff]
    %v1071 = vld [vmem:[%s1046 + $0xc0] sm:$0xff]
    %v1072 = vld [vmem:[%s1046 + $0xc8] sm:$0xff]
    %v1073 = vld [vmem:[%s1046 + $0xd0] sm:$0xff]
    %v1074 = vld [vmem:[%s1046 + $0xd8] sm:$0xff]
    %v1075 = vld [vmem:[%s1046 + $0xe0] sm:$0xff]
    %v1076 = vld [vmem:[%s1046 + $0xe8] sm:$0xff]
    %v1077 = vld [vmem:[%s1046 + $0xf0] sm:$0xff]
    %v1078 = vld [vmem:[%s1046 + $0xf8] sm:$0xff]
    %s1079 = scalar_lea.vmem %s7, 4
    %v1080 = vld [vmem:[%s1079] sm:$0xf]
    %v1082 = vlaneseq
    %v1083 = vshrl.u32 %v1082, 7
    %v1084 = vsub.s32 0, %v1083
    %v1085 = vrot.slane %v1080, %v1084
    %v1086 = vlaneseq
    %v1087 = vshrl.u32 %v1086, 7
    %v1088 = vsub.s32 1, %v1087
    %v1089 = vrot.slane %v1080, %v1088
    %v1090 = vlaneseq
    %v1091 = vshrl.u32 %v1090, 7
    %v1092 = vsub.s32 2, %v1091
    %v1093 = vrot.slane %v1080, %v1092
    %v1094 = vlaneseq
    %v1095 = vshrl.u32 %v1094, 7
    %v1096 = vsub.s32 3, %v1095
    %v1097 = vrot.slane %v1080, %v1096
    %v1134 = vunpack.c.l.b16 %v1047
    %v1135 = vunpack.c.h.b16 %v1047
    %v1136 = vunpack.c.l.b16 %v1048
    %v1137 = vunpack.c.h.b16 %v1048
    %v1138 = vunpack.c.l.b16 %v1049
    %v1139 = vunpack.c.h.b16 %v1049
    %v1140 = vunpack.c.l.b16 %v1050
    %v1141 = vunpack.c.h.b16 %v1050
    %v1142 = vunpack.c.l.b16 %v1051
    %v1143 = vunpack.c.h.b16 %v1051
    %v1144 = vunpack.c.l.b16 %v1052
    %v1145 = vunpack.c.h.b16 %v1052
    %v1146 = vunpack.c.l.b16 %v1053
    %v1147 = vunpack.c.h.b16 %v1053
    %v1148 = vunpack.c.l.b16 %v1054
    %v1149 = vunpack.c.h.b16 %v1054
    %v1150 = vunpack.c.l.b16 %v1055
    %v1151 = vunpack.c.h.b16 %v1055
    %v1152 = vunpack.c.l.b16 %v1056
    %v1153 = vunpack.c.h.b16 %v1056
    %v1154 = vunpack.c.l.b16 %v1057
    %v1155 = vunpack.c.h.b16 %v1057
    %v1156 = vunpack.c.l.b16 %v1058
    %v1157 = vunpack.c.h.b16 %v1058
    %v1158 = vunpack.c.l.b16 %v1059
    %v1159 = vunpack.c.h.b16 %v1059
    %v1160 = vunpack.c.l.b16 %v1060
    %v1161 = vunpack.c.h.b16 %v1060
    %v1162 = vunpack.c.l.b16 %v1061
    %v1163 = vunpack.c.h.b16 %v1061
    %v1164 = vunpack.c.l.b16 %v1062
    %v1165 = vunpack.c.h.b16 %v1062
    %v1166 = vunpack.c.l.b16 %v1063
    %v1167 = vunpack.c.h.b16 %v1063
    %v1168 = vunpack.c.l.b16 %v1064
    %v1169 = vunpack.c.h.b16 %v1064
    %v1170 = vunpack.c.l.b16 %v1065
    %v1171 = vunpack.c.h.b16 %v1065
    %v1172 = vunpack.c.l.b16 %v1066
    %v1173 = vunpack.c.h.b16 %v1066
    %v1174 = vunpack.c.l.b16 %v1067
    %v1175 = vunpack.c.h.b16 %v1067
    %v1176 = vunpack.c.l.b16 %v1068
    %v1177 = vunpack.c.h.b16 %v1068
    %v1178 = vunpack.c.l.b16 %v1069
    %v1179 = vunpack.c.h.b16 %v1069
    %v1180 = vunpack.c.l.b16 %v1070
    %v1181 = vunpack.c.h.b16 %v1070
    %v1182 = vunpack.c.l.b16 %v1071
    %v1183 = vunpack.c.h.b16 %v1071
    %v1184 = vunpack.c.l.b16 %v1072
    %v1185 = vunpack.c.h.b16 %v1072
    %v1186 = vunpack.c.l.b16 %v1073
    %v1187 = vunpack.c.h.b16 %v1073
    %v1188 = vunpack.c.l.b16 %v1074
    %v1189 = vunpack.c.h.b16 %v1074
    %v1190 = vunpack.c.l.b16 %v1075
    %v1191 = vunpack.c.h.b16 %v1075
    %v1192 = vunpack.c.l.b16 %v1076
    %v1193 = vunpack.c.h.b16 %v1076
    %v1194 = vunpack.c.l.b16 %v1077
    %v1195 = vunpack.c.h.b16 %v1077
    %v1196 = vunpack.c.l.b16 %v1078
    %v1197 = vunpack.c.h.b16 %v1078
    %v1198 = vpack.c.b16 %v1138, %v1134
    %v1199 = vpack.c.b16 %v1139, %v1135
    %v1200 = vpack.c.b16 %v1140, %v1136
    %v1201 = vpack.c.b16 %v1141, %v1137
    %v1202 = vpack.c.b16 %v1146, %v1142
    %v1203 = vpack.c.b16 %v1147, %v1143
    %v1204 = vpack.c.b16 %v1148, %v1144
    %v1205 = vpack.c.b16 %v1149, %v1145
    %v1206 = vpack.c.b16 %v1154, %v1150
    %v1207 = vpack.c.b16 %v1155, %v1151
    %v1208 = vpack.c.b16 %v1156, %v1152
    %v1209 = vpack.c.b16 %v1157, %v1153
    %v1210 = vpack.c.b16 %v1162, %v1158
    %v1211 = vpack.c.b16 %v1163, %v1159
    %v1212 = vpack.c.b16 %v1164, %v1160
    %v1213 = vpack.c.b16 %v1165, %v1161
    %v1214 = vpack.c.b16 %v1170, %v1166
    %v1215 = vpack.c.b16 %v1171, %v1167
    %v1216 = vpack.c.b16 %v1172, %v1168
    %v1217 = vpack.c.b16 %v1173, %v1169
    %v1218 = vpack.c.b16 %v1178, %v1174
    %v1219 = vpack.c.b16 %v1179, %v1175
    %v1220 = vpack.c.b16 %v1180, %v1176
    %v1221 = vpack.c.b16 %v1181, %v1177
    %v1222 = vpack.c.b16 %v1186, %v1182
    %v1223 = vpack.c.b16 %v1187, %v1183
    %v1224 = vpack.c.b16 %v1188, %v1184
    %v1225 = vpack.c.b16 %v1189, %v1185
    %v1226 = vpack.c.b16 %v1194, %v1190
    %v1227 = vpack.c.b16 %v1195, %v1191
    %v1228 = vpack.c.b16 %v1196, %v1192
    %v1229 = vpack.c.b16 %v1197, %v1193
    %1262 = vmatprep.subr.bf16.mxu0 %v1199
    %1263 = vmatpush1.bf16.msra.mxu0 %v1198
    %1264 = vmatprep.subr.bf16.mxu0 %v1203
    %1265 = vmatpush1.bf16.msra.mxu0 %v1202
    %1266 = vmatprep.subr.bf16.mxu0 %v1207
    %1267 = vmatpush1.bf16.msra.mxu0 %v1206
    %1268 = vmatprep.subr.bf16.mxu0 %v1211
    %1269 = vmatpush1.bf16.msra.mxu0 %v1210
    %1270 = vmatprep.subr.bf16.mxu0 %v1215
    %1271 = vmatpush1.bf16.msra.mxu0 %v1214
    %1272 = vmatprep.subr.bf16.mxu0 %v1219
    %1273 = vmatpush1.bf16.msra.mxu0 %v1218
    %1274 = vmatprep.subr.bf16.mxu0 %v1223
    %1275 = vmatpush1.bf16.msra.mxu0 %v1222
    %1276 = vmatprep.subr.bf16.mxu0 %v1227
    %1277 = vmatpush1.bf16.msra.mxu0 %v1226
    %1278 = vmatprep.subr.bf16.mxu0 0
    %1279 = vmatpush1.bf16.msra.mxu0 0
    %1280 = vmatprep.subr.bf16.mxu0 0
    %1281 = vmatpush1.bf16.msra.mxu0 0
    %1282 = vmatprep.subr.bf16.mxu0 0
    %1283 = vmatpush1.bf16.msra.mxu0 0
    %1284 = vmatprep.subr.bf16.mxu0 0
    %1285 = vmatpush1.bf16.msra.mxu0 0
    %1286 = vmatprep.subr.bf16.mxu0 0
    %1287 = vmatpush1.bf16.msra.mxu0 0
    %1288 = vmatprep.subr.bf16.mxu0 0
    %1289 = vmatpush1.bf16.msra.mxu0 0
    %1290 = vmatprep.subr.bf16.mxu0 0
    %1291 = vmatpush1.bf16.msra.mxu0 0
    %1292 = vmatprep.subr.bf16.mxu0 0
    %1293 = vmatpush1.bf16.msra.mxu0 0
    %1294 = vmatprep.mubr.bf16.mxu0 0
    %1295 = vmatmul.mubr.bf16.gmra.mrb[0].mxu0 %v1045
    %v1296 = vpop.f32.mrb[0].mxu0
    %v1297 = vadd.f32 %v1085, %v1296
    %v1298 = vpop.f32.mrb[0].mxu0
    %v1299 = vadd.f32 %v1089, %v1298
    %v1300 = vpop.f32.mrb[0].mxu0
    %v1301 = vadd.f32 %v1085, %v1300
    %v1302 = vpop.f32.mrb[0].mxu0
    %v1303 = vadd.f32 %v1089, %v1302
    %1304 = vdwg.mxu0
    %1305 = vmatprep.subr.bf16.mxu0 %v1201
    %1306 = vmatpush1.bf16.msra.mxu0 %v1200
    %1307 = vmatprep.subr.bf16.mxu0 %v1205
    %1308 = vmatpush1.bf16.msra.mxu0 %v1204
    %1309 = vmatprep.subr.bf16.mxu0 %v1209
    %1310 = vmatpush1.bf16.msra.mxu0 %v1208
    %1311 = vmatprep.subr.bf16.mxu0 %v1213
    %1312 = vmatpush1.bf16.msra.mxu0 %v1212
    %1313 = vmatprep.subr.bf16.mxu0 %v1217
    %1314 = vmatpush1.bf16.msra.mxu0 %v1216
    %1315 = vmatprep.subr.bf16.mxu0 %v1221
    %1316 = vmatpush1.bf16.msra.mxu0 %v1220
    %1317 = vmatprep.subr.bf16.mxu0 %v1225
    %1318 = vmatpush1.bf16.msra.mxu0 %v1224
    %1319 = vmatprep.subr.bf16.mxu0 %v1229
    %1320 = vmatpush1.bf16.msra.mxu0 %v1228
    %1321 = vmatprep.subr.bf16.mxu0 0
    %1322 = vmatpush1.bf16.msra.mxu0 0
    %1323 = vmatprep.subr.bf16.mxu0 0
    %1324 = vmatpush1.bf16.msra.mxu0 0
    %1325 = vmatprep.subr.bf16.mxu0 0
    %1326 = vmatpush1.bf16.msra.mxu0 0
    %1327 = vmatprep.subr.bf16.mxu0 0
    %1328 = vmatpush1.bf16.msra.mxu0 0
    %1329 = vmatprep.subr.bf16.mxu0 0
    %1330 = vmatpush1.bf16.msra.mxu0 0
    %1331 = vmatprep.subr.bf16.mxu0 0
    %1332 = vmatpush1.bf16.msra.mxu0 0
    %1333 = vmatprep.subr.bf16.mxu0 0
    %1334 = vmatpush1.bf16.msra.mxu0 0
    %1335 = vmatprep.subr.bf16.mxu0 0
    %1336 = vmatpush1.bf16.msra.mxu0 0
    %1337 = vmatprep.mubr.bf16.mxu0 0
    %1338 = vmatmul.mubr.bf16.gmra.mrb[0].mxu0 %v1045
    %v1339 = vpop.f32.mrb[0].mxu0
    %v1340 = vadd.f32 %v1093, %v1339
    %v1341 = vpop.f32.mrb[0].mxu0
    %v1342 = vadd.f32 %v1097, %v1341
    %v1343 = vpop.f32.mrb[0].mxu0
    %v1344 = vadd.f32 %v1093, %v1343
    %v1345 = vpop.f32.mrb[0].mxu0
    %v1346 = vadd.f32 %v1097, %v1345
    %1347 = vdwg.mxu0
    %v1348 = vpack.c.bf16 %v1303, %v1299
    %v1349 = vpack.c.bf16 %v1344, %v1340
    %s1350 = scalar_lea.vmem [#allocation7], 64
    %v1351 = vld [vmem:[%s1350] sm:$0xf]
    %v1352 = vld [vmem:[%s1350 + $0x4] sm:$0xf]
    %v1353 = vld [vmem:[%s1350 + $0x8] sm:$0xf]
    %v1354 = vld [vmem:[%s1350 + $0xc] sm:$0xf]
    %v1355 = vld [vmem:[%s1350 + $0x10] sm:$0xf]
    %v1356 = vld [vmem:[%s1350 + $0x14] sm:$0xf]
    %v1357 = vld [vmem:[%s1350 + $0x18] sm:$0xf]
    %v1358 = vld [vmem:[%s1350 + $0x1c] sm:$0xf]
    %v1359 = vld [vmem:[%s1350 + $0x20] sm:$0xf]
    %v1360 = vld [vmem:[%s1350 + $0x24] sm:$0xf]
    %v1361 = vld [vmem:[%s1350 + $0x28] sm:$0xf]
    %v1362 = vld [vmem:[%s1350 + $0x2c] sm:$0xf]
    %v1363 = vld [vmem:[%s1350 + $0x30] sm:$0xf]
    %v1364 = vld [vmem:[%s1350 + $0x34] sm:$0xf]
    %v1365 = vld [vmem:[%s1350 + $0x38] sm:$0xf]
    %v1366 = vld [vmem:[%s1350 + $0x3c] sm:$0xf]
    %v1383 = vunpack.c.l.b16 %v1351
    %v1384 = vunpack.c.l.b16 %v1352
    %v1385 = vunpack.c.l.b16 %v1353
    %v1386 = vunpack.c.l.b16 %v1354
    %v1387 = vunpack.c.l.b16 %v1355
    %v1388 = vunpack.c.l.b16 %v1356
    %v1389 = vunpack.c.l.b16 %v1357
    %v1390 = vunpack.c.l.b16 %v1358
    %v1391 = vunpack.c.l.b16 %v1359
    %v1392 = vunpack.c.l.b16 %v1360
    %v1393 = vunpack.c.l.b16 %v1361
    %v1394 = vunpack.c.l.b16 %v1362
    %v1395 = vunpack.c.l.b16 %v1363
    %v1396 = vunpack.c.l.b16 %v1364
    %v1397 = vunpack.c.l.b16 %v1365
    %v1398 = vunpack.c.l.b16 %v1366
    %v1399 = vpack.c.b16 %v1384, %v1383
    %v1400 = vpack.c.b16 %v1386, %v1385
    %v1401 = vpack.c.b16 %v1388, %v1387
    %v1402 = vpack.c.b16 %v1390, %v1389
    %v1403 = vpack.c.b16 %v1392, %v1391
    %v1404 = vpack.c.b16 %v1394, %v1393
    %v1405 = vpack.c.b16 %v1396, %v1395
    %v1406 = vpack.c.b16 %v1398, %v1397
    %1415 = vmatprep.subr.bf16.mxu0 0
    %1416 = vmatpush1.bf16.msra.mxu0 %v1399
    %1417 = vmatprep.subr.bf16.mxu0 0
    %1418 = vmatpush1.bf16.msra.mxu0 %v1400
    %1419 = vmatprep.subr.bf16.mxu0 0
    %1420 = vmatpush1.bf16.msra.mxu0 %v1401
    %1421 = vmatprep.subr.bf16.mxu0 0
    %1422 = vmatpush1.bf16.msra.mxu0 %v1402
    %1423 = vmatprep.subr.bf16.mxu0 0
    %1424 = vmatpush1.bf16.msra.mxu0 %v1403
    %1425 = vmatprep.subr.bf16.mxu0 0
    %1426 = vmatpush1.bf16.msra.mxu0 %v1404
    %1427 = vmatprep.subr.bf16.mxu0 0
    %1428 = vmatpush1.bf16.msra.mxu0 %v1405
    %1429 = vmatprep.subr.bf16.mxu0 0
    %1430 = vmatpush1.bf16.msra.mxu0 %v1406
    %1431 = vmatprep.subr.bf16.mxu0 0
    %1432 = vmatpush1.bf16.msra.mxu0 0
    %1433 = vmatprep.subr.bf16.mxu0 0
    %1434 = vmatpush1.bf16.msra.mxu0 0
    %1435 = vmatprep.subr.bf16.mxu0 0
    %1436 = vmatpush1.bf16.msra.mxu0 0
    %1437 = vmatprep.subr.bf16.mxu0 0
    %1438 = vmatpush1.bf16.msra.mxu0 0
    %1439 = vmatprep.subr.bf16.mxu0 0
    %1440 = vmatpush1.bf16.msra.mxu0 0
    %1441 = vmatprep.subr.bf16.mxu0 0
    %1442 = vmatpush1.bf16.msra.mxu0 0
    %1443 = vmatprep.subr.bf16.mxu0 0
    %1444 = vmatpush1.bf16.msra.mxu0 0
    %1445 = vmatprep.subr.bf16.mxu0 0
    %1446 = vmatpush1.bf16.msra.mxu0 0
    %1447 = vmatprep.mubr.bf16.mxu0 0
    %1448 = vmatmul.mubr.bf16.gmra.mrb[0].mxu0 %v273
    %v1449 = vpop.f32.mrb[0].mxu0
    %v1450 = vadd.f32 0.0, %v1449
    %v1451 = vpop.f32.mrb[0].mxu0
    %v1452 = vpop.f32.mrb[0].mxu0
    %v1453 = vadd.f32 0.0, %v1452
    %v1454 = vpop.f32.mrb[0].mxu0
    %1455 = vmatprep.mubr.bf16.mxu0 0
    %1456 = vmatmul.mubr.bf16.gmra.mrb[0].mxu0 %v274
    %v1457 = vpop.f32.mrb[0].mxu0
    %v1458 = vadd.f32 0.0, %v1457
    %v1459 = vpop.f32.mrb[0].mxu0
    %v1460 = vpop.f32.mrb[0].mxu0
    %v1461 = vadd.f32 0.0, %v1460
    %v1462 = vpop.f32.mrb[0].mxu0
    %1463 = vmatprep.mubr.bf16.mxu0 0
    %1464 = vmatmul.mubr.bf16.gmra.mrb[0].mxu0 %v275
    %v1465 = vpop.f32.mrb[0].mxu0
    %v1466 = vadd.f32 0.0, %v1465
    %v1467 = vpop.f32.mrb[0].mxu0
    %v1468 = vpop.f32.mrb[0].mxu0
    %v1469 = vadd.f32 0.0, %v1468
    %v1470 = vpop.f32.mrb[0].mxu0
    %1471 = vmatprep.mubr.bf16.mxu0 0
    %1472 = vmatmul.mubr.bf16.gmra.mrb[0].mxu0 %v276
    %v1473 = vpop.f32.mrb[0].mxu0
    %v1474 = vadd.f32 0.0, %v1473
    %v1475 = vpop.f32.mrb[0].mxu0
    %v1476 = vpop.f32.mrb[0].mxu0
    %v1477 = vadd.f32 0.0, %v1476
    %v1478 = vpop.f32.mrb[0].mxu0
    %1479 = vmatprep.mubr.bf16.mxu0 0
    %1480 = vmatmul.mubr.bf16.gmra.mrb[0].mxu0 %v277
    %v1481 = vpop.f32.mrb[0].mxu0
    %v1482 = vadd.f32 0.0, %v1481
    %v1483 = vpop.f32.mrb[0].mxu0
    %v1484 = vpop.f32.mrb[0].mxu0
    %v1485 = vadd.f32 0.0, %v1484
    %v1486 = vpop.f32.mrb[0].mxu0
    %1487 = vmatprep.mubr.bf16.mxu0 0
    %1488 = vmatmul.mubr.bf16.gmra.mrb[0].mxu0 %v278
    %v1489 = vpop.f32.mrb[0].mxu0
    %v1490 = vadd.f32 0.0, %v1489
    %v1491 = vpop.f32.mrb[0].mxu0
    %v1492 = vpop.f32.mrb[0].mxu0
    %v1493 = vadd.f32 0.0, %v1492
    %v1494 = vpop.f32.mrb[0].mxu0
    %1495 = vmatprep.mubr.bf16.mxu0 0
    %1496 = vmatmul.mubr.bf16.gmra.mrb[0].mxu0 %v279
    %v1497 = vpop.f32.mrb[0].mxu0
    %v1498 = vadd.f32 0.0, %v1497
    %v1499 = vpop.f32.mrb[0].mxu0
    %v1500 = vpop.f32.mrb[0].mxu0
    %v1501 = vadd.f32 0.0, %v1500
    %v1502 = vpop.f32.mrb[0].mxu0
    %1503 = vmatprep.mubr.bf16.mxu0 0
    %1504 = vmatmul.mubr.bf16.gmra.mrb[0].mxu0 %v280
    %v1505 = vpop.f32.mrb[0].mxu0
    %v1506 = vadd.f32 0.0, %v1505
    %v1507 = vpop.f32.mrb[0].mxu0
    %v1508 = vpop.f32.mrb[0].mxu0
    %v1509 = vadd.f32 0.0, %v1508
    %v1510 = vpop.f32.mrb[0].mxu0
    %1511 = vdwg.mxu0
    %1512 = vmatprep.subr.bf16.mxu0 %v1349
    %1513 = vmatpush1.bf16.msra.mxu0 %v1348
    %1514 = vmatprep.subr.bf16.mxu0 0
    %1515 = vmatpush1.bf16.msra.mxu0 0
    %1516 = vmatprep.subr.bf16.mxu0 0
    %1517 = vmatpush1.bf16.msra.mxu0 0
    %1518 = vmatprep.subr.bf16.mxu0 0
    %1519 = vmatpush1.bf16.msra.mxu0 0
    %1520 = vmatprep.subr.bf16.mxu0 0
    %1521 = vmatpush1.bf16.msra.mxu0 0
    %1522 = vmatprep.subr.bf16.mxu0 0
    %1523 = vmatpush1.bf16.msra.mxu0 0
    %1524 = vmatprep.subr.bf16.mxu0 0
    %1525 = vmatpush1.bf16.msra.mxu0 0
    %1526 = vmatprep.subr.bf16.mxu0 0
    %1527 = vmatpush1.bf16.msra.mxu0 0
    %1528 = vmatprep.subr.bf16.mxu0 0
    %1529 = vmatpush1.bf16.msra.mxu0 0
    %1530 = vmatprep.subr.bf16.mxu0 0
    %1531 = vmatpush1.bf16.msra.mxu0 0
    %1532 = vmatprep.subr.bf16.mxu0 0
    %1533 = vmatpush1.bf16.msra.mxu0 0
    %1534 = vmatprep.subr.bf16.mxu0 0
    %1535 = vmatpush1.bf16.msra.mxu0 0
    %1536 = vmatprep.subr.bf16.mxu0 0
    %1537 = vmatpush1.bf16.msra.mxu0 0
    %1538 = vmatprep.subr.bf16.mxu0 0
    %1539 = vmatpush1.bf16.msra.mxu0 0
    %1540 = vmatprep.subr.bf16.mxu0 0
    %1541 = vmatpush1.bf16.msra.mxu0 0
    %1542 = vmatprep.subr.bf16.mxu0 0
    %1543 = vmatpush1.bf16.msra.mxu0 0
    %1544 = vmatprep.mubr.bf16.mxu0 0
    %1545 = vmatmul.mubr.bf16.gmra.mrb[0].mxu0 %v747
    %v1546 = vpop.f32.mrb[0].mxu0
    %v1547 = vadd.f32 0.0, %v1546
    %v1548 = vpop.f32.mrb[0].mxu0
    %v1549 = vadd.f32 0.0, %v1548
    %v1550 = vpop.f32.mrb[0].mxu0
    %v1551 = vadd.f32 0.0, %v1550
    %v1552 = vpop.f32.mrb[0].mxu0
    %v1553 = vadd.f32 0.0, %v1552
    %1554 = vmatprep.mubr.bf16.mxu0 0
    %1555 = vmatmul.mubr.bf16.gmra.mrb[0].mxu0 %v750
    %v1556 = vpop.f32.mrb[0].mxu0
    %v1557 = vadd.f32 0.0, %v1556
    %v1558 = vpop.f32.mrb[0].mxu0
    %v1559 = vadd.f32 0.0, %v1558
    %v1560 = vpop.f32.mrb[0].mxu0
    %v1561 = vadd.f32 0.0, %v1560
    %v1562 = vpop.f32.mrb[0].mxu0
    %v1563 = vadd.f32 0.0, %v1562
    %1564 = vmatprep.mubr.bf16.mxu0 0
    %1565 = vmatmul.mubr.bf16.gmra.mrb[0].mxu0 %v753
    %v1566 = vpop.f32.mrb[0].mxu0
    %v1567 = vadd.f32 0.0, %v1566
    %v1568 = vpop.f32.mrb[0].mxu0
    %v1569 = vadd.f32 0.0, %v1568
    %v1570 = vpop.f32.mrb[0].mxu0
    %v1571 = vadd.f32 0.0, %v1570
    %v1572 = vpop.f32.mrb[0].mxu0
    %v1573 = vadd.f32 0.0, %v1572
    %1574 = vmatprep.mubr.bf16.mxu0 0
    %1575 = vmatmul.mubr.bf16.gmra.mrb[0].mxu0 %v756
    %v1576 = vpop.f32.mrb[0].mxu0
    %v1577 = vadd.f32 0.0, %v1576
    %v1578 = vpop.f32.mrb[0].mxu0
    %v1579 = vadd.f32 0.0, %v1578
    %v1580 = vpop.f32.mrb[0].mxu0
    %v1581 = vadd.f32 0.0, %v1580
    %v1582 = vpop.f32.mrb[0].mxu0
    %v1583 = vadd.f32 0.0, %v1582
    %1584 = vmatprep.mubr.bf16.mxu0 0
    %1585 = vmatmul.mubr.bf16.gmra.mrb[0].mxu0 %v759
    %v1586 = vpop.f32.mrb[0].mxu0
    %v1587 = vadd.f32 0.0, %v1586
    %v1588 = vpop.f32.mrb[0].mxu0
    %v1589 = vadd.f32 0.0, %v1588
    %v1590 = vpop.f32.mrb[0].mxu0
    %v1591 = vadd.f32 0.0, %v1590
    %v1592 = vpop.f32.mrb[0].mxu0
    %v1593 = vadd.f32 0.0, %v1592
    %1594 = vmatprep.mubr.bf16.mxu0 0
    %1595 = vmatmul.mubr.bf16.gmra.mrb[0].mxu0 %v762
    %v1596 = vpop.f32.mrb[0].mxu0
    %v1597 = vadd.f32 0.0, %v1596
    %v1598 = vpop.f32.mrb[0].mxu0
    %v1599 = vadd.f32 0.0, %v1598
    %v1600 = vpop.f32.mrb[0].mxu0
    %v1601 = vadd.f32 0.0, %v1600
    %v1602 = vpop.f32.mrb[0].mxu0
    %v1603 = vadd.f32 0.0, %v1602
    %1604 = vmatprep.mubr.bf16.mxu0 0
    %1605 = vmatmul.mubr.bf16.gmra.mrb[0].mxu0 %v765
    %v1606 = vpop.f32.mrb[0].mxu0
    %v1607 = vadd.f32 0.0, %v1606
    %v1608 = vpop.f32.mrb[0].mxu0
    %v1609 = vadd.f32 0.0, %v1608
    %v1610 = vpop.f32.mrb[0].mxu0
    %v1611 = vadd.f32 0.0, %v1610
    %v1612 = vpop.f32.mrb[0].mxu0
    %v1613 = vadd.f32 0.0, %v1612
    %1614 = vmatprep.mubr.bf16.mxu0 0
    %1615 = vmatmul.mubr.bf16.gmra.mrb[0].mxu0 %v768
    %v1616 = vpop.f32.mrb[0].mxu0
    %v1617 = vadd.f32 0.0, %v1616
    %v1618 = vpop.f32.mrb[0].mxu0
    %v1619 = vadd.f32 0.0, %v1618
    %v1620 = vpop.f32.mrb[0].mxu0
    %v1621 = vadd.f32 0.0, %v1620
    %v1622 = vpop.f32.mrb[0].mxu0
    %v1623 = vadd.f32 0.0, %v1622
    %1624 = vdwg.mxu0
    %v1625 = vadd.f32 %v1547, %v1450
    %v1626 = vadd.f32 %v1551, %v1453
    %v1627 = vadd.f32 %v1557, %v1458
    %v1628 = vadd.f32 %v1561, %v1461
    %v1629 = vadd.f32 %v1567, %v1466
    %v1630 = vadd.f32 %v1571, %v1469
    %v1631 = vadd.f32 %v1577, %v1474
    %v1632 = vadd.f32 %v1581, %v1477
    %v1633 = vadd.f32 %v1587, %v1482
    %v1634 = vadd.f32 %v1591, %v1485
    %v1635 = vadd.f32 %v1597, %v1490
    %v1636 = vadd.f32 %v1601, %v1493
    %v1637 = vadd.f32 %v1607, %v1498
    %v1638 = vadd.f32 %v1611, %v1501
    %v1639 = vadd.f32 %v1617, %v1506
    %v1640 = vadd.f32 %v1621, %v1509
    %v1641 = vadd.f32 %v1549, %v1450
    %v1642 = vadd.f32 %v1553, %v1453
    %v1643 = vadd.f32 %v1559, %v1458
    %v1644 = vadd.f32 %v1563, %v1461
    %v1645 = vadd.f32 %v1569, %v1466
    %v1646 = vadd.f32 %v1573, %v1469
    %v1647 = vadd.f32 %v1579, %v1474
    %v1648 = vadd.f32 %v1583, %v1477
    %v1649 = vadd.f32 %v1589, %v1482
    %v1650 = vadd.f32 %v1593, %v1485
    %v1651 = vadd.f32 %v1599, %v1490
    %v1652 = vadd.f32 %v1603, %v1493
    %v1653 = vadd.f32 %v1609, %v1498
    %v1654 = vadd.f32 %v1613, %v1501
    %v1655 = vadd.f32 %v1619, %v1506
    %v1656 = vadd.f32 %v1623, %v1509
    %v1657 = vpack.c.bf16 %v1642, %v1641
    %v1658 = vpack.c.bf16 %v1644, %v1643
    %v1659 = vpack.c.bf16 %v1646, %v1645
    %v1660 = vpack.c.bf16 %v1648, %v1647
    %v1661 = vpack.c.bf16 %v1650, %v1649
    %v1662 = vpack.c.bf16 %v1652, %v1651
    %v1663 = vpack.c.bf16 %v1654, %v1653
    %v1664 = vpack.c.bf16 %v1656, %v1655
    %v1665 = vpack.c.bf16 %v1301, %v1297
    %v1666 = vpack.c.bf16 %v1626, %v1625
    %v1667 = vpack.c.bf16 %v1628, %v1627
    %v1668 = vpack.c.bf16 %v1630, %v1629
    %v1669 = vpack.c.bf16 %v1632, %v1631
    %v1670 = vpack.c.bf16 %v1634, %v1633
    %v1671 = vpack.c.bf16 %v1636, %v1635
    %v1672 = vpack.c.bf16 %v1638, %v1637
    %v1673 = vpack.c.bf16 %v1640, %v1639
    %1674 = vmatprep.subr.bf16.mxu0 0
    %1675 = vmatpush1.bf16.xpose.msra.mxu0 %v1666
    %1676 = vmatprep.subr.bf16.mxu0 0
    %1677 = vmatpush1.bf16.xpose.msra.mxu0 %v1667
    %1678 = vmatprep.subr.bf16.mxu0 0
    %1679 = vmatpush1.bf16.xpose.msra.mxu0 %v1668
    %1680 = vmatprep.subr.bf16.mxu0 0
    %1681 = vmatpush1.bf16.xpose.msra.mxu0 %v1669
    %1682 = vmatprep.subr.bf16.mxu0 0
    %1683 = vmatpush1.bf16.xpose.msra.mxu0 %v1670
    %1684 = vmatprep.subr.bf16.mxu0 0
    %1685 = vmatpush1.bf16.xpose.msra.mxu0 %v1671
    %1686 = vmatprep.subr.bf16.mxu0 0
    %1687 = vmatpush1.bf16.xpose.msra.mxu0 %v1672
    %1688 = vmatprep.subr.bf16.mxu0 0
    %1689 = vmatpush1.bf16.xpose.msra.mxu0 %v1673
    %1690 = vmatprep.subr.bf16.mxu0 0
    %1691 = vmatpush1.bf16.xpose.msra.mxu0 0
    %1692 = vmatprep.subr.bf16.mxu0 0
    %1693 = vmatpush1.bf16.xpose.msra.mxu0 0
    %1694 = vmatprep.subr.bf16.mxu0 0
    %1695 = vmatpush1.bf16.xpose.msra.mxu0 0
    %1696 = vmatprep.subr.bf16.mxu0 0
    %1697 = vmatpush1.bf16.xpose.msra.mxu0 0
    %1698 = vmatprep.subr.bf16.mxu0 0
    %1699 = vmatpush1.bf16.xpose.msra.mxu0 0
    %1700 = vmatprep.subr.bf16.mxu0 0
    %1701 = vmatpush1.bf16.xpose.msra.mxu0 0
    %1702 = vmatprep.subr.bf16.mxu0 0
    %1703 = vmatpush1.bf16.xpose.msra.mxu0 0
    %1704 = vmatprep.subr.bf16.mxu0 0
    %1705 = vmatpush1.bf16.xpose.msra.mxu0 0
    %1706 = vmatprep.mubr.bf16.mxu0 0
    %1707 = vmatmul.mubr.bf16.gmra.mrb[0].mxu0 %v1665
    %v1708 = vpop.f32.mrb[0].mxu0
    %v1709 = vadd.f32 0.0, %v1708
    %v1710 = vpop.f32.mrb[0].mxu0
    %v1711 = vpop.f32.mrb[0].mxu0
    %v1712 = vadd.f32 0.0, %v1711
    %v1713 = vpop.f32.mrb[0].mxu0
    %1714 = vdwg.mxu0
    %v1715 = vsel %vm244, %v1709, -1e+30
    %v1716 = vsel %vm245, %v1712, -1e+30
    %1717 = vmax.xlane.f32.xlu0 %v1715
    %v1718 = vpop.xlane.xlu0 %1717
    %1719 = vmax.xlane.f32.xlu0 %v1716
    %v1720 = vpop.xlane.xlu0 %1719
    %v1721 = vsub.f32 %v1709, %v1718
    %v1722 = vsub.f32 %v1712, %v1720
    %v1723 = vmul.f32 %v1721, 1.442695
    %v1724 = vpow.pop %v1723
    %v1725 = vmul.f32 %v1722, 1.442695
    %v1726 = vpow.pop %v1725
    %v1727 = vsel %vm244, %v1724, 0.0
    %v1728 = vsel %vm245, %v1726, 0.0
    %v1729 = vpack.c.bf16 %v1728, %v1727
    %v1730 = vunpack.c.l.bf16 %v1729
    %v1731 = vunpack.c.h.bf16 %v1729
    %1732 = vadd.xlane.f32.xlu0 %v1730
    %v1733 = vpop.xlane.xlu0 %1732
    %1734 = vadd.xlane.f32.xlu0 %v1731
    %v1735 = vpop.xlane.xlu0 %1734
    %v1736 = vadd.f32 %v1733, 1e-16
    %v1737 = vadd.f32 %v1735, 1e-16
    %1738 = vmatprep.subr.bf16.mxu0 0
    %1739 = vmatpush1.bf16.msra.mxu0 %v1657
    %1740 = vmatprep.subr.bf16.mxu0 0
    %1741 = vmatpush1.bf16.msra.mxu0 %v1658
    %1742 = vmatprep.subr.bf16.mxu0 0
    %1743 = vmatpush1.bf16.msra.mxu0 %v1659
    %1744 = vmatprep.subr.bf16.mxu0 0
    %1745 = vmatpush1.bf16.msra.mxu0 %v1660
    %1746 = vmatprep.subr.bf16.mxu0 0
    %1747 = vmatpush1.bf16.msra.mxu0 %v1661
    %1748 = vmatprep.subr.bf16.mxu0 0
    %1749 = vmatpush1.bf16.msra.mxu0 %v1662
    %1750 = vmatprep.subr.bf16.mxu0 0
    %1751 = vmatpush1.bf16.msra.mxu0 %v1663
    %1752 = vmatprep.subr.bf16.mxu0 0
    %1753 = vmatpush1.bf16.msra.mxu0 %v1664
    %1754 = vmatprep.subr.bf16.mxu0 0
    %1755 = vmatpush1.bf16.msra.mxu0 0
    %1756 = vmatprep.subr.bf16.mxu0 0
    %1757 = vmatpush1.bf16.msra.mxu0 0
    %1758 = vmatprep.subr.bf16.mxu0 0
    %1759 = vmatpush1.bf16.msra.mxu0 0
    %1760 = vmatprep.subr.bf16.mxu0 0
    %1761 = vmatpush1.bf16.msra.mxu0 0
    %1762 = vmatprep.subr.bf16.mxu0 0
    %1763 = vmatpush1.bf16.msra.mxu0 0
    %1764 = vmatprep.subr.bf16.mxu0 0
    %1765 = vmatpush1.bf16.msra.mxu0 0
    %1766 = vmatprep.subr.bf16.mxu0 0
    %1767 = vmatpush1.bf16.msra.mxu0 0
    %1768 = vmatprep.subr.bf16.mxu0 0
    %1769 = vmatpush1.bf16.msra.mxu0 0
    %1770 = vmatprep.mubr.bf16.mxu0 0
    %1771 = vmatmul.mubr.bf16.gmra.mrb[0].mxu0 %v1729
    %v1772 = vpop.f32.mrb[0].mxu0
    %v1773 = vadd.f32 0.0, %v1772
    %v1774 = vpop.f32.mrb[0].mxu0
    %v1775 = vpop.f32.mrb[0].mxu0
    %v1776 = vadd.f32 0.0, %v1775
    %v1777 = vpop.f32.mrb[0].mxu0
    %1778 = vdwg.mxu0
    %v1779 = vrcp.pop %v1736
    %v1780 = vrcp.pop %v1737
    %v1781 = vmul.f32 %v1773, %v1779
    %v1782 = vmul.f32 %v1776, %v1780
    %v1783 = vadd.f32 %v1781, %v1342
    %v1784 = vadd.f32 %v1782, %v1346
    %v1785 = vmax.f32 %v1783, 0.0
    %v1786 = vmax.f32 %v1784, 0.0
    %v1787 = vpack.c.bf16 %v1786, %v1785
    %s1788 = scalar_lea.vmem [#allocation5], 512
    %v1789 = vld [vmem:[%s1788] sm:$0xff]
    %v1790 = vld [vmem:[%s1788 + $0x8] sm:$0xff]
    %v1791 = vld [vmem:[%s1788 + $0x10] sm:$0xff]
    %v1792 = vld [vmem:[%s1788 + $0x18] sm:$0xff]
    %v1793 = vld [vmem:[%s1788 + $0x20] sm:$0xff]
    %v1794 = vld [vmem:[%s1788 + $0x28] sm:$0xff]
    %v1795 = vld [vmem:[%s1788 + $0x30] sm:$0xff]
    %v1796 = vld [vmem:[%s1788 + $0x38] sm:$0xff]
    %v1797 = vld [vmem:[%s1788 + $0x40] sm:$0xff]
    %v1798 = vld [vmem:[%s1788 + $0x48] sm:$0xff]
    %v1799 = vld [vmem:[%s1788 + $0x50] sm:$0xff]
    %v1800 = vld [vmem:[%s1788 + $0x58] sm:$0xff]
    %v1801 = vld [vmem:[%s1788 + $0x60] sm:$0xff]
    %v1802 = vld [vmem:[%s1788 + $0x68] sm:$0xff]
    %v1803 = vld [vmem:[%s1788 + $0x70] sm:$0xff]
    %v1804 = vld [vmem:[%s1788 + $0x78] sm:$0xff]
    %v1805 = vld [vmem:[%s1788 + $0x80] sm:$0xff]
    %v1806 = vld [vmem:[%s1788 + $0x88] sm:$0xff]
    %v1807 = vld [vmem:[%s1788 + $0x90] sm:$0xff]
    %v1808 = vld [vmem:[%s1788 + $0x98] sm:$0xff]
    %v1809 = vld [vmem:[%s1788 + $0xa0] sm:$0xff]
    %v1810 = vld [vmem:[%s1788 + $0xa8] sm:$0xff]
    %v1811 = vld [vmem:[%s1788 + $0xb0] sm:$0xff]
    %v1812 = vld [vmem:[%s1788 + $0xb8] sm:$0xff]
    %v1813 = vld [vmem:[%s1788 + $0xc0] sm:$0xff]
    %v1814 = vld [vmem:[%s1788 + $0xc8] sm:$0xff]
    %v1815 = vld [vmem:[%s1788 + $0xd0] sm:$0xff]
    %v1816 = vld [vmem:[%s1788 + $0xd8] sm:$0xff]
    %v1817 = vld [vmem:[%s1788 + $0xe0] sm:$0xff]
    %v1818 = vld [vmem:[%s1788 + $0xe8] sm:$0xff]
    %v1819 = vld [vmem:[%s1788 + $0xf0] sm:$0xff]
    %v1820 = vld [vmem:[%s1788 + $0xf8] sm:$0xff]
    %s1821 = scalar_lea.vmem %s7, 8
    %v1822 = vld [vmem:[%s1821] sm:$0xf]
    %v1824 = vlaneseq
    %v1825 = vshrl.u32 %v1824, 7
    %v1826 = vsub.s32 0, %v1825
    %v1827 = vrot.slane %v1822, %v1826
    %v1828 = vlaneseq
    %v1829 = vshrl.u32 %v1828, 7
    %v1830 = vsub.s32 1, %v1829
    %v1831 = vrot.slane %v1822, %v1830
    %v1832 = vlaneseq
    %v1833 = vshrl.u32 %v1832, 7
    %v1834 = vsub.s32 2, %v1833
    %v1835 = vrot.slane %v1822, %v1834
    %v1836 = vlaneseq
    %v1837 = vshrl.u32 %v1836, 7
    %v1838 = vsub.s32 3, %v1837
    %v1839 = vrot.slane %v1822, %v1838
    %v1876 = vunpack.c.l.b16 %v1789
    %v1877 = vunpack.c.h.b16 %v1789
    %v1878 = vunpack.c.l.b16 %v1790
    %v1879 = vunpack.c.h.b16 %v1790
    %v1880 = vunpack.c.l.b16 %v1791
    %v1881 = vunpack.c.h.b16 %v1791
    %v1882 = vunpack.c.l.b16 %v1792
    %v1883 = vunpack.c.h.b16 %v1792
    %v1884 = vunpack.c.l.b16 %v1793
    %v1885 = vunpack.c.h.b16 %v1793
    %v1886 = vunpack.c.l.b16 %v1794
    %v1887 = vunpack.c.h.b16 %v1794
    %v1888 = vunpack.c.l.b16 %v1795
    %v1889 = vunpack.c.h.b16 %v1795
    %v1890 = vunpack.c.l.b16 %v1796
    %v1891 = vunpack.c.h.b16 %v1796
    %v1892 = vunpack.c.l.b16 %v1797
    %v1893 = vunpack.c.h.b16 %v1797
    %v1894 = vunpack.c.l.b16 %v1798
    %v1895 = vunpack.c.h.b16 %v1798
    %v1896 = vunpack.c.l.b16 %v1799
    %v1897 = vunpack.c.h.b16 %v1799
    %v1898 = vunpack.c.l.b16 %v1800
    %v1899 = vunpack.c.h.b16 %v1800
    %v1900 = vunpack.c.l.b16 %v1801
    %v1901 = vunpack.c.h.b16 %v1801
    %v1902 = vunpack.c.l.b16 %v1802
    %v1903 = vunpack.c.h.b16 %v1802
    %v1904 = vunpack.c.l.b16 %v1803
    %v1905 = vunpack.c.h.b16 %v1803
    %v1906 = vunpack.c.l.b16 %v1804
    %v1907 = vunpack.c.h.b16 %v1804
    %v1908 = vunpack.c.l.b16 %v1805
    %v1909 = vunpack.c.h.b16 %v1805
    %v1910 = vunpack.c.l.b16 %v1806
    %v1911 = vunpack.c.h.b16 %v1806
    %v1912 = vunpack.c.l.b16 %v1807
    %v1913 = vunpack.c.h.b16 %v1807
    %v1914 = vunpack.c.l.b16 %v1808
    %v1915 = vunpack.c.h.b16 %v1808
    %v1916 = vunpack.c.l.b16 %v1809
    %v1917 = vunpack.c.h.b16 %v1809
    %v1918 = vunpack.c.l.b16 %v1810
    %v1919 = vunpack.c.h.b16 %v1810
    %v1920 = vunpack.c.l.b16 %v1811
    %v1921 = vunpack.c.h.b16 %v1811
    %v1922 = vunpack.c.l.b16 %v1812
    %v1923 = vunpack.c.h.b16 %v1812
    %v1924 = vunpack.c.l.b16 %v1813
    %v1925 = vunpack.c.h.b16 %v1813
    %v1926 = vunpack.c.l.b16 %v1814
    %v1927 = vunpack.c.h.b16 %v1814
    %v1928 = vunpack.c.l.b16 %v1815
    %v1929 = vunpack.c.h.b16 %v1815
    %v1930 = vunpack.c.l.b16 %v1816
    %v1931 = vunpack.c.h.b16 %v1816
    %v1932 = vunpack.c.l.b16 %v1817
    %v1933 = vunpack.c.h.b16 %v1817
    %v1934 = vunpack.c.l.b16 %v1818
    %v1935 = vunpack.c.h.b16 %v1818
    %v1936 = vunpack.c.l.b16 %v1819
    %v1937 = vunpack.c.h.b16 %v1819
    %v1938 = vunpack.c.l.b16 %v1820
    %v1939 = vunpack.c.h.b16 %v1820
    %v1940 = vpack.c.b16 %v1880, %v1876
    %v1941 = vpack.c.b16 %v1881, %v1877
    %v1942 = vpack.c.b16 %v1882, %v1878
    %v1943 = vpack.c.b16 %v1883, %v1879
    %v1944 = vpack.c.b16 %v1888, %v1884
    %v1945 = vpack.c.b16 %v1889, %v1885
    %v1946 = vpack.c.b16 %v1890, %v1886
    %v1947 = vpack.c.b16 %v1891, %v1887
    %v1948 = vpack.c.b16 %v1896, %v1892
    %v1949 = vpack.c.b16 %v1897, %v1893
    %v1950 = vpack.c.b16 %v1898, %v1894
    %v1951 = vpack.c.b16 %v1899, %v1895
    %v1952 = vpack.c.b16 %v1904, %v1900
    %v1953 = vpack.c.b16 %v1905, %v1901
    %v1954 = vpack.c.b16 %v1906, %v1902
    %v1955 = vpack.c.b16 %v1907, %v1903
    %v1956 = vpack.c.b16 %v1912, %v1908
    %v1957 = vpack.c.b16 %v1913, %v1909
    %v1958 = vpack.c.b16 %v1914, %v1910
    %v1959 = vpack.c.b16 %v1915, %v1911
    %v1960 = vpack.c.b16 %v1920, %v1916
    %v1961 = vpack.c.b16 %v1921, %v1917
    %v1962 = vpack.c.b16 %v1922, %v1918
    %v1963 = vpack.c.b16 %v1923, %v1919
    %v1964 = vpack.c.b16 %v1928, %v1924
    %v1965 = vpack.c.b16 %v1929, %v1925
    %v1966 = vpack.c.b16 %v1930, %v1926
    %v1967 = vpack.c.b16 %v1931, %v1927
    %v1968 = vpack.c.b16 %v1936, %v1932
    %v1969 = vpack.c.b16 %v1937, %v1933
    %v1970 = vpack.c.b16 %v1938, %v1934
    %v1971 = vpack.c.b16 %v1939, %v1935
    %2004 = vmatprep.subr.bf16.mxu0 %v1941
    %2005 = vmatpush1.bf16.msra.mxu0 %v1940
    %2006 = vmatprep.subr.bf16.mxu0 %v1945
    %2007 = vmatpush1.bf16.msra.mxu0 %v1944
    %2008 = vmatprep.subr.bf16.mxu0 %v1949
    %2009 = vmatpush1.bf16.msra.mxu0 %v1948
    %2010 = vmatprep.subr.bf16.mxu0 %v1953
    %2011 = vmatpush1.bf16.msra.mxu0 %v1952
    %2012 = vmatprep.subr.bf16.mxu0 %v1957
    %2013 = vmatpush1.bf16.msra.mxu0 %v1956
    %2014 = vmatprep.subr.bf16.mxu0 %v1961
    %2015 = vmatpush1.bf16.msra.mxu0 %v1960
    %2016 = vmatprep.subr.bf16.mxu0 %v1965
    %2017 = vmatpush1.bf16.msra.mxu0 %v1964
    %2018 = vmatprep.subr.bf16.mxu0 %v1969
    %2019 = vmatpush1.bf16.msra.mxu0 %v1968
    %2020 = vmatprep.subr.bf16.mxu0 0
    %2021 = vmatpush1.bf16.msra.mxu0 0
    %2022 = vmatprep.subr.bf16.mxu0 0
    %2023 = vmatpush1.bf16.msra.mxu0 0
    %2024 = vmatprep.subr.bf16.mxu0 0
    %2025 = vmatpush1.bf16.msra.mxu0 0
    %2026 = vmatprep.subr.bf16.mxu0 0
    %2027 = vmatpush1.bf16.msra.mxu0 0
    %2028 = vmatprep.subr.bf16.mxu0 0
    %2029 = vmatpush1.bf16.msra.mxu0 0
    %2030 = vmatprep.subr.bf16.mxu0 0
    %2031 = vmatpush1.bf16.msra.mxu0 0
    %2032 = vmatprep.subr.bf16.mxu0 0
    %2033 = vmatpush1.bf16.msra.mxu0 0
    %2034 = vmatprep.subr.bf16.mxu0 0
    %2035 = vmatpush1.bf16.msra.mxu0 0
    %2036 = vmatprep.mubr.bf16.mxu0 0
    %2037 = vmatmul.mubr.bf16.gmra.mrb[0].mxu0 %v1787
    %v2038 = vpop.f32.mrb[0].mxu0
    %v2039 = vadd.f32 %v1827, %v2038
    %v2040 = vpop.f32.mrb[0].mxu0
    %v2041 = vadd.f32 %v1831, %v2040
    %v2042 = vpop.f32.mrb[0].mxu0
    %v2043 = vadd.f32 %v1827, %v2042
    %v2044 = vpop.f32.mrb[0].mxu0
    %v2045 = vadd.f32 %v1831, %v2044
    %2046 = vdwg.mxu0
    %2047 = vmatprep.subr.bf16.mxu0 %v1943
    %2048 = vmatpush1.bf16.msra.mxu0 %v1942
    %2049 = vmatprep.subr.bf16.mxu0 %v1947
    %2050 = vmatpush1.bf16.msra.mxu0 %v1946
    %2051 = vmatprep.subr.bf16.mxu0 %v1951
    %2052 = vmatpush1.bf16.msra.mxu0 %v1950
    %2053 = vmatprep.subr.bf16.mxu0 %v1955
    %2054 = vmatpush1.bf16.msra.mxu0 %v1954
    %2055 = vmatprep.subr.bf16.mxu0 %v1959
    %2056 = vmatpush1.bf16.msra.mxu0 %v1958
    %2057 = vmatprep.subr.bf16.mxu0 %v1963
    %2058 = vmatpush1.bf16.msra.mxu0 %v1962
    %2059 = vmatprep.subr.bf16.mxu0 %v1967
    %2060 = vmatpush1.bf16.msra.mxu0 %v1966
    %2061 = vmatprep.subr.bf16.mxu0 %v1971
    %2062 = vmatpush1.bf16.msra.mxu0 %v1970
    %2063 = vmatprep.subr.bf16.mxu0 0
    %2064 = vmatpush1.bf16.msra.mxu0 0
    %2065 = vmatprep.subr.bf16.mxu0 0
    %2066 = vmatpush1.bf16.msra.mxu0 0
    %2067 = vmatprep.subr.bf16.mxu0 0
    %2068 = vmatpush1.bf16.msra.mxu0 0
    %2069 = vmatprep.subr.bf16.mxu0 0
    %2070 = vmatpush1.bf16.msra.mxu0 0
    %2071 = vmatprep.subr.bf16.mxu0 0
    %2072 = vmatpush1.bf16.msra.mxu0 0
    %2073 = vmatprep.subr.bf16.mxu0 0
    %2074 = vmatpush1.bf16.msra.mxu0 0
    %2075 = vmatprep.subr.bf16.mxu0 0
    %2076 = vmatpush1.bf16.msra.mxu0 0
    %2077 = vmatprep.subr.bf16.mxu0 0
    %2078 = vmatpush1.bf16.msra.mxu0 0
    %2079 = vmatprep.mubr.bf16.mxu0 0
    %2080 = vmatmul.mubr.bf16.gmra.mrb[0].mxu0 %v1787
    %v2081 = vpop.f32.mrb[0].mxu0
    %v2082 = vadd.f32 %v1835, %v2081
    %v2083 = vpop.f32.mrb[0].mxu0
    %v2084 = vadd.f32 %v1839, %v2083
    %v2085 = vpop.f32.mrb[0].mxu0
    %v2086 = vadd.f32 %v1835, %v2085
    %v2087 = vpop.f32.mrb[0].mxu0
    %v2088 = vadd.f32 %v1839, %v2087
    %2089 = vdwg.mxu0
    %v2090 = vpack.c.bf16 %v2045, %v2041
    %v2091 = vpack.c.bf16 %v2086, %v2082
    %s2092 = scalar_lea.vmem [#allocation7], 128
    %v2093 = vld [vmem:[%s2092] sm:$0xf]
    %v2094 = vld [vmem:[%s2092 + $0x4] sm:$0xf]
    %v2095 = vld [vmem:[%s2092 + $0x8] sm:$0xf]
    %v2096 = vld [vmem:[%s2092 + $0xc] sm:$0xf]
    %v2097 = vld [vmem:[%s2092 + $0x10] sm:$0xf]
    %v2098 = vld [vmem:[%s2092 + $0x14] sm:$0xf]
    %v2099 = vld [vmem:[%s2092 + $0x18] sm:$0xf]
    %v2100 = vld [vmem:[%s2092 + $0x1c] sm:$0xf]
    %v2101 = vld [vmem:[%s2092 + $0x20] sm:$0xf]
    %v2102 = vld [vmem:[%s2092 + $0x24] sm:$0xf]
    %v2103 = vld [vmem:[%s2092 + $0x28] sm:$0xf]
    %v2104 = vld [vmem:[%s2092 + $0x2c] sm:$0xf]
    %v2105 = vld [vmem:[%s2092 + $0x30] sm:$0xf]
    %v2106 = vld [vmem:[%s2092 + $0x34] sm:$0xf]
    %v2107 = vld [vmem:[%s2092 + $0x38] sm:$0xf]
    %v2108 = vld [vmem:[%s2092 + $0x3c] sm:$0xf]
    %v2125 = vunpack.c.l.b16 %v2093
    %v2126 = vunpack.c.l.b16 %v2094
    %v2127 = vunpack.c.l.b16 %v2095
    %v2128 = vunpack.c.l.b16 %v2096
    %v2129 = vunpack.c.l.b16 %v2097
    %v2130 = vunpack.c.l.b16 %v2098
    %v2131 = vunpack.c.l.b16 %v2099
    %v2132 = vunpack.c.l.b16 %v2100
    %v2133 = vunpack.c.l.b16 %v2101
    %v2134 = vunpack.c.l.b16 %v2102
    %v2135 = vunpack.c.l.b16 %v2103
    %v2136 = vunpack.c.l.b16 %v2104
    %v2137 = vunpack.c.l.b16 %v2105
    %v2138 = vunpack.c.l.b16 %v2106
    %v2139 = vunpack.c.l.b16 %v2107
    %v2140 = vunpack.c.l.b16 %v2108
    %v2141 = vpack.c.b16 %v2126, %v2125
    %v2142 = vpack.c.b16 %v2128, %v2127
    %v2143 = vpack.c.b16 %v2130, %v2129
    %v2144 = vpack.c.b16 %v2132, %v2131
    %v2145 = vpack.c.b16 %v2134, %v2133
    %v2146 = vpack.c.b16 %v2136, %v2135
    %v2147 = vpack.c.b16 %v2138, %v2137
    %v2148 = vpack.c.b16 %v2140, %v2139
    %2157 = vmatprep.subr.bf16.mxu0 0
    %2158 = vmatpush1.bf16.msra.mxu0 %v2141
    %2159 = vmatprep.subr.bf16.mxu0 0
    %2160 = vmatpush1.bf16.msra.mxu0 %v2142
    %2161 = vmatprep.subr.bf16.mxu0 0
    %2162 = vmatpush1.bf16.msra.mxu0 %v2143
    %2163 = vmatprep.subr.bf16.mxu0 0
    %2164 = vmatpush1.bf16.msra.mxu0 %v2144
    %2165 = vmatprep.subr.bf16.mxu0 0
    %2166 = vmatpush1.bf16.msra.mxu0 %v2145
    %2167 = vmatprep.subr.bf16.mxu0 0
    %2168 = vmatpush1.bf16.msra.mxu0 %v2146
    %2169 = vmatprep.subr.bf16.mxu0 0
    %2170 = vmatpush1.bf16.msra.mxu0 %v2147
    %2171 = vmatprep.subr.bf16.mxu0 0
    %2172 = vmatpush1.bf16.msra.mxu0 %v2148
    %2173 = vmatprep.subr.bf16.mxu0 0
    %2174 = vmatpush1.bf16.msra.mxu0 0
    %2175 = vmatprep.subr.bf16.mxu0 0
    %2176 = vmatpush1.bf16.msra.mxu0 0
    %2177 = vmatprep.subr.bf16.mxu0 0
    %2178 = vmatpush1.bf16.msra.mxu0 0
    %2179 = vmatprep.subr.bf16.mxu0 0
    %2180 = vmatpush1.bf16.msra.mxu0 0
    %2181 = vmatprep.subr.bf16.mxu0 0
    %2182 = vmatpush1.bf16.msra.mxu0 0
    %2183 = vmatprep.subr.bf16.mxu0 0
    %2184 = vmatpush1.bf16.msra.mxu0 0
    %2185 = vmatprep.subr.bf16.mxu0 0
    %2186 = vmatpush1.bf16.msra.mxu0 0
    %2187 = vmatprep.subr.bf16.mxu0 0
    %2188 = vmatpush1.bf16.msra.mxu0 0
    %2189 = vmatprep.mubr.bf16.mxu0 0
    %2190 = vmatmul.mubr.bf16.gmra.mrb[0].mxu0 %v273
    %v2191 = vpop.f32.mrb[0].mxu0
    %v2192 = vadd.f32 0.0, %v2191
    %v2193 = vpop.f32.mrb[0].mxu0
    %v2194 = vpop.f32.mrb[0].mxu0
    %v2195 = vadd.f32 0.0, %v2194
    %v2196 = vpop.f32.mrb[0].mxu0
    %2197 = vmatprep.mubr.bf16.mxu0 0
    %2198 = vmatmul.mubr.bf16.gmra.mrb[0].mxu0 %v274
    %v2199 = vpop.f32.mrb[0].mxu0
    %v2200 = vadd.f32 0.0, %v2199
    %v2201 = vpop.f32.mrb[0].mxu0
    %v2202 = vpop.f32.mrb[0].mxu0
    %v2203 = vadd.f32 0.0, %v2202
    %v2204 = vpop.f32.mrb[0].mxu0
    %2205 = vmatprep.mubr.bf16.mxu0 0
    %2206 = vmatmul.mubr.bf16.gmra.mrb[0].mxu0 %v275
    %v2207 = vpop.f32.mrb[0].mxu0
    %v2208 = vadd.f32 0.0, %v2207
    %v2209 = vpop.f32.mrb[0].mxu0
    %v2210 = vpop.f32.mrb[0].mxu0
    %v2211 = vadd.f32 0.0, %v2210
    %v2212 = vpop.f32.mrb[0].mxu0
    %2213 = vmatprep.mubr.bf16.mxu0 0
    %2214 = vmatmul.mubr.bf16.gmra.mrb[0].mxu0 %v276
    %v2215 = vpop.f32.mrb[0].mxu0
    %v2216 = vadd.f32 0.0, %v2215
    %v2217 = vpop.f32.mrb[0].mxu0
    %v2218 = vpop.f32.mrb[0].mxu0
    %v2219 = vadd.f32 0.0, %v2218
    %v2220 = vpop.f32.mrb[0].mxu0
    %2221 = vmatprep.mubr.bf16.mxu0 0
    %2222 = vmatmul.mubr.bf16.gmra.mrb[0].mxu0 %v277
    %v2223 = vpop.f32.mrb[0].mxu0
    %v2224 = vadd.f32 0.0, %v2223
    %v2225 = vpop.f32.mrb[0].mxu0
    %v2226 = vpop.f32.mrb[0].mxu0
    %v2227 = vadd.f32 0.0, %v2226
    %v2228 = vpop.f32.mrb[0].mxu0
    %2229 = vmatprep.mubr.bf16.mxu0 0
    %2230 = vmatmul.mubr.bf16.gmra.mrb[0].mxu0 %v278
    %v2231 = vpop.f32.mrb[0].mxu0
    %v2232 = vadd.f32 0.0, %v2231
    %v2233 = vpop.f32.mrb[0].mxu0
    %v2234 = vpop.f32.mrb[0].mxu0
    %v2235 = vadd.f32 0.0, %v2234
    %v2236 = vpop.f32.mrb[0].mxu0
    %2237 = vmatprep.mubr.bf16.mxu0 0
    %2238 = vmatmul.mubr.bf16.gmra.mrb[0].mxu0 %v279
    %v2239 = vpop.f32.mrb[0].mxu0
    %v2240 = vadd.f32 0.0, %v2239
    %v2241 = vpop.f32.mrb[0].mxu0
    %v2242 = vpop.f32.mrb[0].mxu0
    %v2243 = vadd.f32 0.0, %v2242
    %v2244 = vpop.f32.mrb[0].mxu0
    %2245 = vmatprep.mubr.bf16.mxu0 0
    %2246 = vmatmul.mubr.bf16.gmra.mrb[0].mxu0 %v280
    %v2247 = vpop.f32.mrb[0].mxu0
    %v2248 = vadd.f32 0.0, %v2247
    %v2249 = vpop.f32.mrb[0].mxu0
    %v2250 = vpop.f32.mrb[0].mxu0
    %v2251 = vadd.f32 0.0, %v2250
    %v2252 = vpop.f32.mrb[0].mxu0
    %2253 = vdwg.mxu0
    %2254 = vmatprep.subr.bf16.mxu0 %v2091
    %2255 = vmatpush1.bf16.msra.mxu0 %v2090
    %2256 = vmatprep.subr.bf16.mxu0 0
    %2257 = vmatpush1.bf16.msra.mxu0 0
    %2258 = vmatprep.subr.bf16.mxu0 0
    %2259 = vmatpush1.bf16.msra.mxu0 0
    %2260 = vmatprep.subr.bf16.mxu0 0
    %2261 = vmatpush1.bf16.msra.mxu0 0
    %2262 = vmatprep.subr.bf16.mxu0 0
    %2263 = vmatpush1.bf16.msra.mxu0 0
    %2264 = vmatprep.subr.bf16.mxu0 0
    %2265 = vmatpush1.bf16.msra.mxu0 0
    %2266 = vmatprep.subr.bf16.mxu0 0
    %2267 = vmatpush1.bf16.msra.mxu0 0
    %2268 = vmatprep.subr.bf16.mxu0 0
    %2269 = vmatpush1.bf16.msra.mxu0 0
    %2270 = vmatprep.subr.bf16.mxu0 0
    %2271 = vmatpush1.bf16.msra.mxu0 0
    %2272 = vmatprep.subr.bf16.mxu0 0
    %2273 = vmatpush1.bf16.msra.mxu0 0
    %2274 = vmatprep.subr.bf16.mxu0 0
    %2275 = vmatpush1.bf16.msra.mxu0 0
    %2276 = vmatprep.subr.bf16.mxu0 0
    %2277 = vmatpush1.bf16.msra.mxu0 0
    %2278 = vmatprep.subr.bf16.mxu0 0
    %2279 = vmatpush1.bf16.msra.mxu0 0
    %2280 = vmatprep.subr.bf16.mxu0 0
    %2281 = vmatpush1.bf16.msra.mxu0 0
    %2282 = vmatprep.subr.bf16.mxu0 0
    %2283 = vmatpush1.bf16.msra.mxu0 0
    %2284 = vmatprep.subr.bf16.mxu0 0
    %2285 = vmatpush1.bf16.msra.mxu0 0
    %2286 = vmatprep.mubr.bf16.mxu0 0
    %2287 = vmatmul.mubr.bf16.gmra.mrb[0].mxu0 %v747
    %v2288 = vpop.f32.mrb[0].mxu0
    %v2289 = vadd.f32 0.0, %v2288
    %v2290 = vpop.f32.mrb[0].mxu0
    %v2291 = vadd.f32 0.0, %v2290
    %v2292 = vpop.f32.mrb[0].mxu0
    %v2293 = vadd.f32 0.0, %v2292
    %v2294 = vpop.f32.mrb[0].mxu0
    %v2295 = vadd.f32 0.0, %v2294
    %2296 = vmatprep.mubr.bf16.mxu0 0
    %2297 = vmatmul.mubr.bf16.gmra.mrb[0].mxu0 %v750
    %v2298 = vpop.f32.mrb[0].mxu0
    %v2299 = vadd.f32 0.0, %v2298
    %v2300 = vpop.f32.mrb[0].mxu0
    %v2301 = vadd.f32 0.0, %v2300
    %v2302 = vpop.f32.mrb[0].mxu0
    %v2303 = vadd.f32 0.0, %v2302
    %v2304 = vpop.f32.mrb[0].mxu0
    %v2305 = vadd.f32 0.0, %v2304
    %2306 = vmatprep.mubr.bf16.mxu0 0
    %2307 = vmatmul.mubr.bf16.gmra.mrb[0].mxu0 %v753
    %v2308 = vpop.f32.mrb[0].mxu0
    %v2309 = vadd.f32 0.0, %v2308
    %v2310 = vpop.f32.mrb[0].mxu0
    %v2311 = vadd.f32 0.0, %v2310
    %v2312 = vpop.f32.mrb[0].mxu0
    %v2313 = vadd.f32 0.0, %v2312
    %v2314 = vpop.f32.mrb[0].mxu0
    %v2315 = vadd.f32 0.0, %v2314
    %2316 = vmatprep.mubr.bf16.mxu0 0
    %2317 = vmatmul.mubr.bf16.gmra.mrb[0].mxu0 %v756
    %v2318 = vpop.f32.mrb[0].mxu0
    %v2319 = vadd.f32 0.0, %v2318
    %v2320 = vpop.f32.mrb[0].mxu0
    %v2321 = vadd.f32 0.0, %v2320
    %v2322 = vpop.f32.mrb[0].mxu0
    %v2323 = vadd.f32 0.0, %v2322
    %v2324 = vpop.f32.mrb[0].mxu0
    %v2325 = vadd.f32 0.0, %v2324
    %2326 = vmatprep.mubr.bf16.mxu0 0
    %2327 = vmatmul.mubr.bf16.gmra.mrb[0].mxu0 %v759
    %v2328 = vpop.f32.mrb[0].mxu0
    %v2329 = vadd.f32 0.0, %v2328
    %v2330 = vpop.f32.mrb[0].mxu0
    %v2331 = vadd.f32 0.0, %v2330
    %v2332 = vpop.f32.mrb[0].mxu0
    %v2333 = vadd.f32 0.0, %v2332
    %v2334 = vpop.f32.mrb[0].mxu0
    %v2335 = vadd.f32 0.0, %v2334
    %2336 = vmatprep.mubr.bf16.mxu0 0
    %2337 = vmatmul.mubr.bf16.gmra.mrb[0].mxu0 %v762
    %v2338 = vpop.f32.mrb[0].mxu0
    %v2339 = vadd.f32 0.0, %v2338
    %v2340 = vpop.f32.mrb[0].mxu0
    %v2341 = vadd.f32 0.0, %v2340
    %v2342 = vpop.f32.mrb[0].mxu0
    %v2343 = vadd.f32 0.0, %v2342
    %v2344 = vpop.f32.mrb[0].mxu0
    %v2345 = vadd.f32 0.0, %v2344
    %2346 = vmatprep.mubr.bf16.mxu0 0
    %2347 = vmatmul.mubr.bf16.gmra.mrb[0].mxu0 %v765
    %v2348 = vpop.f32.mrb[0].mxu0
    %v2349 = vadd.f32 0.0, %v2348
    %v2350 = vpop.f32.mrb[0].mxu0
    %v2351 = vadd.f32 0.0, %v2350
    %v2352 = vpop.f32.mrb[0].mxu0
    %v2353 = vadd.f32 0.0, %v2352
    %v2354 = vpop.f32.mrb[0].mxu0
    %v2355 = vadd.f32 0.0, %v2354
    %2356 = vmatprep.mubr.bf16.mxu0 0
    %2357 = vmatmul.mubr.bf16.gmra.mrb[0].mxu0 %v768
    %v2358 = vpop.f32.mrb[0].mxu0
    %v2359 = vadd.f32 0.0, %v2358
    %v2360 = vpop.f32.mrb[0].mxu0
    %v2361 = vadd.f32 0.0, %v2360
    %v2362 = vpop.f32.mrb[0].mxu0
    %v2363 = vadd.f32 0.0, %v2362
    %v2364 = vpop.f32.mrb[0].mxu0
    %v2365 = vadd.f32 0.0, %v2364
    %2366 = vdwg.mxu0
    %v2367 = vadd.f32 %v2289, %v2192
    %v2368 = vadd.f32 %v2293, %v2195
    %v2369 = vadd.f32 %v2299, %v2200
    %v2370 = vadd.f32 %v2303, %v2203
    %v2371 = vadd.f32 %v2309, %v2208
    %v2372 = vadd.f32 %v2313, %v2211
    %v2373 = vadd.f32 %v2319, %v2216
    %v2374 = vadd.f32 %v2323, %v2219
    %v2375 = vadd.f32 %v2329, %v2224
    %v2376 = vadd.f32 %v2333, %v2227
    %v2377 = vadd.f32 %v2339, %v2232
    %v2378 = vadd.f32 %v2343, %v2235
    %v2379 = vadd.f32 %v2349, %v2240
    %v2380 = vadd.f32 %v2353, %v2243
    %v2381 = vadd.f32 %v2359, %v2248
    %v2382 = vadd.f32 %v2363, %v2251
    %v2383 = vadd.f32 %v2291, %v2192
    %v2384 = vadd.f32 %v2295, %v2195
    %v2385 = vadd.f32 %v2301, %v2200
    %v2386 = vadd.f32 %v2305, %v2203
    %v2387 = vadd.f32 %v2311, %v2208
    %v2388 = vadd.f32 %v2315, %v2211
    %v2389 = vadd.f32 %v2321, %v2216
    %v2390 = vadd.f32 %v2325, %v2219
    %v2391 = vadd.f32 %v2331, %v2224
    %v2392 = vadd.f32 %v2335, %v2227
    %v2393 = vadd.f32 %v2341, %v2232
    %v2394 = vadd.f32 %v2345, %v2235
    %v2395 = vadd.f32 %v2351, %v2240
    %v2396 = vadd.f32 %v2355, %v2243
    %v2397 = vadd.f32 %v2361, %v2248
    %v2398 = vadd.f32 %v2365, %v2251
    %v2399 = vpack.c.bf16 %v2384, %v2383
    %v2400 = vpack.c.bf16 %v2386, %v2385
    %v2401 = vpack.c.bf16 %v2388, %v2387
    %v2402 = vpack.c.bf16 %v2390, %v2389
    %v2403 = vpack.c.bf16 %v2392, %v2391
    %v2404 = vpack.c.bf16 %v2394, %v2393
    %v2405 = vpack.c.bf16 %v2396, %v2395
    %v2406 = vpack.c.bf16 %v2398, %v2397
    %v2407 = vpack.c.bf16 %v2043, %v2039
    %v2408 = vpack.c.bf16 %v2368, %v2367
    %v2409 = vpack.c.bf16 %v2370, %v2369
    %v2410 = vpack.c.bf16 %v2372, %v2371
    %v2411 = vpack.c.bf16 %v2374, %v2373
    %v2412 = vpack.c.bf16 %v2376, %v2375
    %v2413 = vpack.c.bf16 %v2378, %v2377
    %v2414 = vpack.c.bf16 %v2380, %v2379
    %v2415 = vpack.c.bf16 %v2382, %v2381
    %2416 = vmatprep.subr.bf16.mxu0 0
    %2417 = vmatpush1.bf16.xpose.msra.mxu0 %v2408
    %2418 = vmatprep.subr.bf16.mxu0 0
    %2419 = vmatpush1.bf16.xpose.msra.mxu0 %v2409
    %2420 = vmatprep.subr.bf16.mxu0 0
    %2421 = vmatpush1.bf16.xpose.msra.mxu0 %v2410
    %2422 = vmatprep.subr.bf16.mxu0 0
    %2423 = vmatpush1.bf16.xpose.msra.mxu0 %v2411
    %2424 = vmatprep.subr.bf16.mxu0 0
    %2425 = vmatpush1.bf16.xpose.msra.mxu0 %v2412
    %2426 = vmatprep.subr.bf16.mxu0 0
    %2427 = vmatpush1.bf16.xpose.msra.mxu0 %v2413
    %2428 = vmatprep.subr.bf16.mxu0 0
    %2429 = vmatpush1.bf16.xpose.msra.mxu0 %v2414
    %2430 = vmatprep.subr.bf16.mxu0 0
    %2431 = vmatpush1.bf16.xpose.msra.mxu0 %v2415
    %2432 = vmatprep.subr.bf16.mxu0 0
    %2433 = vmatpush1.bf16.xpose.msra.mxu0 0
    %2434 = vmatprep.subr.bf16.mxu0 0
    %2435 = vmatpush1.bf16.xpose.msra.mxu0 0
    %2436 = vmatprep.subr.bf16.mxu0 0
    %2437 = vmatpush1.bf16.xpose.msra.mxu0 0
    %2438 = vmatprep.subr.bf16.mxu0 0
    %2439 = vmatpush1.bf16.xpose.msra.mxu0 0
    %2440 = vmatprep.subr.bf16.mxu0 0
    %2441 = vmatpush1.bf16.xpose.msra.mxu0 0
    %2442 = vmatprep.subr.bf16.mxu0 0
    %2443 = vmatpush1.bf16.xpose.msra.mxu0 0
    %2444 = vmatprep.subr.bf16.mxu0 0
    %2445 = vmatpush1.bf16.xpose.msra.mxu0 0
    %2446 = vmatprep.subr.bf16.mxu0 0
    %2447 = vmatpush1.bf16.xpose.msra.mxu0 0
    %2448 = vmatprep.mubr.bf16.mxu0 0
    %2449 = vmatmul.mubr.bf16.gmra.mrb[0].mxu0 %v2407
    %v2450 = vpop.f32.mrb[0].mxu0
    %v2451 = vadd.f32 0.0, %v2450
    %v2452 = vpop.f32.mrb[0].mxu0
    %v2453 = vpop.f32.mrb[0].mxu0
    %v2454 = vadd.f32 0.0, %v2453
    %v2455 = vpop.f32.mrb[0].mxu0
    %2456 = vdwg.mxu0
    %v2457 = vsel %vm244, %v2451, -1e+30
    %v2458 = vsel %vm245, %v2454, -1e+30
    %2459 = vmax.xlane.f32.xlu0 %v2457
    %v2460 = vpop.xlane.xlu0 %2459
    %2461 = vmax.xlane.f32.xlu0 %v2458
    %v2462 = vpop.xlane.xlu0 %2461
    %v2463 = vsub.f32 %v2451, %v2460
    %v2464 = vsub.f32 %v2454, %v2462
    %v2465 = vmul.f32 %v2463, 1.442695
    %v2466 = vpow.pop %v2465
    %v2467 = vmul.f32 %v2464, 1.442695
    %v2468 = vpow.pop %v2467
    %v2469 = vsel %vm244, %v2466, 0.0
    %v2470 = vsel %vm245, %v2468, 0.0
    %v2471 = vpack.c.bf16 %v2470, %v2469
    %v2472 = vunpack.c.l.bf16 %v2471
    %v2473 = vunpack.c.h.bf16 %v2471
    %2474 = vadd.xlane.f32.xlu0 %v2472
    %v2475 = vpop.xlane.xlu0 %2474
    %2476 = vadd.xlane.f32.xlu0 %v2473
    %v2477 = vpop.xlane.xlu0 %2476
    %v2478 = vadd.f32 %v2475, 1e-16
    %v2479 = vadd.f32 %v2477, 1e-16
    %2480 = vmatprep.subr.bf16.mxu0 0
    %2481 = vmatpush1.bf16.msra.mxu0 %v2399
    %2482 = vmatprep.subr.bf16.mxu0 0
    %2483 = vmatpush1.bf16.msra.mxu0 %v2400
    %2484 = vmatprep.subr.bf16.mxu0 0
    %2485 = vmatpush1.bf16.msra.mxu0 %v2401
    %2486 = vmatprep.subr.bf16.mxu0 0
    %2487 = vmatpush1.bf16.msra.mxu0 %v2402
    %2488 = vmatprep.subr.bf16.mxu0 0
    %2489 = vmatpush1.bf16.msra.mxu0 %v2403
    %2490 = vmatprep.subr.bf16.mxu0 0
    %2491 = vmatpush1.bf16.msra.mxu0 %v2404
    %2492 = vmatprep.subr.bf16.mxu0 0
    %2493 = vmatpush1.bf16.msra.mxu0 %v2405
    %2494 = vmatprep.subr.bf16.mxu0 0
    %2495 = vmatpush1.bf16.msra.mxu0 %v2406
    %2496 = vmatprep.subr.bf16.mxu0 0
    %2497 = vmatpush1.bf16.msra.mxu0 0
    %2498 = vmatprep.subr.bf16.mxu0 0
    %2499 = vmatpush1.bf16.msra.mxu0 0
    %2500 = vmatprep.subr.bf16.mxu0 0
    %2501 = vmatpush1.bf16.msra.mxu0 0
    %2502 = vmatprep.subr.bf16.mxu0 0
    %2503 = vmatpush1.bf16.msra.mxu0 0
    %2504 = vmatprep.subr.bf16.mxu0 0
    %2505 = vmatpush1.bf16.msra.mxu0 0
    %2506 = vmatprep.subr.bf16.mxu0 0
    %2507 = vmatpush1.bf16.msra.mxu0 0
    %2508 = vmatprep.subr.bf16.mxu0 0
    %2509 = vmatpush1.bf16.msra.mxu0 0
    %2510 = vmatprep.subr.bf16.mxu0 0
    %2511 = vmatpush1.bf16.msra.mxu0 0
    %2512 = vmatprep.mubr.bf16.mxu0 0
    %2513 = vmatmul.mubr.bf16.gmra.mrb[0].mxu0 %v2471
    %v2514 = vpop.f32.mrb[0].mxu0
    %v2515 = vadd.f32 0.0, %v2514
    %v2516 = vpop.f32.mrb[0].mxu0
    %v2517 = vpop.f32.mrb[0].mxu0
    %v2518 = vadd.f32 0.0, %v2517
    %v2519 = vpop.f32.mrb[0].mxu0
    %2520 = vdwg.mxu0
    %v2521 = vrcp.pop %v2478
    %v2522 = vrcp.pop %v2479
    %v2523 = vmul.f32 %v2515, %v2521
    %v2524 = vmul.f32 %v2518, %v2522
    %v2525 = vadd.f32 %v2523, %v2084
    %v2526 = vadd.f32 %v2524, %v2088
    %v2527 = vmax.f32 %v2525, 0.0
    %v2528 = vmax.f32 %v2526, 0.0
    %v2529 = vpack.c.bf16 %v2528, %v2527
    %v2531 = vsel %vm745, %v254, 0
    %2533 = vmatprep.subr.bf16.mxu0 0
    %2534 = vmatpush1.bf16.msra.mxu0 %v2529
    %2535 = vmatprep.subr.bf16.mxu0 0
    %2536 = vmatpush1.bf16.msra.mxu0 0
    %2537 = vmatprep.subr.bf16.mxu0 0
    %2538 = vmatpush1.bf16.msra.mxu0 0
    %2539 = vmatprep.subr.bf16.mxu0 0
    %2540 = vmatpush1.bf16.msra.mxu0 0
    %2541 = vmatprep.subr.bf16.mxu0 0
    %2542 = vmatpush1.bf16.msra.mxu0 0
    %2543 = vmatprep.subr.bf16.mxu0 0
    %2544 = vmatpush1.bf16.msra.mxu0 0
    %2545 = vmatprep.subr.bf16.mxu0 0
    %2546 = vmatpush1.bf16.msra.mxu0 0
    %2547 = vmatprep.subr.bf16.mxu0 0
    %2548 = vmatpush1.bf16.msra.mxu0 0
    %2549 = vmatprep.subr.bf16.mxu0 0
    %2550 = vmatpush1.bf16.msra.mxu0 0
    %2551 = vmatprep.subr.bf16.mxu0 0
    %2552 = vmatpush1.bf16.msra.mxu0 0
    %2553 = vmatprep.subr.bf16.mxu0 0
    %2554 = vmatpush1.bf16.msra.mxu0 0
    %2555 = vmatprep.subr.bf16.mxu0 0
    %2556 = vmatpush1.bf16.msra.mxu0 0
    %2557 = vmatprep.subr.bf16.mxu0 0
    %2558 = vmatpush1.bf16.msra.mxu0 0
    %2559 = vmatprep.subr.bf16.mxu0 0
    %2560 = vmatpush1.bf16.msra.mxu0 0
    %2561 = vmatprep.subr.bf16.mxu0 0
    %2562 = vmatpush1.bf16.msra.mxu0 0
    %2563 = vmatprep.subr.bf16.mxu0 0
    %2564 = vmatpush1.bf16.msra.mxu0 0
    %2565 = vmatprep.mubr.bf16.mxu0 0
    %2566 = vmatmul.mubr.bf16.gmra.mrb[0].mxu0 %v2531
    %v2567 = vpop.f32.mrb[0].mxu0
    %v2568 = vadd.f32 0.0, %v2567
    %v2569 = vpop.f32.mrb[0].mxu0
    %v2570 = vpop.f32.mrb[0].mxu0
    %v2571 = vpop.f32.mrb[0].mxu0
    %2572 = vdwg.mxu0
    %v2573 = vld [vmem:[%s5] sm:$0xff]
    %2575 = vset.pattern.permute.xlu0 0
    %2576 = vperm.xlu0 %2575, %v2573
    %v2577 = vpop.permute.xlu0 %2576
    %v2579 = vmul.f32 %v2568, %v2577
    %v2580 = vpack.c.bf16 %v2579, %v2579
    %v2581 = vld [vmem:[#allocation8] sm:$0xf]
    %v2582 = vld [vmem:[#allocation8 + $0x4] sm:$0xf]
    %v2583 = vld [vmem:[#allocation8 + $0x8] sm:$0xf]
    %v2584 = vld [vmem:[#allocation8 + $0xc] sm:$0xf]
    %v2585 = vld [vmem:[#allocation8 + $0x10] sm:$0xf]
    %v2586 = vld [vmem:[#allocation8 + $0x14] sm:$0xf]
    %v2587 = vld [vmem:[#allocation8 + $0x18] sm:$0xf]
    %v2588 = vld [vmem:[#allocation8 + $0x1c] sm:$0xf]
    %v2589 = vld [vmem:[#allocation8 + $0x20] sm:$0xf]
    %v2590 = vld [vmem:[#allocation8 + $0x24] sm:$0xf]
    %v2591 = vld [vmem:[#allocation8 + $0x28] sm:$0xf]
    %v2592 = vld [vmem:[#allocation8 + $0x2c] sm:$0xf]
    %v2593 = vld [vmem:[#allocation8 + $0x30] sm:$0xf]
    %v2594 = vld [vmem:[#allocation8 + $0x34] sm:$0xf]
    %v2595 = vld [vmem:[#allocation8 + $0x38] sm:$0xf]
    %v2596 = vld [vmem:[#allocation8 + $0x3c] sm:$0xf]
    %v2597 = vld [vmem:[%s10] sm:$0x1]
    %v2599 = vlaneseq
    %v2600 = vshrl.u32 %v2599, 7
    %v2601 = vsub.s32 0, %v2600
    %v2602 = vrot.slane %v2597, %v2601
    %v2620 = vunpack.c.l.b16 %v2581
    %v2621 = vunpack.c.l.b16 %v2582
    %v2622 = vunpack.c.l.b16 %v2583
    %v2623 = vunpack.c.l.b16 %v2584
    %v2624 = vunpack.c.l.b16 %v2585
    %v2625 = vunpack.c.l.b16 %v2586
    %v2626 = vunpack.c.l.b16 %v2587
    %v2627 = vunpack.c.l.b16 %v2588
    %v2628 = vunpack.c.l.b16 %v2589
    %v2629 = vunpack.c.l.b16 %v2590
    %v2630 = vunpack.c.l.b16 %v2591
    %v2631 = vunpack.c.l.b16 %v2592
    %v2632 = vunpack.c.l.b16 %v2593
    %v2633 = vunpack.c.l.b16 %v2594
    %v2634 = vunpack.c.l.b16 %v2595
    %v2635 = vunpack.c.l.b16 %v2596
    %v2636 = vpack.c.b16 %v2621, %v2620
    %v2637 = vpack.c.b16 %v2623, %v2622
    %v2638 = vpack.c.b16 %v2625, %v2624
    %v2639 = vpack.c.b16 %v2627, %v2626
    %v2640 = vpack.c.b16 %v2629, %v2628
    %v2641 = vpack.c.b16 %v2631, %v2630
    %v2642 = vpack.c.b16 %v2633, %v2632
    %v2643 = vpack.c.b16 %v2635, %v2634
    %2652 = vmatprep.subr.bf16.mxu0 0
    %2653 = vmatpush1.bf16.msra.mxu0 %v2636
    %2654 = vmatprep.subr.bf16.mxu0 0
    %2655 = vmatpush1.bf16.msra.mxu0 %v2637
    %2656 = vmatprep.subr.bf16.mxu0 0
    %2657 = vmatpush1.bf16.msra.mxu0 %v2638
    %2658 = vmatprep.subr.bf16.mxu0 0
    %2659 = vmatpush1.bf16.msra.mxu0 %v2639
    %2660 = vmatprep.subr.bf16.mxu0 0
    %2661 = vmatpush1.bf16.msra.mxu0 %v2640
    %2662 = vmatprep.subr.bf16.mxu0 0
    %2663 = vmatpush1.bf16.msra.mxu0 %v2641
    %2664 = vmatprep.subr.bf16.mxu0 0
    %2665 = vmatpush1.bf16.msra.mxu0 %v2642
    %2666 = vmatprep.subr.bf16.mxu0 0
    %2667 = vmatpush1.bf16.msra.mxu0 %v2643
    %2668 = vmatprep.subr.bf16.mxu0 0
    %2669 = vmatpush1.bf16.msra.mxu0 0
    %2670 = vmatprep.subr.bf16.mxu0 0
    %2671 = vmatpush1.bf16.msra.mxu0 0
    %2672 = vmatprep.subr.bf16.mxu0 0
    %2673 = vmatpush1.bf16.msra.mxu0 0
    %2674 = vmatprep.subr.bf16.mxu0 0
    %2675 = vmatpush1.bf16.msra.mxu0 0
    %2676 = vmatprep.subr.bf16.mxu0 0
    %2677 = vmatpush1.bf16.msra.mxu0 0
    %2678 = vmatprep.subr.bf16.mxu0 0
    %2679 = vmatpush1.bf16.msra.mxu0 0
    %2680 = vmatprep.subr.bf16.mxu0 0
    %2681 = vmatpush1.bf16.msra.mxu0 0
    %2682 = vmatprep.subr.bf16.mxu0 0
    %2683 = vmatpush1.bf16.msra.mxu0 0
    %2684 = vmatprep.mubr.bf16.mxu0 0
    %2685 = vmatmul.mubr.bf16.gmra.mrb[0].mxu0 %v2580
    %v2686 = vpop.f32.mrb[0].mxu0
    %v2687 = vadd.f32 %v2602, %v2686
    %v2688 = vpop.f32.mrb[0].mxu0
    %v2689 = vpop.f32.mrb[0].mxu0
    %v2690 = vpop.f32.mrb[0].mxu0
    %2691 = vdwg.mxu0
    %v2692 = vmax.f32 %v2687, 0.0
    %v2693 = vpack.c.bf16 %v2692, %v2692
    %v2694 = vld [vmem:[#allocation10] sm:$0xf]
    %v2695 = vld [vmem:[#allocation10 + $0x4] sm:$0xf]
    %v2696 = vld [vmem:[#allocation10 + $0x8] sm:$0xf]
    %v2697 = vld [vmem:[#allocation10 + $0xc] sm:$0xf]
    %v2698 = vld [vmem:[#allocation10 + $0x10] sm:$0xf]
    %v2699 = vld [vmem:[#allocation10 + $0x14] sm:$0xf]
    %v2700 = vld [vmem:[#allocation10 + $0x18] sm:$0xf]
    %v2701 = vld [vmem:[#allocation10 + $0x1c] sm:$0xf]
    %v2702 = vld [vmem:[#allocation10 + $0x20] sm:$0xf]
    %v2703 = vld [vmem:[#allocation10 + $0x24] sm:$0xf]
    %v2704 = vld [vmem:[#allocation10 + $0x28] sm:$0xf]
    %v2705 = vld [vmem:[#allocation10 + $0x2c] sm:$0xf]
    %v2706 = vld [vmem:[#allocation10 + $0x30] sm:$0xf]
    %v2707 = vld [vmem:[#allocation10 + $0x34] sm:$0xf]
    %v2708 = vld [vmem:[#allocation10 + $0x38] sm:$0xf]
    %v2709 = vld [vmem:[#allocation10 + $0x3c] sm:$0xf]
    %v2710 = vld [vmem:[%s12] sm:$0x1]
    %v2712 = vlaneseq
    %v2713 = vshrl.u32 %v2712, 7
    %v2714 = vsub.s32 0, %v2713
    %v2715 = vrot.slane %v2710, %v2714
    %v2733 = vunpack.c.l.b16 %v2694
    %v2734 = vunpack.c.l.b16 %v2695
    %v2735 = vunpack.c.l.b16 %v2696
    %v2736 = vunpack.c.l.b16 %v2697
    %v2737 = vunpack.c.l.b16 %v2698
    %v2738 = vunpack.c.l.b16 %v2699
    %v2739 = vunpack.c.l.b16 %v2700
    %v2740 = vunpack.c.l.b16 %v2701
    %v2741 = vunpack.c.l.b16 %v2702
    %v2742 = vunpack.c.l.b16 %v2703
    %v2743 = vunpack.c.l.b16 %v2704
    %v2744 = vunpack.c.l.b16 %v2705
    %v2745 = vunpack.c.l.b16 %v2706
    %v2746 = vunpack.c.l.b16 %v2707
    %v2747 = vunpack.c.l.b16 %v2708
    %v2748 = vunpack.c.l.b16 %v2709
    %v2749 = vpack.c.b16 %v2734, %v2733
    %v2750 = vpack.c.b16 %v2736, %v2735
    %v2751 = vpack.c.b16 %v2738, %v2737
    %v2752 = vpack.c.b16 %v2740, %v2739
    %v2753 = vpack.c.b16 %v2742, %v2741
    %v2754 = vpack.c.b16 %v2744, %v2743
    %v2755 = vpack.c.b16 %v2746, %v2745
    %v2756 = vpack.c.b16 %v2748, %v2747
    %2765 = vmatprep.subr.bf16.mxu0 0
    %2766 = vmatpush1.bf16.msra.mxu0 %v2749
    %2767 = vmatprep.subr.bf16.mxu0 0
    %2768 = vmatpush1.bf16.msra.mxu0 %v2750
    %2769 = vmatprep.subr.bf16.mxu0 0
    %2770 = vmatpush1.bf16.msra.mxu0 %v2751
    %2771 = vmatprep.subr.bf16.mxu0 0
    %2772 = vmatpush1.bf16.msra.mxu0 %v2752
    %2773 = vmatprep.subr.bf16.mxu0 0
    %2774 = vmatpush1.bf16.msra.mxu0 %v2753
    %2775 = vmatprep.subr.bf16.mxu0 0
    %2776 = vmatpush1.bf16.msra.mxu0 %v2754
    %2777 = vmatprep.subr.bf16.mxu0 0
    %2778 = vmatpush1.bf16.msra.mxu0 %v2755
    %2779 = vmatprep.subr.bf16.mxu0 0
    %2780 = vmatpush1.bf16.msra.mxu0 %v2756
    %2781 = vmatprep.subr.bf16.mxu0 0
    %2782 = vmatpush1.bf16.msra.mxu0 0
    %2783 = vmatprep.subr.bf16.mxu0 0
    %2784 = vmatpush1.bf16.msra.mxu0 0
    %2785 = vmatprep.subr.bf16.mxu0 0
    %2786 = vmatpush1.bf16.msra.mxu0 0
    %2787 = vmatprep.subr.bf16.mxu0 0
    %2788 = vmatpush1.bf16.msra.mxu0 0
    %2789 = vmatprep.subr.bf16.mxu0 0
    %2790 = vmatpush1.bf16.msra.mxu0 0
    %2791 = vmatprep.subr.bf16.mxu0 0
    %2792 = vmatpush1.bf16.msra.mxu0 0
    %2793 = vmatprep.subr.bf16.mxu0 0
    %2794 = vmatpush1.bf16.msra.mxu0 0
    %2795 = vmatprep.subr.bf16.mxu0 0
    %2796 = vmatpush1.bf16.msra.mxu0 0
    %2797 = vmatprep.mubr.bf16.mxu0 0
    %2798 = vmatmul.mubr.bf16.gmra.mrb[0].mxu0 %v2693
    %v2799 = vpop.f32.mrb[0].mxu0
    %v2800 = vadd.f32 %v2715, %v2799
    %v2801 = vpop.f32.mrb[0].mxu0
    %v2802 = vpop.f32.mrb[0].mxu0
    %v2803 = vpop.f32.mrb[0].mxu0
    %2804 = vdwg.mxu0
    %2805 = vst [vmem:[#allocation11] sm:$0xff] %v2800
    // Predicated region
    $region74: #{tpu_custom_call.1} parent=1 // pred_check
      _
    $region75: #{tpu_custom_call.1} parent=1 // pred_check_branch
      %2807 = sbr.rel (0) target = $region77
    $region76: #{tpu_custom_call.1} parent=1 // pred_region
      %s2809 = ssub.s32 128, 128
      %2810 = vsyncadd [#allocation4], %s2809
      %s2812 = sshll.u32 [#allocation11], 4
      %s2813 = int_to_ptr.vmem [resolvable:$true] %s2812
      %2815 = dma.vmem_to_hbm [thread:$0]  %s2813, 128, %s13, [#allocation4]
    $region77: #{tpu_custom_call.1} parent=1 // pred_fallthru
      _
    // Predicated region
    $region78: #{tpu_custom_call.1} parent=1 // pred_check
      _
    $region79: #{tpu_custom_call.1} parent=1 // pred_check_branch
      %2817 = sbr.rel (0) target = $region81
    $region80: #{tpu_custom_call.1} parent=1 // pred_region
      %2818 = dma.done [#allocation4], 128
    $region81: #{tpu_custom_call.1} parent=1 // pred_fallthru
      _
    %2819 = vsyncpa [#allocation3], 1
    %2820 = vsyncpa [#allocation6], 1
    %2821 = vsyncpa [#allocation9], 1
    %2822 = vsyncpa [#allocation4], 1

</llo_original>
